<compile_context>
chip_gen: v5e
topology: v5e:2x2
jax: 0.10.0
libtpu: 0.0.40
codegen_flags: <defaults>
</compile_context>

<pallas_src>
import math

import jax
import jax.numpy as jnp
from jax import lax
from jax.experimental import pallas as pl
from jax.experimental.pallas import tpu as pltpu

# ---------------------------------------------------------------------------
# configuration (small, consistent with the module's forward)
# ---------------------------------------------------------------------------
B = 2               # batch
N = 8               # sequence length
E = 32              # emb_size
H = 4               # num_heads
HD = E // H         # head dim
EXP = 4             # forward_expansion
HIDDEN = EXP * E
BN = B * N
DEPTH = 4           # number of encoder blocks (module default is 12; small here)
LN_EPS = 1e-5
INV_SCALE = 1.0 / math.sqrt(E)      # post-softmax 1/sqrt(emb_size), folded per head
INV_SQRT2 = 1.0 / math.sqrt(2.0)


def _gelu_exact(x):
    return 0.5 * x * (1.0 + lax.erf(x * jnp.float32(INV_SQRT2)))


def _layer_norm(x, gamma, beta):
    mu = jnp.mean(x, axis=-1, keepdims=True)
    var = jnp.mean((x - mu) ** 2, axis=-1, keepdims=True)
    return (x - mu) * lax.rsqrt(var + LN_EPS) * gamma + beta


# ---------------------------------------------------------------------------
# Pallas kernel: one grid step == one encoder block.
# Activation carried across layers inside the resident output block (constant
# output index_map over the "arbitrary" depth axis).
# ---------------------------------------------------------------------------
def encoder_kernel(
    x_ref,                      # (B*N, E)    initial activation
    g1_ref, b1_ref,             # (1, E)      LayerNorm 1
    wq_ref, bq_ref,             # (H, E, HD), (H, 1, HD)
    wk_ref, bk_ref,
    wv_ref, bv_ref,
    wp_ref, bp_ref,             # (H, HD, E), (1, E)  attention output projection
    g2_ref, b2_ref,             # (1, E)      LayerNorm 2
    w1_ref, bf1_ref,            # (E, HIDDEN), (1, HIDDEN)
    w2_ref, bf2_ref,            # (HIDDEN, E), (1, E)
    o_ref,                      # (B*N, E)    carried activation / final output
):
    layer = pl.program_id(0)

    @pl.when(layer == 0)
    def _():
        o_ref[...] = x_ref[...]

    x = o_ref[...].astype(jnp.float32)                       # (B*N, E)

    # ----- residual 1: LN -> MHA -> +x -----------------------------------
    xn = _layer_norm(x, g1_ref[...], b1_ref[...])            # (B*N, E)

    chunks = []
    for b in range(B):                                        # static unroll
        r0 = b * N
        xn_b = xn[r0:r0 + N, :]                               # sublane-aligned slice
        acc = jnp.zeros((N, E), jnp.float32)                  # vreg-resident per-batch
        for h in range(H):                                    # static unroll
            # per-head q/k/v straight from per-head weight refs (no lane slicing)
            qh = jnp.dot(xn_b, wq_ref[h], preferred_element_type=jnp.float32) + bq_ref[h]
            kh = jnp.dot(xn_b, wk_ref[h], preferred_element_type=jnp.float32) + bk_ref[h]
            vh = jnp.dot(xn_b, wv_ref[h], preferred_element_type=jnp.float32) + bv_ref[h]
            # q @ k^T without materializing a transpose
            energy = lax.dot_general(
                qh, kh, (((1,), (1,)), ((), ())),
                preferred_element_type=jnp.float32)           # (N, N)
            m = jnp.max(energy, axis=-1, keepdims=True)
            e = jnp.exp(energy - m)
            denom = jnp.sum(e, axis=-1, keepdims=True)
            # softmax(qk^T) / sqrt(E)  (exact divide; scale folded into normalization)
            att = e * (jnp.float32(INV_SCALE) * pl.reciprocal(denom, approx=False))
            ctx = jnp.dot(att, vh, preferred_element_type=jnp.float32)      # (N, HD)
            # fold output projection per head -> full-E-wide accumulation in vregs
            acc = acc + jnp.dot(ctx, wp_ref[h], preferred_element_type=jnp.float32)
        chunks.append(acc)

    proj = jnp.concatenate(chunks, axis=0) + bp_ref[...]      # (B*N, E), sublane-aligned
    y = proj + x                                               # residual add 1

    # ----- residual 2: LN -> Linear -> GELU -> Linear -> +y ----------------
    yn = _layer_norm(y, g2_ref[...], b2_ref[...])
    h1 = _gelu_exact(jnp.dot(yn, w1_ref[...], preferred_element_type=jnp.float32)
                     + bf1_ref[...])
    h2 = jnp.dot(h1, w2_ref[...], preferred_element_type=jnp.float32) + bf2_ref[...]

    o_ref[...] = (h2 + y).astype(o_ref.dtype)                  # carried to next layer


# ---------------------------------------------------------------------------
# wrapper: packs per-layer / per-head weights and builds the fused pallas_call
# ---------------------------------------------------------------------------
def transformer_encoder(x, p):
    """x: (B, N, E) float32.  p: dict of depth-stacked, (in, out)-transposed weights."""
    depth = p["wq"].shape[0]
    x2 = x.reshape(BN, E)

    # per-head packing (done once in the wrapper, outside the kernel)
    wq = p["wq"].reshape(depth, E, H, HD).transpose(0, 2, 1, 3)   # (D, H, E, HD)
    wk = p["wk"].reshape(depth, E, H, HD).transpose(0, 2, 1, 3)
    wv = p["wv"].reshape(depth, E, H, HD).transpose(0, 2, 1, 3)
    wp = p["wp"].reshape(depth, H, HD, E)                         # (D, H, HD, E)
    bq = p["bq"].reshape(depth, H, 1, HD)
    bk = p["bk"].reshape(depth, H, 1, HD)
    bv = p["bv"].reshape(depth, H, 1, HD)

    weights = (
        p["g1"], p["b1"],
        wq, bq, wk, bk, wv, bv,
        wp, p["bp"],
        p["g2"], p["b2"],
        p["w1"], p["bf1"], p["w2"], p["bf2"],
    )

    def layer_spec(a):
        # depth-stacked weight: block = one layer's slice, squeezed leading dim
        nd = a.ndim
        return pl.BlockSpec(
            (None,) + a.shape[1:],
            lambda l, _nd=nd: (l,) + (0,) * (_nd - 1),
        )

    act_in_spec = pl.BlockSpec((BN, E), lambda l: (0, 0))          # fetched once
    act_out_spec = pl.BlockSpec((BN, E), lambda l: (0, 0))         # resident accumulator

    out2 = pl.pallas_call(
        encoder_kernel,
        out_shape=jax.ShapeDtypeStruct((BN, E), x.dtype),
        grid=(depth,),
        in_specs=[act_in_spec] + [layer_spec(a) for a in weights],
        out_specs=act_out_spec,
        compiler_params=pltpu.CompilerParams(
            dimension_semantics=("arbitrary",)),   # layers are sequential (carried state)
    )(x2, *weights)
    return out2.reshape(B, N, E)


# ---------------------------------------------------------------------------
# pure-JAX reference (applies the block depth times)
# ---------------------------------------------------------------------------
def reference(x, p):
    def ln(z, g, b):
        mu = jnp.mean(z, -1, keepdims=True)
        var = jnp.mean((z - mu) ** 2, -1, keepdims=True)
        return (z - mu) / jnp.sqrt(var + LN_EPS) * g + b

    depth = p["wq"].shape[0]
    for l in range(depth):
        xn = ln(x, p["g1"][l], p["b1"][l])
        q = xn @ p["wq"][l] + p["bq"][l]
        k = xn @ p["wk"][l] + p["bk"][l]
        v = xn @ p["wv"][l] + p["bv"][l]
        q = q.reshape(B, N, H, HD).transpose(0, 2, 1, 3)
        k = k.reshape(B, N, H, HD).transpose(0, 2, 1, 3)
        v = v.reshape(B, N, H, HD).transpose(0, 2, 1, 3)
        energy = jnp.einsum("bhqd,bhkd->bhqk", q, k)
        att = jax.nn.softmax(energy, axis=-1) / (E ** 0.5)
        out = jnp.einsum("bhal,bhlv->bhav", att, v)
        out = out.transpose(0, 2, 1, 3).reshape(B, N, E)
        y = out @ p["wp"][l] + p["bp"][l] + x
        yn = ln(y, p["g2"][l], p["b2"][l])
        h1 = jax.nn.gelu(yn @ p["w1"][l] + p["bf1"][l], approximate=False)
        x = h1 @ p["w2"][l] + p["bf2"][l] + y
    return x


# ---------------------------------------------------------------------------
# deterministic parameter init (Linear weights already transposed to (in, out),
# stacked along a leading depth axis)
# ---------------------------------------------------------------------------
def init_params(key, depth):
    s = 0.05

    def lin(k, fan_in, fan_out):
        kw, kb = jax.random.split(k)
        w = jax.random.normal(kw, (depth, fan_in, fan_out), jnp.float32) * s
        b = jax.random.normal(kb, (depth, 1, fan_out), jnp.float32) * s
        return w, b

    ks = jax.random.split(key, 6)
    wq, bq = lin(ks[0], E, E)
    wk, bk = lin(ks[1], E, E)
    wv, bv = lin(ks[2], E, E)
    wp, bp = lin(ks[3], E, E)
    w1, bf1 = lin(ks[4], E, HIDDEN)
    w2, bf2 = lin(ks[5], HIDDEN, E)
    ones = jnp.ones((depth, 1, E), jnp.float32)
    zeros = jnp.zeros((depth, 1, E), jnp.float32)
    return dict(
        g1=ones, b1=zeros,
        wq=wq, bq=bq, wk=wk, bk=bk, wv=wv, bv=bv,
        wp=wp, bp=bp,
        g2=ones, b2=zeros,
        w1=w1, bf1=bf1, w2=w2, bf2=bf2,
    )


if __name__ == "__main__":
    key = jax.random.PRNGKey(0)
    kx, kp = jax.random.split(key)
    x = jax.random.normal(kx, (B, N, E), jnp.float32)
    params = init_params(kp, DEPTH)

    out = jax.block_until_ready(transformer_encoder(x, params))

    ref = reference(x, params)
    assert out.shape == (B, N, E)
    assert jnp.allclose(out, ref, atol=1e-3, rtol=1e-3), "mismatch vs pure-JAX reference"

    print("KERNEL_OK")
</pallas_src>

<mosaic_0001>
module attributes {stable_mosaic.version = 11 : i64} {
  func.func @encoder_kernel(%arg0: i32, %arg1: memref<16x32xf32, #tpu.memory_space<vmem>>, %arg2: memref<1x1x32xf32, #tpu.memory_space<vmem>>, %arg3: memref<1x1x32xf32, #tpu.memory_space<vmem>>, %arg4: memref<1x4x32x8xf32, #tpu.memory_space<vmem>>, %arg5: memref<1x4x1x8xf32, #tpu.memory_space<vmem>>, %arg6: memref<1x4x32x8xf32, #tpu.memory_space<vmem>>, %arg7: memref<1x4x1x8xf32, #tpu.memory_space<vmem>>, %arg8: memref<1x4x32x8xf32, #tpu.memory_space<vmem>>, %arg9: memref<1x4x1x8xf32, #tpu.memory_space<vmem>>, %arg10: memref<1x4x8x32xf32, #tpu.memory_space<vmem>>, %arg11: memref<1x1x32xf32, #tpu.memory_space<vmem>>, %arg12: memref<1x1x32xf32, #tpu.memory_space<vmem>>, %arg13: memref<1x1x32xf32, #tpu.memory_space<vmem>>, %arg14: memref<1x32x128xf32, #tpu.memory_space<vmem>>, %arg15: memref<1x1x128xf32, #tpu.memory_space<vmem>>, %arg16: memref<1x128x32xf32, #tpu.memory_space<vmem>>, %arg17: memref<1x1x32xf32, #tpu.memory_space<vmem>>, %arg18: memref<16x32xf32, #tpu.memory_space<vmem>>) attributes {dimension_semantics = [#tpu.dimension_semantics<arbitrary>], iteration_bounds = array<i64: 4>, scalar_prefetch = 0 : i64, scratch_operands = 0 : i64, tpu.core_type = #tpu.core_type<tc>, window_params = [{pipeline_mode = #tpu.pipeline_mode<synchronous>, transform_indices = @transform_0, window_bounds = array<i64: 16, 32>}, {transform_indices = @transform_1, window_bounds = array<i64: 1, 1, 32>}, {transform_indices = @transform_2, window_bounds = array<i64: 1, 1, 32>}, {transform_indices = @transform_3, window_bounds = array<i64: 1, 4, 32, 8>}, {transform_indices = @transform_4, window_bounds = array<i64: 1, 4, 1, 8>}, {transform_indices = @transform_5, window_bounds = array<i64: 1, 4, 32, 8>}, {transform_indices = @transform_6, window_bounds = array<i64: 1, 4, 1, 8>}, {transform_indices = @transform_7, window_bounds = array<i64: 1, 4, 32, 8>}, {transform_indices = @transform_8, window_bounds = array<i64: 1, 4, 1, 8>}, {transform_indices = @transform_9, window_bounds = array<i64: 1, 4, 8, 32>}, {transform_indices = @transform_10, window_bounds = array<i64: 1, 1, 32>}, {transform_indices = @transform_11, window_bounds = array<i64: 1, 1, 32>}, {transform_indices = @transform_12, window_bounds = array<i64: 1, 1, 32>}, {transform_indices = @transform_13, window_bounds = array<i64: 1, 32, 128>}, {transform_indices = @transform_14, window_bounds = array<i64: 1, 1, 128>}, {transform_indices = @transform_15, window_bounds = array<i64: 1, 128, 32>}, {transform_indices = @transform_16, window_bounds = array<i64: 1, 1, 32>}, {pipeline_mode = #tpu.pipeline_mode<synchronous>, transform_indices = @transform_17, window_bounds = array<i64: 16, 32>}]} {
    %c0_i32 = arith.constant 0 : i32
    %0 = arith.cmpi eq, %arg0, %c0_i32 : i32
    %1 = arith.extui %0 : i1 to i32
    %c0_i32_0 = arith.constant 0 : i32
    %2 = arith.cmpi ne, %1, %c0_i32_0 : i32
    scf.if %2 {
      %c0_340 = arith.constant 0 : index
      %c0_341 = arith.constant 0 : index
      %402 = vector.load %arg1[%c0_340, %c0_341] : memref<16x32xf32, #tpu.memory_space<vmem>>, vector<16x32xf32>
      %c0_342 = arith.constant 0 : index
      %c0_343 = arith.constant 0 : index
      %403 = vector.load %arg18[%c0_342, %c0_343] : memref<16x32xf32, #tpu.memory_space<vmem>>, vector<16x32xf32>
      tpu.vector_store %arg18[%c0_342, %c0_343], %402 {strides = array<i32>} : memref<16x32xf32, #tpu.memory_space<vmem>>, vector<16x32xf32>,
    } else {
    }
    %c0 = arith.constant 0 : index
    %c0_1 = arith.constant 0 : index
    %3 = vector.load %arg18[%c0, %c0_1] : memref<16x32xf32, #tpu.memory_space<vmem>>, vector<16x32xf32>
    %c0_2 = arith.constant 0 : index
    %c0_3 = arith.constant 0 : index
    %c0_4 = arith.constant 0 : index
    %4 = vector.load %arg2[%c0_2, %c0_3, %c0_4] : memref<1x1x32xf32, #tpu.memory_space<vmem>>, vector<1x1x32xf32>
    %5 = vector.shape_cast %4 : vector<1x1x32xf32> to vector<1x32xf32>
    %c0_5 = arith.constant 0 : index
    %c0_6 = arith.constant 0 : index
    %c0_7 = arith.constant 0 : index
    %6 = vector.load %arg3[%c0_5, %c0_6, %c0_7] : memref<1x1x32xf32, #tpu.memory_space<vmem>>, vector<1x1x32xf32>
    %7 = vector.shape_cast %6 : vector<1x1x32xf32> to vector<1x32xf32>
    %cst = arith.constant dense<0.000000e+00> : vector<16xf32>
    %8 = vector.multi_reduction <add>, %3, %cst [1] : vector<16x32xf32> to vector<16xf32>
    %9 = vector.shape_cast %8 : vector<16xf32> to vector<16x1xf32>
    %cst_8 = arith.constant 3.200000e+01 : f32
    %10 = vector.broadcast %cst_8 : f32 to vector<16x1xf32>
    %11 = arith.divf %9, %10 : vector<16x1xf32>
    %12 = vector.broadcast %11 : vector<16x1xf32> to vector<16x32xf32>
    %13 = arith.subf %3, %12 : vector<16x32xf32>
    %14 = arith.mulf %13, %13 : vector<16x32xf32>
    %cst_9 = arith.constant dense<0.000000e+00> : vector<16xf32>
    %15 = vector.multi_reduction <add>, %14, %cst_9 [1] : vector<16x32xf32> to vector<16xf32>
    %16 = vector.shape_cast %15 : vector<16xf32> to vector<16x1xf32>
    %cst_10 = arith.constant 3.200000e+01 : f32
    %17 = vector.broadcast %cst_10 : f32 to vector<16x1xf32>
    %18 = arith.divf %16, %17 : vector<16x1xf32>
    %19 = vector.broadcast %11 : vector<16x1xf32> to vector<16x32xf32>
    %20 = arith.subf %3, %19 : vector<16x32xf32>
    %cst_11 = arith.constant 9.99999974E-6 : f32
    %21 = vector.broadcast %cst_11 : f32 to vector<16x1xf32>
    %22 = arith.addf %18, %21 : vector<16x1xf32>
    %23 = math.rsqrt %22 : vector<16x1xf32>
    %24 = vector.broadcast %23 : vector<16x1xf32> to vector<16x32xf32>
    %25 = arith.mulf %20, %24 : vector<16x32xf32>
    %26 = vector.broadcast %5 : vector<1x32xf32> to vector<16x32xf32>
    %27 = arith.mulf %25, %26 : vector<16x32xf32>
    %28 = vector.broadcast %7 : vector<1x32xf32> to vector<16x32xf32>
    %29 = arith.addf %27, %28 : vector<16x32xf32>
    %30 = vector.extract_strided_slice %29 {offsets = [0, 0], sizes = [8, 32], strides = [1, 1]} : vector<16x32xf32> to vector<8x32xf32>
    %cst_12 = arith.constant 0.000000e+00 : f32
    %31 = vector.broadcast %cst_12 : f32 to vector<8x32xf32>
    %c0_13 = arith.constant 0 : index
    %c0_14 = arith.constant 0 : index
    %c0_15 = arith.constant 0 : index
    %c0_16 = arith.constant 0 : index
    %32 = vector.load %arg4[%c0_13, %c0_14, %c0_15, %c0_16] : memref<1x4x32x8xf32, #tpu.memory_space<vmem>>, vector<1x1x32x8xf32>
    %33 = vector.shape_cast %32 : vector<1x1x32x8xf32> to vector<32x8xf32>
    %cst_17 = arith.constant dense<0.000000e+00> : vector<8x8xf32>
    %34 = tpu.matmul %30, %33, %cst_17 {dimension_numbers = #tpu.dot_dimension_numbers<[1], [0], [0], [1], [0, 0, 1, 1], [], []>} : vector<8x32xf32>, vector<32x8xf32>, vector<8x8xf32> -> vector<8x8xf32>
    %c0_18 = arith.constant 0 : index
    %c0_19 = arith.constant 0 : index
    %c0_20 = arith.constant 0 : index
    %c0_21 = arith.constant 0 : index
    %35 = vector.load %arg5[%c0_18, %c0_19, %c0_20, %c0_21] : memref<1x4x1x8xf32, #tpu.memory_space<vmem>>, vector<1x1x1x8xf32>
    %36 = vector.shape_cast %35 : vector<1x1x1x8xf32> to vector<1x8xf32>
    %37 = vector.broadcast %36 : vector<1x8xf32> to vector<8x8xf32>
    %38 = arith.addf %34, %37 : vector<8x8xf32>
    %c0_22 = arith.constant 0 : index
    %c0_23 = arith.constant 0 : index
    %c0_24 = arith.constant 0 : index
    %c0_25 = arith.constant 0 : index
    %39 = vector.load %arg6[%c0_22, %c0_23, %c0_24, %c0_25] : memref<1x4x32x8xf32, #tpu.memory_space<vmem>>, vector<1x1x32x8xf32>
    %40 = vector.shape_cast %39 : vector<1x1x32x8xf32> to vector<32x8xf32>
    %cst_26 = arith.constant dense<0.000000e+00> : vector<8x8xf32>
    %41 = tpu.matmul %30, %40, %cst_26 {dimension_numbers = #tpu.dot_dimension_numbers<[1], [0], [0], [1], [0, 0, 1, 1], [], []>} : vector<8x32xf32>, vector<32x8xf32>, vector<8x8xf32> -> vector<8x8xf32>
    %c0_27 = arith.constant 0 : index
    %c0_28 = arith.constant 0 : index
    %c0_29 = arith.constant 0 : index
    %c0_30 = arith.constant 0 : index
    %42 = vector.load %arg7[%c0_27, %c0_28, %c0_29, %c0_30] : memref<1x4x1x8xf32, #tpu.memory_space<vmem>>, vector<1x1x1x8xf32>
    %43 = vector.shape_cast %42 : vector<1x1x1x8xf32> to vector<1x8xf32>
    %44 = vector.broadcast %43 : vector<1x8xf32> to vector<8x8xf32>
    %45 = arith.addf %41, %44 : vector<8x8xf32>
    %c0_31 = arith.constant 0 : index
    %c0_32 = arith.constant 0 : index
    %c0_33 = arith.constant 0 : index
    %c0_34 = arith.constant 0 : index
    %46 = vector.load %arg8[%c0_31, %c0_32, %c0_33, %c0_34] : memref<1x4x32x8xf32, #tpu.memory_space<vmem>>, vector<1x1x32x8xf32>
    %47 = vector.shape_cast %46 : vector<1x1x32x8xf32> to vector<32x8xf32>
    %cst_35 = arith.constant dense<0.000000e+00> : vector<8x8xf32>
    %48 = tpu.matmul %30, %47, %cst_35 {dimension_numbers = #tpu.dot_dimension_numbers<[1], [0], [0], [1], [0, 0, 1, 1], [], []>} : vector<8x32xf32>, vector<32x8xf32>, vector<8x8xf32> -> vector<8x8xf32>
    %c0_36 = arith.constant 0 : index
    %c0_37 = arith.constant 0 : index
    %c0_38 = arith.constant 0 : index
    %c0_39 = arith.constant 0 : index
    %49 = vector.load %arg9[%c0_36, %c0_37, %c0_38, %c0_39] : memref<1x4x1x8xf32, #tpu.memory_space<vmem>>, vector<1x1x1x8xf32>
    %50 = vector.shape_cast %49 : vector<1x1x1x8xf32> to vector<1x8xf32>
    %51 = vector.broadcast %50 : vector<1x8xf32> to vector<8x8xf32>
    %52 = arith.addf %48, %51 : vector<8x8xf32>
    %cst_40 = arith.constant dense<0.000000e+00> : vector<8x8xf32>
    %53 = tpu.matmul %38, %45, %cst_40 {dimension_numbers = #tpu.dot_dimension_numbers<[1], [1], [0], [0], [0, 0, 1, 0], [], []>} : vector<8x8xf32>, vector<8x8xf32>, vector<8x8xf32> -> vector<8x8xf32>
    %cst_41 = arith.constant dense<0xFF800000> : vector<8xf32>
    %54 = vector.multi_reduction <maximumf>, %53, %cst_41 [1] : vector<8x8xf32> to vector<8xf32>
    %55 = vector.shape_cast %54 : vector<8xf32> to vector<8x1xf32>
    %56 = vector.broadcast %55 : vector<8x1xf32> to vector<8x8xf32>
    %57 = arith.subf %53, %56 : vector<8x8xf32>
    %58 = math.exp %57 : vector<8x8xf32>
    %cst_42 = arith.constant dense<0.000000e+00> : vector<8xf32>
    %59 = vector.multi_reduction <add>, %58, %cst_42 [1] : vector<8x8xf32> to vector<8xf32>
    %60 = vector.shape_cast %59 : vector<8xf32> to vector<8x1xf32>
    %61 = tpu.reciprocal %60 : vector<8x1xf32> -> vector<8x1xf32>
    %cst_43 = arith.constant 0.176776692 : f32
    %62 = vector.broadcast %cst_43 : f32 to vector<8x1xf32>
    %63 = arith.mulf %62, %61 : vector<8x1xf32>
    %64 = vector.broadcast %63 : vector<8x1xf32> to vector<8x8xf32>
    %65 = arith.mulf %58, %64 : vector<8x8xf32>
    %cst_44 = arith.constant dense<0.000000e+00> : vector<8x8xf32>
    %66 = tpu.matmul %65, %52, %cst_44 {dimension_numbers = #tpu.dot_dimension_numbers<[1], [0], [0], [1], [0, 0, 1, 1], [], []>} : vector<8x8xf32>, vector<8x8xf32>, vector<8x8xf32> -> vector<8x8xf32>
    %c0_45 = arith.constant 0 : index
    %c0_46 = arith.constant 0 : index
    %c0_47 = arith.constant 0 : index
    %c0_48 = arith.constant 0 : index
    %67 = vector.load %arg10[%c0_45, %c0_46, %c0_47, %c0_48] : memref<1x4x8x32xf32, #tpu.memory_space<vmem>>, vector<1x1x8x32xf32>
    %68 = vector.shape_cast %67 : vector<1x1x8x32xf32> to vector<8x32xf32>
    %cst_49 = arith.constant dense<0.000000e+00> : vector<8x32xf32>
    %69 = tpu.matmul %66, %68, %cst_49 {dimension_numbers = #tpu.dot_dimension_numbers<[1], [0], [0], [1], [0, 0, 1, 1], [], []>} : vector<8x8xf32>, vector<8x32xf32>, vector<8x32xf32> -> vector<8x32xf32>
    %70 = arith.addf %31, %69 : vector<8x32xf32>
    %c0_50 = arith.constant 0 : index
    %c1 = arith.constant 1 : index
    %c0_51 = arith.constant 0 : index
    %c0_52 = arith.constant 0 : index
    %71 = vector.load %arg4[%c0_50, %c1, %c0_51, %c0_52] : memref<1x4x32x8xf32, #tpu.memory_space<vmem>>, vector<1x1x32x8xf32>
    %72 = vector.shape_cast %71 : vector<1x1x32x8xf32> to vector<32x8xf32>
    %cst_53 = arith.constant dense<0.000000e+00> : vector<8x8xf32>
    %73 = tpu.matmul %30, %72, %cst_53 {dimension_numbers = #tpu.dot_dimension_numbers<[1], [0], [0], [1], [0, 0, 1, 1], [], []>} : vector<8x32xf32>, vector<32x8xf32>, vector<8x8xf32> -> vector<8x8xf32>
    %c0_54 = arith.constant 0 : index
    %c1_55 = arith.constant 1 : index
    %c0_56 = arith.constant 0 : index
    %c0_57 = arith.constant 0 : index
    %74 = vector.load %arg5[%c0_54, %c1_55, %c0_56, %c0_57] : memref<1x4x1x8xf32, #tpu.memory_space<vmem>>, vector<1x1x1x8xf32>
    %75 = vector.shape_cast %74 : vector<1x1x1x8xf32> to vector<1x8xf32>
    %76 = vector.broadcast %75 : vector<1x8xf32> to vector<8x8xf32>
    %77 = arith.addf %73, %76 : vector<8x8xf32>
    %c0_58 = arith.constant 0 : index
    %c1_59 = arith.constant 1 : index
    %c0_60 = arith.constant 0 : index
    %c0_61 = arith.constant 0 : index
    %78 = vector.load %arg6[%c0_58, %c1_59, %c0_60, %c0_61] : memref<1x4x32x8xf32, #tpu.memory_space<vmem>>, vector<1x1x32x8xf32>
    %79 = vector.shape_cast %78 : vector<1x1x32x8xf32> to vector<32x8xf32>
    %cst_62 = arith.constant dense<0.000000e+00> : vector<8x8xf32>
    %80 = tpu.matmul %30, %79, %cst_62 {dimension_numbers = #tpu.dot_dimension_numbers<[1], [0], [0], [1], [0, 0, 1, 1], [], []>} : vector<8x32xf32>, vector<32x8xf32>, vector<8x8xf32> -> vector<8x8xf32>
    %c0_63 = arith.constant 0 : index
    %c1_64 = arith.constant 1 : index
    %c0_65 = arith.constant 0 : index
    %c0_66 = arith.constant 0 : index
    %81 = vector.load %arg7[%c0_63, %c1_64, %c0_65, %c0_66] : memref<1x4x1x8xf32, #tpu.memory_space<vmem>>, vector<1x1x1x8xf32>
    %82 = vector.shape_cast %81 : vector<1x1x1x8xf32> to vector<1x8xf32>
    %83 = vector.broadcast %82 : vector<1x8xf32> to vector<8x8xf32>
    %84 = arith.addf %80, %83 : vector<8x8xf32>
    %c0_67 = arith.constant 0 : index
    %c1_68 = arith.constant 1 : index
    %c0_69 = arith.constant 0 : index
    %c0_70 = arith.constant 0 : index
    %85 = vector.load %arg8[%c0_67, %c1_68, %c0_69, %c0_70] : memref<1x4x32x8xf32, #tpu.memory_space<vmem>>, vector<1x1x32x8xf32>
    %86 = vector.shape_cast %85 : vector<1x1x32x8xf32> to vector<32x8xf32>
    %cst_71 = arith.constant dense<0.000000e+00> : vector<8x8xf32>
    %87 = tpu.matmul %30, %86, %cst_71 {dimension_numbers = #tpu.dot_dimension_numbers<[1], [0], [0], [1], [0, 0, 1, 1], [], []>} : vector<8x32xf32>, vector<32x8xf32>, vector<8x8xf32> -> vector<8x8xf32>
    %c0_72 = arith.constant 0 : index
    %c1_73 = arith.constant 1 : index
    %c0_74 = arith.constant 0 : index
    %c0_75 = arith.constant 0 : index
    %88 = vector.load %arg9[%c0_72, %c1_73, %c0_74, %c0_75] : memref<1x4x1x8xf32, #tpu.memory_space<vmem>>, vector<1x1x1x8xf32>
    %89 = vector.shape_cast %88 : vector<1x1x1x8xf32> to vector<1x8xf32>
    %90 = vector.broadcast %89 : vector<1x8xf32> to vector<8x8xf32>
    %91 = arith.addf %87, %90 : vector<8x8xf32>
    %cst_76 = arith.constant dense<0.000000e+00> : vector<8x8xf32>
    %92 = tpu.matmul %77, %84, %cst_76 {dimension_numbers = #tpu.dot_dimension_numbers<[1], [1], [0], [0], [0, 0, 1, 0], [], []>} : vector<8x8xf32>, vector<8x8xf32>, vector<8x8xf32> -> vector<8x8xf32>
    %cst_77 = arith.constant dense<0xFF800000> : vector<8xf32>
    %93 = vector.multi_reduction <maximumf>, %92, %cst_77 [1] : vector<8x8xf32> to vector<8xf32>
    %94 = vector.shape_cast %93 : vector<8xf32> to vector<8x1xf32>
    %95 = vector.broadcast %94 : vector<8x1xf32> to vector<8x8xf32>
    %96 = arith.subf %92, %95 : vector<8x8xf32>
    %97 = math.exp %96 : vector<8x8xf32>
    %cst_78 = arith.constant dense<0.000000e+00> : vector<8xf32>
    %98 = vector.multi_reduction <add>, %97, %cst_78 [1] : vector<8x8xf32> to vector<8xf32>
    %99 = vector.shape_cast %98 : vector<8xf32> to vector<8x1xf32>
    %100 = tpu.reciprocal %99 : vector<8x1xf32> -> vector<8x1xf32>
    %cst_79 = arith.constant 0.176776692 : f32
    %101 = vector.broadcast %cst_79 : f32 to vector<8x1xf32>
    %102 = arith.mulf %101, %100 : vector<8x1xf32>
    %103 = vector.broadcast %102 : vector<8x1xf32> to vector<8x8xf32>
    %104 = arith.mulf %97, %103 : vector<8x8xf32>
    %cst_80 = arith.constant dense<0.000000e+00> : vector<8x8xf32>
    %105 = tpu.matmul %104, %91, %cst_80 {dimension_numbers = #tpu.dot_dimension_numbers<[1], [0], [0], [1], [0, 0, 1, 1], [], []>} : vector<8x8xf32>, vector<8x8xf32>, vector<8x8xf32> -> vector<8x8xf32>
    %c0_81 = arith.constant 0 : index
    %c1_82 = arith.constant 1 : index
    %c0_83 = arith.constant 0 : index
    %c0_84 = arith.constant 0 : index
    %106 = vector.load %arg10[%c0_81, %c1_82, %c0_83, %c0_84] : memref<1x4x8x32xf32, #tpu.memory_space<vmem>>, vector<1x1x8x32xf32>
    %107 = vector.shape_cast %106 : vector<1x1x8x32xf32> to vector<8x32xf32>
    %cst_85 = arith.constant dense<0.000000e+00> : vector<8x32xf32>
    %108 = tpu.matmul %105, %107, %cst_85 {dimension_numbers = #tpu.dot_dimension_numbers<[1], [0], [0], [1], [0, 0, 1, 1], [], []>} : vector<8x8xf32>, vector<8x32xf32>, vector<8x32xf32> -> vector<8x32xf32>
    %109 = arith.addf %70, %108 : vector<8x32xf32>
    %c0_86 = arith.constant 0 : index
    %c2 = arith.constant 2 : index
    %c0_87 = arith.constant 0 : index
    %c0_88 = arith.constant 0 : index
    %110 = vector.load %arg4[%c0_86, %c2, %c0_87, %c0_88] : memref<1x4x32x8xf32, #tpu.memory_space<vmem>>, vector<1x1x32x8xf32>
    %111 = vector.shape_cast %110 : vector<1x1x32x8xf32> to vector<32x8xf32>
    %cst_89 = arith.constant dense<0.000000e+00> : vector<8x8xf32>
    %112 = tpu.matmul %30, %111, %cst_89 {dimension_numbers = #tpu.dot_dimension_numbers<[1], [0], [0], [1], [0, 0, 1, 1], [], []>} : vector<8x32xf32>, vector<32x8xf32>, vector<8x8xf32> -> vector<8x8xf32>
    %c0_90 = arith.constant 0 : index
    %c2_91 = arith.constant 2 : index
    %c0_92 = arith.constant 0 : index
    %c0_93 = arith.constant 0 : index
    %113 = vector.load %arg5[%c0_90, %c2_91, %c0_92, %c0_93] : memref<1x4x1x8xf32, #tpu.memory_space<vmem>>, vector<1x1x1x8xf32>
    %114 = vector.shape_cast %113 : vector<1x1x1x8xf32> to vector<1x8xf32>
    %115 = vector.broadcast %114 : vector<1x8xf32> to vector<8x8xf32>
    %116 = arith.addf %112, %115 : vector<8x8xf32>
    %c0_94 = arith.constant 0 : index
    %c2_95 = arith.constant 2 : index
    %c0_96 = arith.constant 0 : index
    %c0_97 = arith.constant 0 : index
    %117 = vector.load %arg6[%c0_94, %c2_95, %c0_96, %c0_97] : memref<1x4x32x8xf32, #tpu.memory_space<vmem>>, vector<1x1x32x8xf32>
    %118 = vector.shape_cast %117 : vector<1x1x32x8xf32> to vector<32x8xf32>
    %cst_98 = arith.constant dense<0.000000e+00> : vector<8x8xf32>
    %119 = tpu.matmul %30, %118, %cst_98 {dimension_numbers = #tpu.dot_dimension_numbers<[1], [0], [0], [1], [0, 0, 1, 1], [], []>} : vector<8x32xf32>, vector<32x8xf32>, vector<8x8xf32> -> vector<8x8xf32>
    %c0_99 = arith.constant 0 : index
    %c2_100 = arith.constant 2 : index
    %c0_101 = arith.constant 0 : index
    %c0_102 = arith.constant 0 : index
    %120 = vector.load %arg7[%c0_99, %c2_100, %c0_101, %c0_102] : memref<1x4x1x8xf32, #tpu.memory_space<vmem>>, vector<1x1x1x8xf32>
    %121 = vector.shape_cast %120 : vector<1x1x1x8xf32> to vector<1x8xf32>
    %122 = vector.broadcast %121 : vector<1x8xf32> to vector<8x8xf32>
    %123 = arith.addf %119, %122 : vector<8x8xf32>
    %c0_103 = arith.constant 0 : index
    %c2_104 = arith.constant 2 : index
    %c0_105 = arith.constant 0 : index
    %c0_106 = arith.constant 0 : index
    %124 = vector.load %arg8[%c0_103, %c2_104, %c0_105, %c0_106] : memref<1x4x32x8xf32, #tpu.memory_space<vmem>>, vector<1x1x32x8xf32>
    %125 = vector.shape_cast %124 : vector<1x1x32x8xf32> to vector<32x8xf32>
    %cst_107 = arith.constant dense<0.000000e+00> : vector<8x8xf32>
    %126 = tpu.matmul %30, %125, %cst_107 {dimension_numbers = #tpu.dot_dimension_numbers<[1], [0], [0], [1], [0, 0, 1, 1], [], []>} : vector<8x32xf32>, vector<32x8xf32>, vector<8x8xf32> -> vector<8x8xf32>
    %c0_108 = arith.constant 0 : index
    %c2_109 = arith.constant 2 : index
    %c0_110 = arith.constant 0 : index
    %c0_111 = arith.constant 0 : index
    %127 = vector.load %arg9[%c0_108, %c2_109, %c0_110, %c0_111] : memref<1x4x1x8xf32, #tpu.memory_space<vmem>>, vector<1x1x1x8xf32>
    %128 = vector.shape_cast %127 : vector<1x1x1x8xf32> to vector<1x8xf32>
    %129 = vector.broadcast %128 : vector<1x8xf32> to vector<8x8xf32>
    %130 = arith.addf %126, %129 : vector<8x8xf32>
    %cst_112 = arith.constant dense<0.000000e+00> : vector<8x8xf32>
    %131 = tpu.matmul %116, %123, %cst_112 {dimension_numbers = #tpu.dot_dimension_numbers<[1], [1], [0], [0], [0, 0, 1, 0], [], []>} : vector<8x8xf32>, vector<8x8xf32>, vector<8x8xf32> -> vector<8x8xf32>
    %cst_113 = arith.constant dense<0xFF800000> : vector<8xf32>
    %132 = vector.multi_reduction <maximumf>, %131, %cst_113 [1] : vector<8x8xf32> to vector<8xf32>
    %133 = vector.shape_cast %132 : vector<8xf32> to vector<8x1xf32>
    %134 = vector.broadcast %133 : vector<8x1xf32> to vector<8x8xf32>
    %135 = arith.subf %131, %134 : vector<8x8xf32>
    %136 = math.exp %135 : vector<8x8xf32>
    %cst_114 = arith.constant dense<0.000000e+00> : vector<8xf32>
    %137 = vector.multi_reduction <add>, %136, %cst_114 [1] : vector<8x8xf32> to vector<8xf32>
    %138 = vector.shape_cast %137 : vector<8xf32> to vector<8x1xf32>
    %139 = tpu.reciprocal %138 : vector<8x1xf32> -> vector<8x1xf32>
    %cst_115 = arith.constant 0.176776692 : f32
    %140 = vector.broadcast %cst_115 : f32 to vector<8x1xf32>
    %141 = arith.mulf %140, %139 : vector<8x1xf32>
    %142 = vector.broadcast %141 : vector<8x1xf32> to vector<8x8xf32>
    %143 = arith.mulf %136, %142 : vector<8x8xf32>
    %cst_116 = arith.constant dense<0.000000e+00> : vector<8x8xf32>
    %144 = tpu.matmul %143, %130, %cst_116 {dimension_numbers = #tpu.dot_dimension_numbers<[1], [0], [0], [1], [0, 0, 1, 1], [], []>} : vector<8x8xf32>, vector<8x8xf32>, vector<8x8xf32> -> vector<8x8xf32>
    %c0_117 = arith.constant 0 : index
    %c2_118 = arith.constant 2 : index
    %c0_119 = arith.constant 0 : index
    %c0_120 = arith.constant 0 : index
    %145 = vector.load %arg10[%c0_117, %c2_118, %c0_119, %c0_120] : memref<1x4x8x32xf32, #tpu.memory_space<vmem>>, vector<1x1x8x32xf32>
    %146 = vector.shape_cast %145 : vector<1x1x8x32xf32> to vector<8x32xf32>
    %cst_121 = arith.constant dense<0.000000e+00> : vector<8x32xf32>
    %147 = tpu.matmul %144, %146, %cst_121 {dimension_numbers = #tpu.dot_dimension_numbers<[1], [0], [0], [1], [0, 0, 1, 1], [], []>} : vector<8x8xf32>, vector<8x32xf32>, vector<8x32xf32> -> vector<8x32xf32>
    %148 = arith.addf %109, %147 : vector<8x32xf32>
    %c0_122 = arith.constant 0 : index
    %c3 = arith.constant 3 : index
    %c0_123 = arith.constant 0 : index
    %c0_124 = arith.constant 0 : index
    %149 = vector.load %arg4[%c0_122, %c3, %c0_123, %c0_124] : memref<1x4x32x8xf32, #tpu.memory_space<vmem>>, vector<1x1x32x8xf32>
    %150 = vector.shape_cast %149 : vector<1x1x32x8xf32> to vector<32x8xf32>
    %cst_125 = arith.constant dense<0.000000e+00> : vector<8x8xf32>
    %151 = tpu.matmul %30, %150, %cst_125 {dimension_numbers = #tpu.dot_dimension_numbers<[1], [0], [0], [1], [0, 0, 1, 1], [], []>} : vector<8x32xf32>, vector<32x8xf32>, vector<8x8xf32> -> vector<8x8xf32>
    %c0_126 = arith.constant 0 : index
    %c3_127 = arith.constant 3 : index
    %c0_128 = arith.constant 0 : index
    %c0_129 = arith.constant 0 : index
    %152 = vector.load %arg5[%c0_126, %c3_127, %c0_128, %c0_129] : memref<1x4x1x8xf32, #tpu.memory_space<vmem>>, vector<1x1x1x8xf32>
    %153 = vector.shape_cast %152 : vector<1x1x1x8xf32> to vector<1x8xf32>
    %154 = vector.broadcast %153 : vector<1x8xf32> to vector<8x8xf32>
    %155 = arith.addf %151, %154 : vector<8x8xf32>
    %c0_130 = arith.constant 0 : index
    %c3_131 = arith.constant 3 : index
    %c0_132 = arith.constant 0 : index
    %c0_133 = arith.constant 0 : index
    %156 = vector.load %arg6[%c0_130, %c3_131, %c0_132, %c0_133] : memref<1x4x32x8xf32, #tpu.memory_space<vmem>>, vector<1x1x32x8xf32>
    %157 = vector.shape_cast %156 : vector<1x1x32x8xf32> to vector<32x8xf32>
    %cst_134 = arith.constant dense<0.000000e+00> : vector<8x8xf32>
    %158 = tpu.matmul %30, %157, %cst_134 {dimension_numbers = #tpu.dot_dimension_numbers<[1], [0], [0], [1], [0, 0, 1, 1], [], []>} : vector<8x32xf32>, vector<32x8xf32>, vector<8x8xf32> -> vector<8x8xf32>
    %c0_135 = arith.constant 0 : index
    %c3_136 = arith.constant 3 : index
    %c0_137 = arith.constant 0 : index
    %c0_138 = arith.constant 0 : index
    %159 = vector.load %arg7[%c0_135, %c3_136, %c0_137, %c0_138] : memref<1x4x1x8xf32, #tpu.memory_space<vmem>>, vector<1x1x1x8xf32>
    %160 = vector.shape_cast %159 : vector<1x1x1x8xf32> to vector<1x8xf32>
    %161 = vector.broadcast %160 : vector<1x8xf32> to vector<8x8xf32>
    %162 = arith.addf %158, %161 : vector<8x8xf32>
    %c0_139 = arith.constant 0 : index
    %c3_140 = arith.constant 3 : index
    %c0_141 = arith.constant 0 : index
    %c0_142 = arith.constant 0 : index
    %163 = vector.load %arg8[%c0_139, %c3_140, %c0_141, %c0_142] : memref<1x4x32x8xf32, #tpu.memory_space<vmem>>, vector<1x1x32x8xf32>
    %164 = vector.shape_cast %163 : vector<1x1x32x8xf32> to vector<32x8xf32>
    %cst_143 = arith.constant dense<0.000000e+00> : vector<8x8xf32>
    %165 = tpu.matmul %30, %164, %cst_143 {dimension_numbers = #tpu.dot_dimension_numbers<[1], [0], [0], [1], [0, 0, 1, 1], [], []>} : vector<8x32xf32>, vector<32x8xf32>, vector<8x8xf32> -> vector<8x8xf32>
    %c0_144 = arith.constant 0 : index
    %c3_145 = arith.constant 3 : index
    %c0_146 = arith.constant 0 : index
    %c0_147 = arith.constant 0 : index
    %166 = vector.load %arg9[%c0_144, %c3_145, %c0_146, %c0_147] : memref<1x4x1x8xf32, #tpu.memory_space<vmem>>, vector<1x1x1x8xf32>
    %167 = vector.shape_cast %166 : vector<1x1x1x8xf32> to vector<1x8xf32>
    %168 = vector.broadcast %167 : vector<1x8xf32> to vector<8x8xf32>
    %169 = arith.addf %165, %168 : vector<8x8xf32>
    %cst_148 = arith.constant dense<0.000000e+00> : vector<8x8xf32>
    %170 = tpu.matmul %155, %162, %cst_148 {dimension_numbers = #tpu.dot_dimension_numbers<[1], [1], [0], [0], [0, 0, 1, 0], [], []>} : vector<8x8xf32>, vector<8x8xf32>, vector<8x8xf32> -> vector<8x8xf32>
    %cst_149 = arith.constant dense<0xFF800000> : vector<8xf32>
    %171 = vector.multi_reduction <maximumf>, %170, %cst_149 [1] : vector<8x8xf32> to vector<8xf32>
    %172 = vector.shape_cast %171 : vector<8xf32> to vector<8x1xf32>
    %173 = vector.broadcast %172 : vector<8x1xf32> to vector<8x8xf32>
    %174 = arith.subf %170, %173 : vector<8x8xf32>
    %175 = math.exp %174 : vector<8x8xf32>
    %cst_150 = arith.constant dense<0.000000e+00> : vector<8xf32>
    %176 = vector.multi_reduction <add>, %175, %cst_150 [1] : vector<8x8xf32> to vector<8xf32>
    %177 = vector.shape_cast %176 : vector<8xf32> to vector<8x1xf32>
    %178 = tpu.reciprocal %177 : vector<8x1xf32> -> vector<8x1xf32>
    %cst_151 = arith.constant 0.176776692 : f32
    %179 = vector.broadcast %cst_151 : f32 to vector<8x1xf32>
    %180 = arith.mulf %179, %178 : vector<8x1xf32>
    %181 = vector.broadcast %180 : vector<8x1xf32> to vector<8x8xf32>
    %182 = arith.mulf %175, %181 : vector<8x8xf32>
    %cst_152 = arith.constant dense<0.000000e+00> : vector<8x8xf32>
    %183 = tpu.matmul %182, %169, %cst_152 {dimension_numbers = #tpu.dot_dimension_numbers<[1], [0], [0], [1], [0, 0, 1, 1], [], []>} : vector<8x8xf32>, vector<8x8xf32>, vector<8x8xf32> -> vector<8x8xf32>
    %c0_153 = arith.constant 0 : index
    %c3_154 = arith.constant 3 : index
    %c0_155 = arith.constant 0 : index
    %c0_156 = arith.constant 0 : index
    %184 = vector.load %arg10[%c0_153, %c3_154, %c0_155, %c0_156] : memref<1x4x8x32xf32, #tpu.memory_space<vmem>>, vector<1x1x8x32xf32>
    %185 = vector.shape_cast %184 : vector<1x1x8x32xf32> to vector<8x32xf32>
    %cst_157 = arith.constant dense<0.000000e+00> : vector<8x32xf32>
    %186 = tpu.matmul %183, %185, %cst_157 {dimension_numbers = #tpu.dot_dimension_numbers<[1], [0], [0], [1], [0, 0, 1, 1], [], []>} : vector<8x8xf32>, vector<8x32xf32>, vector<8x32xf32> -> vector<8x32xf32>
    %187 = arith.addf %148, %186 : vector<8x32xf32>
    %188 = vector.extract_strided_slice %29 {offsets = [8, 0], sizes = [8, 32], strides = [1, 1]} : vector<16x32xf32> to vector<8x32xf32>
    %cst_158 = arith.constant 0.000000e+00 : f32
    %189 = vector.broadcast %cst_158 : f32 to vector<8x32xf32>
    %c0_159 = arith.constant 0 : index
    %c0_160 = arith.constant 0 : index
    %c0_161 = arith.constant 0 : index
    %c0_162 = arith.constant 0 : index
    %190 = vector.load %arg4[%c0_159, %c0_160, %c0_161, %c0_162] : memref<1x4x32x8xf32, #tpu.memory_space<vmem>>, vector<1x1x32x8xf32>
    %191 = vector.shape_cast %190 : vector<1x1x32x8xf32> to vector<32x8xf32>
    %cst_163 = arith.constant dense<0.000000e+00> : vector<8x8xf32>
    %192 = tpu.matmul %188, %191, %cst_163 {dimension_numbers = #tpu.dot_dimension_numbers<[1], [0], [0], [1], [0, 0, 1, 1], [], []>} : vector<8x32xf32>, vector<32x8xf32>, vector<8x8xf32> -> vector<8x8xf32>
    %c0_164 = arith.constant 0 : index
    %c0_165 = arith.constant 0 : index
    %c0_166 = arith.constant 0 : index
    %c0_167 = arith.constant 0 : index
    %193 = vector.load %arg5[%c0_164, %c0_165, %c0_166, %c0_167] : memref<1x4x1x8xf32, #tpu.memory_space<vmem>>, vector<1x1x1x8xf32>
    %194 = vector.shape_cast %193 : vector<1x1x1x8xf32> to vector<1x8xf32>
    %195 = vector.broadcast %194 : vector<1x8xf32> to vector<8x8xf32>
    %196 = arith.addf %192, %195 : vector<8x8xf32>
    %c0_168 = arith.constant 0 : index
    %c0_169 = arith.constant 0 : index
    %c0_170 = arith.constant 0 : index
    %c0_171 = arith.constant 0 : index
    %197 = vector.load %arg6[%c0_168, %c0_169, %c0_170, %c0_171] : memref<1x4x32x8xf32, #tpu.memory_space<vmem>>, vector<1x1x32x8xf32>
    %198 = vector.shape_cast %197 : vector<1x1x32x8xf32> to vector<32x8xf32>
    %cst_172 = arith.constant dense<0.000000e+00> : vector<8x8xf32>
    %199 = tpu.matmul %188, %198, %cst_172 {dimension_numbers = #tpu.dot_dimension_numbers<[1], [0], [0], [1], [0, 0, 1, 1], [], []>} : vector<8x32xf32>, vector<32x8xf32>, vector<8x8xf32> -> vector<8x8xf32>
    %c0_173 = arith.constant 0 : index
    %c0_174 = arith.constant 0 : index
    %c0_175 = arith.constant 0 : index
    %c0_176 = arith.constant 0 : index
    %200 = vector.load %arg7[%c0_173, %c0_174, %c0_175, %c0_176] : memref<1x4x1x8xf32, #tpu.memory_space<vmem>>, vector<1x1x1x8xf32>
    %201 = vector.shape_cast %200 : vector<1x1x1x8xf32> to vector<1x8xf32>
    %202 = vector.broadcast %201 : vector<1x8xf32> to vector<8x8xf32>
    %203 = arith.addf %199, %202 : vector<8x8xf32>
    %c0_177 = arith.constant 0 : index
    %c0_178 = arith.constant 0 : index
    %c0_179 = arith.constant 0 : index
    %c0_180 = arith.constant 0 : index
    %204 = vector.load %arg8[%c0_177, %c0_178, %c0_179, %c0_180] : memref<1x4x32x8xf32, #tpu.memory_space<vmem>>, vector<1x1x32x8xf32>
    %205 = vector.shape_cast %204 : vector<1x1x32x8xf32> to vector<32x8xf32>
    %cst_181 = arith.constant dense<0.000000e+00> : vector<8x8xf32>
    %206 = tpu.matmul %188, %205, %cst_181 {dimension_numbers = #tpu.dot_dimension_numbers<[1], [0], [0], [1], [0, 0, 1, 1], [], []>} : vector<8x32xf32>, vector<32x8xf32>, vector<8x8xf32> -> vector<8x8xf32>
    %c0_182 = arith.constant 0 : index
    %c0_183 = arith.constant 0 : index
    %c0_184 = arith.constant 0 : index
    %c0_185 = arith.constant 0 : index
    %207 = vector.load %arg9[%c0_182, %c0_183, %c0_184, %c0_185] : memref<1x4x1x8xf32, #tpu.memory_space<vmem>>, vector<1x1x1x8xf32>
    %208 = vector.shape_cast %207 : vector<1x1x1x8xf32> to vector<1x8xf32>
    %209 = vector.broadcast %208 : vector<1x8xf32> to vector<8x8xf32>
    %210 = arith.addf %206, %209 : vector<8x8xf32>
    %cst_186 = arith.constant dense<0.000000e+00> : vector<8x8xf32>
    %211 = tpu.matmul %196, %203, %cst_186 {dimension_numbers = #tpu.dot_dimension_numbers<[1], [1], [0], [0], [0, 0, 1, 0], [], []>} : vector<8x8xf32>, vector<8x8xf32>, vector<8x8xf32> -> vector<8x8xf32>
    %cst_187 = arith.constant dense<0xFF800000> : vector<8xf32>
    %212 = vector.multi_reduction <maximumf>, %211, %cst_187 [1] : vector<8x8xf32> to vector<8xf32>
    %213 = vector.shape_cast %212 : vector<8xf32> to vector<8x1xf32>
    %214 = vector.broadcast %213 : vector<8x1xf32> to vector<8x8xf32>
    %215 = arith.subf %211, %214 : vector<8x8xf32>
    %216 = math.exp %215 : vector<8x8xf32>
    %cst_188 = arith.constant dense<0.000000e+00> : vector<8xf32>
    %217 = vector.multi_reduction <add>, %216, %cst_188 [1] : vector<8x8xf32> to vector<8xf32>
    %218 = vector.shape_cast %217 : vector<8xf32> to vector<8x1xf32>
    %219 = tpu.reciprocal %218 : vector<8x1xf32> -> vector<8x1xf32>
    %cst_189 = arith.constant 0.176776692 : f32
    %220 = vector.broadcast %cst_189 : f32 to vector<8x1xf32>
    %221 = arith.mulf %220, %219 : vector<8x1xf32>
    %222 = vector.broadcast %221 : vector<8x1xf32> to vector<8x8xf32>
    %223 = arith.mulf %216, %222 : vector<8x8xf32>
    %cst_190 = arith.constant dense<0.000000e+00> : vector<8x8xf32>
    %224 = tpu.matmul %223, %210, %cst_190 {dimension_numbers = #tpu.dot_dimension_numbers<[1], [0], [0], [1], [0, 0, 1, 1], [], []>} : vector<8x8xf32>, vector<8x8xf32>, vector<8x8xf32> -> vector<8x8xf32>
    %c0_191 = arith.constant 0 : index
    %c0_192 = arith.constant 0 : index
    %c0_193 = arith.constant 0 : index
    %c0_194 = arith.constant 0 : index
    %225 = vector.load %arg10[%c0_191, %c0_192, %c0_193, %c0_194] : memref<1x4x8x32xf32, #tpu.memory_space<vmem>>, vector<1x1x8x32xf32>
    %226 = vector.shape_cast %225 : vector<1x1x8x32xf32> to vector<8x32xf32>
    %cst_195 = arith.constant dense<0.000000e+00> : vector<8x32xf32>
    %227 = tpu.matmul %224, %226, %cst_195 {dimension_numbers = #tpu.dot_dimension_numbers<[1], [0], [0], [1], [0, 0, 1, 1], [], []>} : vector<8x8xf32>, vector<8x32xf32>, vector<8x32xf32> -> vector<8x32xf32>
    %228 = arith.addf %189, %227 : vector<8x32xf32>
    %c0_196 = arith.constant 0 : index
    %c1_197 = arith.constant 1 : index
    %c0_198 = arith.constant 0 : index
    %c0_199 = arith.constant 0 : index
    %229 = vector.load %arg4[%c0_196, %c1_197, %c0_198, %c0_199] : memref<1x4x32x8xf32, #tpu.memory_space<vmem>>, vector<1x1x32x8xf32>
    %230 = vector.shape_cast %229 : vector<1x1x32x8xf32> to vector<32x8xf32>
    %cst_200 = arith.constant dense<0.000000e+00> : vector<8x8xf32>
    %231 = tpu.matmul %188, %230, %cst_200 {dimension_numbers = #tpu.dot_dimension_numbers<[1], [0], [0], [1], [0, 0, 1, 1], [], []>} : vector<8x32xf32>, vector<32x8xf32>, vector<8x8xf32> -> vector<8x8xf32>
    %c0_201 = arith.constant 0 : index
    %c1_202 = arith.constant 1 : index
    %c0_203 = arith.constant 0 : index
    %c0_204 = arith.constant 0 : index
    %232 = vector.load %arg5[%c0_201, %c1_202, %c0_203, %c0_204] : memref<1x4x1x8xf32, #tpu.memory_space<vmem>>, vector<1x1x1x8xf32>
    %233 = vector.shape_cast %232 : vector<1x1x1x8xf32> to vector<1x8xf32>
    %234 = vector.broadcast %233 : vector<1x8xf32> to vector<8x8xf32>
    %235 = arith.addf %231, %234 : vector<8x8xf32>
    %c0_205 = arith.constant 0 : index
    %c1_206 = arith.constant 1 : index
    %c0_207 = arith.constant 0 : index
    %c0_208 = arith.constant 0 : index
    %236 = vector.load %arg6[%c0_205, %c1_206, %c0_207, %c0_208] : memref<1x4x32x8xf32, #tpu.memory_space<vmem>>, vector<1x1x32x8xf32>
    %237 = vector.shape_cast %236 : vector<1x1x32x8xf32> to vector<32x8xf32>
    %cst_209 = arith.constant dense<0.000000e+00> : vector<8x8xf32>
    %238 = tpu.matmul %188, %237, %cst_209 {dimension_numbers = #tpu.dot_dimension_numbers<[1], [0], [0], [1], [0, 0, 1, 1], [], []>} : vector<8x32xf32>, vector<32x8xf32>, vector<8x8xf32> -> vector<8x8xf32>
    %c0_210 = arith.constant 0 : index
    %c1_211 = arith.constant 1 : index
    %c0_212 = arith.constant 0 : index
    %c0_213 = arith.constant 0 : index
    %239 = vector.load %arg7[%c0_210, %c1_211, %c0_212, %c0_213] : memref<1x4x1x8xf32, #tpu.memory_space<vmem>>, vector<1x1x1x8xf32>
    %240 = vector.shape_cast %239 : vector<1x1x1x8xf32> to vector<1x8xf32>
    %241 = vector.broadcast %240 : vector<1x8xf32> to vector<8x8xf32>
    %242 = arith.addf %238, %241 : vector<8x8xf32>
    %c0_214 = arith.constant 0 : index
    %c1_215 = arith.constant 1 : index
    %c0_216 = arith.constant 0 : index
    %c0_217 = arith.constant 0 : index
    %243 = vector.load %arg8[%c0_214, %c1_215, %c0_216, %c0_217] : memref<1x4x32x8xf32, #tpu.memory_space<vmem>>, vector<1x1x32x8xf32>
    %244 = vector.shape_cast %243 : vector<1x1x32x8xf32> to vector<32x8xf32>
    %cst_218 = arith.constant dense<0.000000e+00> : vector<8x8xf32>
    %245 = tpu.matmul %188, %244, %cst_218 {dimension_numbers = #tpu.dot_dimension_numbers<[1], [0], [0], [1], [0, 0, 1, 1], [], []>} : vector<8x32xf32>, vector<32x8xf32>, vector<8x8xf32> -> vector<8x8xf32>
    %c0_219 = arith.constant 0 : index
    %c1_220 = arith.constant 1 : index
    %c0_221 = arith.constant 0 : index
    %c0_222 = arith.constant 0 : index
    %246 = vector.load %arg9[%c0_219, %c1_220, %c0_221, %c0_222] : memref<1x4x1x8xf32, #tpu.memory_space<vmem>>, vector<1x1x1x8xf32>
    %247 = vector.shape_cast %246 : vector<1x1x1x8xf32> to vector<1x8xf32>
    %248 = vector.broadcast %247 : vector<1x8xf32> to vector<8x8xf32>
    %249 = arith.addf %245, %248 : vector<8x8xf32>
    %cst_223 = arith.constant dense<0.000000e+00> : vector<8x8xf32>
    %250 = tpu.matmul %235, %242, %cst_223 {dimension_numbers = #tpu.dot_dimension_numbers<[1], [1], [0], [0], [0, 0, 1, 0], [], []>} : vector<8x8xf32>, vector<8x8xf32>, vector<8x8xf32> -> vector<8x8xf32>
    %cst_224 = arith.constant dense<0xFF800000> : vector<8xf32>
    %251 = vector.multi_reduction <maximumf>, %250, %cst_224 [1] : vector<8x8xf32> to vector<8xf32>
    %252 = vector.shape_cast %251 : vector<8xf32> to vector<8x1xf32>
    %253 = vector.broadcast %252 : vector<8x1xf32> to vector<8x8xf32>
    %254 = arith.subf %250, %253 : vector<8x8xf32>
    %255 = math.exp %254 : vector<8x8xf32>
    %cst_225 = arith.constant dense<0.000000e+00> : vector<8xf32>
    %256 = vector.multi_reduction <add>, %255, %cst_225 [1] : vector<8x8xf32> to vector<8xf32>
    %257 = vector.shape_cast %256 : vector<8xf32> to vector<8x1xf32>
    %258 = tpu.reciprocal %257 : vector<8x1xf32> -> vector<8x1xf32>
    %cst_226 = arith.constant 0.176776692 : f32
    %259 = vector.broadcast %cst_226 : f32 to vector<8x1xf32>
    %260 = arith.mulf %259, %258 : vector<8x1xf32>
    %261 = vector.broadcast %260 : vector<8x1xf32> to vector<8x8xf32>
    %262 = arith.mulf %255, %261 : vector<8x8xf32>
    %cst_227 = arith.constant dense<0.000000e+00> : vector<8x8xf32>
    %263 = tpu.matmul %262, %249, %cst_227 {dimension_numbers = #tpu.dot_dimension_numbers<[1], [0], [0], [1], [0, 0, 1, 1], [], []>} : vector<8x8xf32>, vector<8x8xf32>, vector<8x8xf32> -> vector<8x8xf32>
    %c0_228 = arith.constant 0 : index
    %c1_229 = arith.constant 1 : index
    %c0_230 = arith.constant 0 : index
    %c0_231 = arith.constant 0 : index
    %264 = vector.load %arg10[%c0_228, %c1_229, %c0_230, %c0_231] : memref<1x4x8x32xf32, #tpu.memory_space<vmem>>, vector<1x1x8x32xf32>
    %265 = vector.shape_cast %264 : vector<1x1x8x32xf32> to vector<8x32xf32>
    %cst_232 = arith.constant dense<0.000000e+00> : vector<8x32xf32>
    %266 = tpu.matmul %263, %265, %cst_232 {dimension_numbers = #tpu.dot_dimension_numbers<[1], [0], [0], [1], [0, 0, 1, 1], [], []>} : vector<8x8xf32>, vector<8x32xf32>, vector<8x32xf32> -> vector<8x32xf32>
    %267 = arith.addf %228, %266 : vector<8x32xf32>
    %c0_233 = arith.constant 0 : index
    %c2_234 = arith.constant 2 : index
    %c0_235 = arith.constant 0 : index
    %c0_236 = arith.constant 0 : index
    %268 = vector.load %arg4[%c0_233, %c2_234, %c0_235, %c0_236] : memref<1x4x32x8xf32, #tpu.memory_space<vmem>>, vector<1x1x32x8xf32>
    %269 = vector.shape_cast %268 : vector<1x1x32x8xf32> to vector<32x8xf32>
    %cst_237 = arith.constant dense<0.000000e+00> : vector<8x8xf32>
    %270 = tpu.matmul %188, %269, %cst_237 {dimension_numbers = #tpu.dot_dimension_numbers<[1], [0], [0], [1], [0, 0, 1, 1], [], []>} : vector<8x32xf32>, vector<32x8xf32>, vector<8x8xf32> -> vector<8x8xf32>
    %c0_238 = arith.constant 0 : index
    %c2_239 = arith.constant 2 : index
    %c0_240 = arith.constant 0 : index
    %c0_241 = arith.constant 0 : index
    %271 = vector.load %arg5[%c0_238, %c2_239, %c0_240, %c0_241] : memref<1x4x1x8xf32, #tpu.memory_space<vmem>>, vector<1x1x1x8xf32>
    %272 = vector.shape_cast %271 : vector<1x1x1x8xf32> to vector<1x8xf32>
    %273 = vector.broadcast %272 : vector<1x8xf32> to vector<8x8xf32>
    %274 = arith.addf %270, %273 : vector<8x8xf32>
    %c0_242 = arith.constant 0 : index
    %c2_243 = arith.constant 2 : index
    %c0_244 = arith.constant 0 : index
    %c0_245 = arith.constant 0 : index
    %275 = vector.load %arg6[%c0_242, %c2_243, %c0_244, %c0_245] : memref<1x4x32x8xf32, #tpu.memory_space<vmem>>, vector<1x1x32x8xf32>
    %276 = vector.shape_cast %275 : vector<1x1x32x8xf32> to vector<32x8xf32>
    %cst_246 = arith.constant dense<0.000000e+00> : vector<8x8xf32>
    %277 = tpu.matmul %188, %276, %cst_246 {dimension_numbers = #tpu.dot_dimension_numbers<[1], [0], [0], [1], [0, 0, 1, 1], [], []>} : vector<8x32xf32>, vector<32x8xf32>, vector<8x8xf32> -> vector<8x8xf32>
    %c0_247 = arith.constant 0 : index
    %c2_248 = arith.constant 2 : index
    %c0_249 = arith.constant 0 : index
    %c0_250 = arith.constant 0 : index
    %278 = vector.load %arg7[%c0_247, %c2_248, %c0_249, %c0_250] : memref<1x4x1x8xf32, #tpu.memory_space<vmem>>, vector<1x1x1x8xf32>
    %279 = vector.shape_cast %278 : vector<1x1x1x8xf32> to vector<1x8xf32>
    %280 = vector.broadcast %279 : vector<1x8xf32> to vector<8x8xf32>
    %281 = arith.addf %277, %280 : vector<8x8xf32>
    %c0_251 = arith.constant 0 : index
    %c2_252 = arith.constant 2 : index
    %c0_253 = arith.constant 0 : index
    %c0_254 = arith.constant 0 : index
    %282 = vector.load %arg8[%c0_251, %c2_252, %c0_253, %c0_254] : memref<1x4x32x8xf32, #tpu.memory_space<vmem>>, vector<1x1x32x8xf32>
    %283 = vector.shape_cast %282 : vector<1x1x32x8xf32> to vector<32x8xf32>
    %cst_255 = arith.constant dense<0.000000e+00> : vector<8x8xf32>
    %284 = tpu.matmul %188, %283, %cst_255 {dimension_numbers = #tpu.dot_dimension_numbers<[1], [0], [0], [1], [0, 0, 1, 1], [], []>} : vector<8x32xf32>, vector<32x8xf32>, vector<8x8xf32> -> vector<8x8xf32>
    %c0_256 = arith.constant 0 : index
    %c2_257 = arith.constant 2 : index
    %c0_258 = arith.constant 0 : index
    %c0_259 = arith.constant 0 : index
    %285 = vector.load %arg9[%c0_256, %c2_257, %c0_258, %c0_259] : memref<1x4x1x8xf32, #tpu.memory_space<vmem>>, vector<1x1x1x8xf32>
    %286 = vector.shape_cast %285 : vector<1x1x1x8xf32> to vector<1x8xf32>
    %287 = vector.broadcast %286 : vector<1x8xf32> to vector<8x8xf32>
    %288 = arith.addf %284, %287 : vector<8x8xf32>
    %cst_260 = arith.constant dense<0.000000e+00> : vector<8x8xf32>
    %289 = tpu.matmul %274, %281, %cst_260 {dimension_numbers = #tpu.dot_dimension_numbers<[1], [1], [0], [0], [0, 0, 1, 0], [], []>} : vector<8x8xf32>, vector<8x8xf32>, vector<8x8xf32> -> vector<8x8xf32>
    %cst_261 = arith.constant dense<0xFF800000> : vector<8xf32>
    %290 = vector.multi_reduction <maximumf>, %289, %cst_261 [1] : vector<8x8xf32> to vector<8xf32>
    %291 = vector.shape_cast %290 : vector<8xf32> to vector<8x1xf32>
    %292 = vector.broadcast %291 : vector<8x1xf32> to vector<8x8xf32>
    %293 = arith.subf %289, %292 : vector<8x8xf32>
    %294 = math.exp %293 : vector<8x8xf32>
    %cst_262 = arith.constant dense<0.000000e+00> : vector<8xf32>
    %295 = vector.multi_reduction <add>, %294, %cst_262 [1] : vector<8x8xf32> to vector<8xf32>
    %296 = vector.shape_cast %295 : vector<8xf32> to vector<8x1xf32>
    %297 = tpu.reciprocal %296 : vector<8x1xf32> -> vector<8x1xf32>
    %cst_263 = arith.constant 0.176776692 : f32
    %298 = vector.broadcast %cst_263 : f32 to vector<8x1xf32>
    %299 = arith.mulf %298, %297 : vector<8x1xf32>
    %300 = vector.broadcast %299 : vector<8x1xf32> to vector<8x8xf32>
    %301 = arith.mulf %294, %300 : vector<8x8xf32>
    %cst_264 = arith.constant dense<0.000000e+00> : vector<8x8xf32>
    %302 = tpu.matmul %301, %288, %cst_264 {dimension_numbers = #tpu.dot_dimension_numbers<[1], [0], [0], [1], [0, 0, 1, 1], [], []>} : vector<8x8xf32>, vector<8x8xf32>, vector<8x8xf32> -> vector<8x8xf32>
    %c0_265 = arith.constant 0 : index
    %c2_266 = arith.constant 2 : index
    %c0_267 = arith.constant 0 : index
    %c0_268 = arith.constant 0 : index
    %303 = vector.load %arg10[%c0_265, %c2_266, %c0_267, %c0_268] : memref<1x4x8x32xf32, #tpu.memory_space<vmem>>, vector<1x1x8x32xf32>
    %304 = vector.shape_cast %303 : vector<1x1x8x32xf32> to vector<8x32xf32>
    %cst_269 = arith.constant dense<0.000000e+00> : vector<8x32xf32>
    %305 = tpu.matmul %302, %304, %cst_269 {dimension_numbers = #tpu.dot_dimension_numbers<[1], [0], [0], [1], [0, 0, 1, 1], [], []>} : vector<8x8xf32>, vector<8x32xf32>, vector<8x32xf32> -> vector<8x32xf32>
    %306 = arith.addf %267, %305 : vector<8x32xf32>
    %c0_270 = arith.constant 0 : index
    %c3_271 = arith.constant 3 : index
    %c0_272 = arith.constant 0 : index
    %c0_273 = arith.constant 0 : index
    %307 = vector.load %arg4[%c0_270, %c3_271, %c0_272, %c0_273] : memref<1x4x32x8xf32, #tpu.memory_space<vmem>>, vector<1x1x32x8xf32>
    %308 = vector.shape_cast %307 : vector<1x1x32x8xf32> to vector<32x8xf32>
    %cst_274 = arith.constant dense<0.000000e+00> : vector<8x8xf32>
    %309 = tpu.matmul %188, %308, %cst_274 {dimension_numbers = #tpu.dot_dimension_numbers<[1], [0], [0], [1], [0, 0, 1, 1], [], []>} : vector<8x32xf32>, vector<32x8xf32>, vector<8x8xf32> -> vector<8x8xf32>
    %c0_275 = arith.constant 0 : index
    %c3_276 = arith.constant 3 : index
    %c0_277 = arith.constant 0 : index
    %c0_278 = arith.constant 0 : index
    %310 = vector.load %arg5[%c0_275, %c3_276, %c0_277, %c0_278] : memref<1x4x1x8xf32, #tpu.memory_space<vmem>>, vector<1x1x1x8xf32>
    %311 = vector.shape_cast %310 : vector<1x1x1x8xf32> to vector<1x8xf32>
    %312 = vector.broadcast %311 : vector<1x8xf32> to vector<8x8xf32>
    %313 = arith.addf %309, %312 : vector<8x8xf32>
    %c0_279 = arith.constant 0 : index
    %c3_280 = arith.constant 3 : index
    %c0_281 = arith.constant 0 : index
    %c0_282 = arith.constant 0 : index
    %314 = vector.load %arg6[%c0_279, %c3_280, %c0_281, %c0_282] : memref<1x4x32x8xf32, #tpu.memory_space<vmem>>, vector<1x1x32x8xf32>
    %315 = vector.shape_cast %314 : vector<1x1x32x8xf32> to vector<32x8xf32>
    %cst_283 = arith.constant dense<0.000000e+00> : vector<8x8xf32>
    %316 = tpu.matmul %188, %315, %cst_283 {dimension_numbers = #tpu.dot_dimension_numbers<[1], [0], [0], [1], [0, 0, 1, 1], [], []>} : vector<8x32xf32>, vector<32x8xf32>, vector<8x8xf32> -> vector<8x8xf32>
    %c0_284 = arith.constant 0 : index
    %c3_285 = arith.constant 3 : index
    %c0_286 = arith.constant 0 : index
    %c0_287 = arith.constant 0 : index
    %317 = vector.load %arg7[%c0_284, %c3_285, %c0_286, %c0_287] : memref<1x4x1x8xf32, #tpu.memory_space<vmem>>, vector<1x1x1x8xf32>
    %318 = vector.shape_cast %317 : vector<1x1x1x8xf32> to vector<1x8xf32>
    %319 = vector.broadcast %318 : vector<1x8xf32> to vector<8x8xf32>
    %320 = arith.addf %316, %319 : vector<8x8xf32>
    %c0_288 = arith.constant 0 : index
    %c3_289 = arith.constant 3 : index
    %c0_290 = arith.constant 0 : index
    %c0_291 = arith.constant 0 : index
    %321 = vector.load %arg8[%c0_288, %c3_289, %c0_290, %c0_291] : memref<1x4x32x8xf32, #tpu.memory_space<vmem>>, vector<1x1x32x8xf32>
    %322 = vector.shape_cast %321 : vector<1x1x32x8xf32> to vector<32x8xf32>
    %cst_292 = arith.constant dense<0.000000e+00> : vector<8x8xf32>
    %323 = tpu.matmul %188, %322, %cst_292 {dimension_numbers = #tpu.dot_dimension_numbers<[1], [0], [0], [1], [0, 0, 1, 1], [], []>} : vector<8x32xf32>, vector<32x8xf32>, vector<8x8xf32> -> vector<8x8xf32>
    %c0_293 = arith.constant 0 : index
    %c3_294 = arith.constant 3 : index
    %c0_295 = arith.constant 0 : index
    %c0_296 = arith.constant 0 : index
    %324 = vector.load %arg9[%c0_293, %c3_294, %c0_295, %c0_296] : memref<1x4x1x8xf32, #tpu.memory_space<vmem>>, vector<1x1x1x8xf32>
    %325 = vector.shape_cast %324 : vector<1x1x1x8xf32> to vector<1x8xf32>
    %326 = vector.broadcast %325 : vector<1x8xf32> to vector<8x8xf32>
    %327 = arith.addf %323, %326 : vector<8x8xf32>
    %cst_297 = arith.constant dense<0.000000e+00> : vector<8x8xf32>
    %328 = tpu.matmul %313, %320, %cst_297 {dimension_numbers = #tpu.dot_dimension_numbers<[1], [1], [0], [0], [0, 0, 1, 0], [], []>} : vector<8x8xf32>, vector<8x8xf32>, vector<8x8xf32> -> vector<8x8xf32>
    %cst_298 = arith.constant dense<0xFF800000> : vector<8xf32>
    %329 = vector.multi_reduction <maximumf>, %328, %cst_298 [1] : vector<8x8xf32> to vector<8xf32>
    %330 = vector.shape_cast %329 : vector<8xf32> to vector<8x1xf32>
    %331 = vector.broadcast %330 : vector<8x1xf32> to vector<8x8xf32>
    %332 = arith.subf %328, %331 : vector<8x8xf32>
    %333 = math.exp %332 : vector<8x8xf32>
    %cst_299 = arith.constant dense<0.000000e+00> : vector<8xf32>
    %334 = vector.multi_reduction <add>, %333, %cst_299 [1] : vector<8x8xf32> to vector<8xf32>
    %335 = vector.shape_cast %334 : vector<8xf32> to vector<8x1xf32>
    %336 = tpu.reciprocal %335 : vector<8x1xf32> -> vector<8x1xf32>
    %cst_300 = arith.constant 0.176776692 : f32
    %337 = vector.broadcast %cst_300 : f32 to vector<8x1xf32>
    %338 = arith.mulf %337, %336 : vector<8x1xf32>
    %339 = vector.broadcast %338 : vector<8x1xf32> to vector<8x8xf32>
    %340 = arith.mulf %333, %339 : vector<8x8xf32>
    %cst_301 = arith.constant dense<0.000000e+00> : vector<8x8xf32>
    %341 = tpu.matmul %340, %327, %cst_301 {dimension_numbers = #tpu.dot_dimension_numbers<[1], [0], [0], [1], [0, 0, 1, 1], [], []>} : vector<8x8xf32>, vector<8x8xf32>, vector<8x8xf32> -> vector<8x8xf32>
    %c0_302 = arith.constant 0 : index
    %c3_303 = arith.constant 3 : index
    %c0_304 = arith.constant 0 : index
    %c0_305 = arith.constant 0 : index
    %342 = vector.load %arg10[%c0_302, %c3_303, %c0_304, %c0_305] : memref<1x4x8x32xf32, #tpu.memory_space<vmem>>, vector<1x1x8x32xf32>
    %343 = vector.shape_cast %342 : vector<1x1x8x32xf32> to vector<8x32xf32>
    %cst_306 = arith.constant dense<0.000000e+00> : vector<8x32xf32>
    %344 = tpu.matmul %341, %343, %cst_306 {dimension_numbers = #tpu.dot_dimension_numbers<[1], [0], [0], [1], [0, 0, 1, 1], [], []>} : vector<8x8xf32>, vector<8x32xf32>, vector<8x32xf32> -> vector<8x32xf32>
    %345 = arith.addf %306, %344 : vector<8x32xf32>
    %346 = tpu.concatenate %187, %345 in 0 : vector<8x32xf32>, vector<8x32xf32> -> vector<16x32xf32>
    %c0_307 = arith.constant 0 : index
    %c0_308 = arith.constant 0 : index
    %c0_309 = arith.constant 0 : index
    %347 = vector.load %arg11[%c0_307, %c0_308, %c0_309] : memref<1x1x32xf32, #tpu.memory_space<vmem>>, vector<1x1x32xf32>
    %348 = vector.shape_cast %347 : vector<1x1x32xf32> to vector<1x32xf32>
    %349 = vector.broadcast %348 : vector<1x32xf32> to vector<16x32xf32>
    %350 = arith.addf %346, %349 : vector<16x32xf32>
    %351 = arith.addf %350, %3 : vector<16x32xf32>
    %c0_310 = arith.constant 0 : index
    %c0_311 = arith.constant 0 : index
    %c0_312 = arith.constant 0 : index
    %352 = vector.load %arg12[%c0_310, %c0_311, %c0_312] : memref<1x1x32xf32, #tpu.memory_space<vmem>>, vector<1x1x32xf32>
    %353 = vector.shape_cast %352 : vector<1x1x32xf32> to vector<1x32xf32>
    %c0_313 = arith.constant 0 : index
    %c0_314 = arith.constant 0 : index
    %c0_315 = arith.constant 0 : index
    %354 = vector.load %arg13[%c0_313, %c0_314, %c0_315] : memref<1x1x32xf32, #tpu.memory_space<vmem>>, vector<1x1x32xf32>
    %355 = vector.shape_cast %354 : vector<1x1x32xf32> to vector<1x32xf32>
    %cst_316 = arith.constant dense<0.000000e+00> : vector<16xf32>
    %356 = vector.multi_reduction <add>, %351, %cst_316 [1] : vector<16x32xf32> to vector<16xf32>
    %357 = vector.shape_cast %356 : vector<16xf32> to vector<16x1xf32>
    %cst_317 = arith.constant 3.200000e+01 : f32
    %358 = vector.broadcast %cst_317 : f32 to vector<16x1xf32>
    %359 = arith.divf %357, %358 : vector<16x1xf32>
    %360 = vector.broadcast %359 : vector<16x1xf32> to vector<16x32xf32>
    %361 = arith.subf %351, %360 : vector<16x32xf32>
    %362 = arith.mulf %361, %361 : vector<16x32xf32>
    %cst_318 = arith.constant dense<0.000000e+00> : vector<16xf32>
    %363 = vector.multi_reduction <add>, %362, %cst_318 [1] : vector<16x32xf32> to vector<16xf32>
    %364 = vector.shape_cast %363 : vector<16xf32> to vector<16x1xf32>
    %cst_319 = arith.constant 3.200000e+01 : f32
    %365 = vector.broadcast %cst_319 : f32 to vector<16x1xf32>
    %366 = arith.divf %364, %365 : vector<16x1xf32>
    %367 = vector.broadcast %359 : vector<16x1xf32> to vector<16x32xf32>
    %368 = arith.subf %351, %367 : vector<16x32xf32>
    %cst_320 = arith.constant 9.99999974E-6 : f32
    %369 = vector.broadcast %cst_320 : f32 to vector<16x1xf32>
    %370 = arith.addf %366, %369 : vector<16x1xf32>
    %371 = math.rsqrt %370 : vector<16x1xf32>
    %372 = vector.broadcast %371 : vector<16x1xf32> to vector<16x32xf32>
    %373 = arith.mulf %368, %372 : vector<16x32xf32>
    %374 = vector.broadcast %353 : vector<1x32xf32> to vector<16x32xf32>
    %375 = arith.mulf %373, %374 : vector<16x32xf32>
    %376 = vector.broadcast %355 : vector<1x32xf32> to vector<16x32xf32>
    %377 = arith.addf %375, %376 : vector<16x32xf32>
    %c0_321 = arith.constant 0 : index
    %c0_322 = arith.constant 0 : index
    %c0_323 = arith.constant 0 : index
    %378 = vector.load %arg14[%c0_321, %c0_322, %c0_323] : memref<1x32x128xf32, #tpu.memory_space<vmem>>, vector<1x32x128xf32>
    %379 = vector.shape_cast %378 : vector<1x32x128xf32> to vector<32x128xf32>
    %cst_324 = arith.constant dense<0.000000e+00> : vector<16x128xf32>
    %380 = tpu.matmul %377, %379, %cst_324 {dimension_numbers = #tpu.dot_dimension_numbers<[1], [0], [0], [1], [0, 0, 1, 1], [], []>} : vector<16x32xf32>, vector<32x128xf32>, vector<16x128xf32> -> vector<16x128xf32>
    %c0_325 = arith.constant 0 : index
    %c0_326 = arith.constant 0 : index
    %c0_327 = arith.constant 0 : index
    %381 = vector.load %arg15[%c0_325, %c0_326, %c0_327] : memref<1x1x128xf32, #tpu.memory_space<vmem>>, vector<1x1x128xf32>
    %382 = vector.shape_cast %381 : vector<1x1x128xf32> to vector<1x128xf32>
    %383 = vector.broadcast %382 : vector<1x128xf32> to vector<16x128xf32>
    %384 = arith.addf %380, %383 : vector<16x128xf32>
    %cst_328 = arith.constant 5.000000e-01 : f32
    %385 = vector.broadcast %cst_328 : f32 to vector<16x128xf32>
    %386 = arith.mulf %385, %384 : vector<16x128xf32>
    %cst_329 = arith.constant 0.707106769 : f32
    %387 = vector.broadcast %cst_329 : f32 to vector<16x128xf32>
    %388 = arith.mulf %384, %387 : vector<16x128xf32>
    %389 = math.erf %388 : vector<16x128xf32>
    %cst_330 = arith.constant 1.000000e+00 : f32
    %390 = vector.broadcast %cst_330 : f32 to vector<16x128xf32>
    %391 = arith.addf %390, %389 : vector<16x128xf32>
    %392 = arith.mulf %386, %391 : vector<16x128xf32>
    %c0_331 = arith.constant 0 : index
    %c0_332 = arith.constant 0 : index
    %c0_333 = arith.constant 0 : index
    %393 = vector.load %arg16[%c0_331, %c0_332, %c0_333] : memref<1x128x32xf32, #tpu.memory_space<vmem>>, vector<1x128x32xf32>
    %394 = vector.shape_cast %393 : vector<1x128x32xf32> to vector<128x32xf32>
    %cst_334 = arith.constant dense<0.000000e+00> : vector<16x32xf32>
    %395 = tpu.matmul %392, %394, %cst_334 {dimension_numbers = #tpu.dot_dimension_numbers<[1], [0], [0], [1], [0, 0, 1, 1], [], []>} : vector<16x128xf32>, vector<128x32xf32>, vector<16x32xf32> -> vector<16x32xf32>
    %c0_335 = arith.constant 0 : index
    %c0_336 = arith.constant 0 : index
    %c0_337 = arith.constant 0 : index
    %396 = vector.load %arg17[%c0_335, %c0_336, %c0_337] : memref<1x1x32xf32, #tpu.memory_space<vmem>>, vector<1x1x32xf32>
    %397 = vector.shape_cast %396 : vector<1x1x32xf32> to vector<1x32xf32>
    %398 = vector.broadcast %397 : vector<1x32xf32> to vector<16x32xf32>
    %399 = arith.addf %395, %398 : vector<16x32xf32>
    %400 = arith.addf %399, %351 : vector<16x32xf32>
    %c0_338 = arith.constant 0 : index
    %c0_339 = arith.constant 0 : index
    %401 = vector.load %arg18[%c0_338, %c0_339] : memref<16x32xf32, #tpu.memory_space<vmem>>, vector<16x32xf32>
    tpu.vector_store %arg18[%c0_338, %c0_339], %400 {strides = array<i32>} : memref<16x32xf32, #tpu.memory_space<vmem>>, vector<16x32xf32>,
    return
  }
  func.func @transform_0(%arg0: i32) -> (i32, i32) {
    %c0_i32 = arith.constant 0 : i32
    %c0_i32_0 = arith.constant 0 : i32
    %c0_i32_1 = arith.constant 0 : i32
    return %c0_i32, %c0_i32_0 : i32, i32
  }
  func.func @transform_1(%arg0: i32) -> (i32, i32, i32) {
    %c0_i32 = arith.constant 0 : i32
    %c0_i32_0 = arith.constant 0 : i32
    %c0_i32_1 = arith.constant 0 : i32
    return %arg0, %c0_i32, %c0_i32_0 : i32, i32, i32
  }
  func.func @transform_2(%arg0: i32) -> (i32, i32, i32) {
    %c0_i32 = arith.constant 0 : i32
    %c0_i32_0 = arith.constant 0 : i32
    %c0_i32_1 = arith.constant 0 : i32
    return %arg0, %c0_i32, %c0_i32_0 : i32, i32, i32
  }
  func.func @transform_3(%arg0: i32) -> (i32, i32, i32, i32) {
    %c0_i32 = arith.constant 0 : i32
    %c0_i32_0 = arith.constant 0 : i32
    %c0_i32_1 = arith.constant 0 : i32
    %c0_i32_2 = arith.constant 0 : i32
    return %arg0, %c0_i32, %c0_i32_0, %c0_i32_1 : i32, i32, i32, i32
  }
  func.func @transform_4(%arg0: i32) -> (i32, i32, i32, i32) {
    %c0_i32 = arith.constant 0 : i32
    %c0_i32_0 = arith.constant 0 : i32
    %c0_i32_1 = arith.constant 0 : i32
    %c0_i32_2 = arith.constant 0 : i32
    return %arg0, %c0_i32, %c0_i32_0, %c0_i32_1 : i32, i32, i32, i32
  }
  func.func @transform_5(%arg0: i32) -> (i32, i32, i32, i32) {
    %c0_i32 = arith.constant 0 : i32
    %c0_i32_0 = arith.constant 0 : i32
    %c0_i32_1 = arith.constant 0 : i32
    %c0_i32_2 = arith.constant 0 : i32
    return %arg0, %c0_i32, %c0_i32_0, %c0_i32_1 : i32, i32, i32, i32
  }
  func.func @transform_6(%arg0: i32) -> (i32, i32, i32, i32) {
    %c0_i32 = arith.constant 0 : i32
    %c0_i32_0 = arith.constant 0 : i32
    %c0_i32_1 = arith.constant 0 : i32
    %c0_i32_2 = arith.constant 0 : i32
    return %arg0, %c0_i32, %c0_i32_0, %c0_i32_1 : i32, i32, i32, i32
  }
  func.func @transform_7(%arg0: i32) -> (i32, i32, i32, i32) {
    %c0_i32 = arith.constant 0 : i32
    %c0_i32_0 = arith.constant 0 : i32
    %c0_i32_1 = arith.constant 0 : i32
    %c0_i32_2 = arith.constant 0 : i32
    return %arg0, %c0_i32, %c0_i32_0, %c0_i32_1 : i32, i32, i32, i32
  }
  func.func @transform_8(%arg0: i32) -> (i32, i32, i32, i32) {
    %c0_i32 = arith.constant 0 : i32
    %c0_i32_0 = arith.constant 0 : i32
    %c0_i32_1 = arith.constant 0 : i32
    %c0_i32_2 = arith.constant 0 : i32
    return %arg0, %c0_i32, %c0_i32_0, %c0_i32_1 : i32, i32, i32, i32
  }
  func.func @transform_9(%arg0: i32) -> (i32, i32, i32, i32) {
    %c0_i32 = arith.constant 0 : i32
    %c0_i32_0 = arith.constant 0 : i32
    %c0_i32_1 = arith.constant 0 : i32
    %c0_i32_2 = arith.constant 0 : i32
    return %arg0, %c0_i32, %c0_i32_0, %c0_i32_1 : i32, i32, i32, i32
  }
  func.func @transform_10(%arg0: i32) -> (i32, i32, i32) {
    %c0_i32 = arith.constant 0 : i32
    %c0_i32_0 = arith.constant 0 : i32
    %c0_i32_1 = arith.constant 0 : i32
    return %arg0, %c0_i32, %c0_i32_0 : i32, i32, i32
  }
  func.func @transform_11(%arg0: i32) -> (i32, i32, i32) {
    %c0_i32 = arith.constant 0 : i32
    %c0_i32_0 = arith.constant 0 : i32
    %c0_i32_1 = arith.constant 0 : i32
    return %arg0, %c0_i32, %c0_i32_0 : i32, i32, i32
  }
  func.func @transform_12(%arg0: i32) -> (i32, i32, i32) {
    %c0_i32 = arith.constant 0 : i32
    %c0_i32_0 = arith.constant 0 : i32
    %c0_i32_1 = arith.constant 0 : i32
    return %arg0, %c0_i32, %c0_i32_0 : i32, i32, i32
  }
  func.func @transform_13(%arg0: i32) -> (i32, i32, i32) {
    %c0_i32 = arith.constant 0 : i32
    %c0_i32_0 = arith.constant 0 : i32
    %c0_i32_1 = arith.constant 0 : i32
    return %arg0, %c0_i32, %c0_i32_0 : i32, i32, i32
  }
  func.func @transform_14(%arg0: i32) -> (i32, i32, i32) {
    %c0_i32 = arith.constant 0 : i32
    %c0_i32_0 = arith.constant 0 : i32
    %c0_i32_1 = arith.constant 0 : i32
    return %arg0, %c0_i32, %c0_i32_0 : i32, i32, i32
  }
  func.func @transform_15(%arg0: i32) -> (i32, i32, i32) {
    %c0_i32 = arith.constant 0 : i32
    %c0_i32_0 = arith.constant 0 : i32
    %c0_i32_1 = arith.constant 0 : i32
    return %arg0, %c0_i32, %c0_i32_0 : i32, i32, i32
  }
  func.func @transform_16(%arg0: i32) -> (i32, i32, i32) {
    %c0_i32 = arith.constant 0 : i32
    %c0_i32_0 = arith.constant 0 : i32
    %c0_i32_1 = arith.constant 0 : i32
    return %arg0, %c0_i32, %c0_i32_0 : i32, i32, i32
  }
  func.func @transform_17(%arg0: i32) -> (i32, i32) {
    %c0_i32 = arith.constant 0 : i32
    %c0_i32_0 = arith.constant 0 : i32
    %c0_i32_1 = arith.constant 0 : i32
    return %c0_i32, %c0_i32_0 : i32, i32
  }
}

</mosaic_0001>

<llo_original>
// kernel: tpu_custom_call.1
$region0: #{tpu_custom_call.1}
  #allocation0 [shape = 'u32[]', space=smem, size = 0x4, offset = 0x4, fixed_abs, tag = 'smem constant byte address 0x4 - core index']
  #allocation1 [shape = 'u32[72,128]{1,0:T(1,128)}', space=vmem, size = 0x9000, scoped, tag = 'internal scratch']
  %s0 = inlined_call_operand.vmem [shape: f32[16,32], index: 0, kind: input, shape index: {}]
  %s1 = inlined_call_operand.vmem [shape: f32[4,1,32], index: 1, kind: input, shape index: {}]
  %s2 = inlined_call_operand.vmem [shape: f32[4,1,32], index: 2, kind: input, shape index: {}]
  %s3 = inlined_call_operand.vmem [shape: f32[4,4,32,8], index: 3, kind: input, shape index: {}]
  %s4 = inlined_call_operand.vmem [shape: f32[4,4,1,8], index: 4, kind: input, shape index: {}]
  %s5 = inlined_call_operand.vmem [shape: f32[4,4,32,8], index: 5, kind: input, shape index: {}]
  %s6 = inlined_call_operand.vmem [shape: f32[4,4,1,8], index: 6, kind: input, shape index: {}]
  %s7 = inlined_call_operand.vmem [shape: f32[4,4,32,8], index: 7, kind: input, shape index: {}]
  %s8 = inlined_call_operand.vmem [shape: f32[4,4,1,8], index: 8, kind: input, shape index: {}]
  %s9 = inlined_call_operand.vmem [shape: f32[4,4,8,32], index: 9, kind: input, shape index: {}]
  %s10 = inlined_call_operand.vmem [shape: f32[4,1,32], index: 10, kind: input, shape index: {}]
  %s11 = inlined_call_operand.vmem [shape: f32[4,1,32], index: 11, kind: input, shape index: {}]
  %s12 = inlined_call_operand.vmem [shape: f32[4,1,32], index: 12, kind: input, shape index: {}]
  %s13 = inlined_call_operand.vmem [shape: f32[4,32,128], index: 13, kind: input, shape index: {}]
  %s14 = inlined_call_operand.vmem [shape: f32[4,1,128], index: 14, kind: input, shape index: {}]
  %s15 = inlined_call_operand.vmem [shape: f32[4,128,32], index: 15, kind: input, shape index: {}]
  %s16 = inlined_call_operand.vmem [shape: f32[4,1,32], index: 16, kind: input, shape index: {}]
  %s17 = inlined_call_operand.hbm [shape: f32[16,32], index: 17, kind: output, shape index: {}]
  %s18 = sld [smem:[#allocation0]]
  $region105: #{tpu_custom_call.1} parent=0
    _
  %s20 = ssub.s32 1, %s18
  %s21 = scalar_select 0, %s20, %s18
  $region1: #{tpu_custom_call.1} parent=0
    #allocation2 [shape = 'u8[8192]{0}', space=vmem, size = 0x2000, scoped, tag = 'output window, operand 0, single buffered']
    #allocation3 [shape = 's32[2]{0}', space=sflag, size = 0x8, scoped, tag = 'scoped memory for tpu_custom_call.1']
    %22 = vsyncpa [#allocation3], 0
    loop: start=0, step=1, limit=6
    $region2: #{tpu_custom_call.1} parent=1 // loop_pre_header
      _
    $region3: #{tpu_custom_call.1} parent=1 // loop_header
      %s24 = sphi 0, %s28
      %p25 = scmp.ge.s32.totalorder %s24, 6
      %s32 = sphi 0, %s32
      %s34 = sphi 0, %s32
      %s35 = sphi 0, %s34
      %s49 = sphi 0, %s35
      %s55 = sphi 0, %s57
      %s58 = sphi 0, %s55
      %s59 = sphi 0, %s58
      %s75 = sphi 0, %s59
      %s81 = sphi 0, %s83
      %s84 = sphi 0, %s81
      %s85 = sphi 0, %s84
      %s101 = sphi 0, %s85
      %s107 = sphi 0, %s109
      %s110 = sphi 0, %s107
      %s111 = sphi 0, %s110
      %s127 = sphi 0, %s111
      %s133 = sphi 0, %s135
      %s136 = sphi 0, %s133
      %s137 = sphi 0, %s136
      %s153 = sphi 0, %s137
      %s159 = sphi 0, %s161
      %s162 = sphi 0, %s159
      %s163 = sphi 0, %s162
      %s179 = sphi 0, %s163
      %s185 = sphi 0, %s187
      %s188 = sphi 0, %s185
      %s189 = sphi 0, %s188
      %s205 = sphi 0, %s189
      %s211 = sphi 0, %s213
      %s214 = sphi 0, %s211
      %s215 = sphi 0, %s214
      %s231 = sphi 0, %s215
      %s237 = sphi 0, %s239
      %s240 = sphi 0, %s237
      %s241 = sphi 0, %s240
      %s257 = sphi 0, %s241
      %s263 = sphi 0, %s265
      %s266 = sphi 0, %s263
      %s267 = sphi 0, %s266
      %s283 = sphi 0, %s267
      %s289 = sphi 0, %s291
      %s292 = sphi 0, %s289
      %s293 = sphi 0, %s292
      %s309 = sphi 0, %s293
      %s315 = sphi 0, %s317
      %s318 = sphi 0, %s315
      %s319 = sphi 0, %s318
      %s335 = sphi 0, %s319
      %s341 = sphi 0, %s343
      %s344 = sphi 0, %s341
      %s345 = sphi 0, %s344
      %s361 = sphi 0, %s345
      %s367 = sphi 0, %s369
      %s370 = sphi 0, %s367
      %s371 = sphi 0, %s370
      %s387 = sphi 0, %s371
      %s393 = sphi 0, %s395
      %s396 = sphi 0, %s393
      %s397 = sphi 0, %s396
      %s413 = sphi 0, %s397
      %s419 = sphi 0, %s421
      %s422 = sphi 0, %s419
      %s423 = sphi 0, %s422
      %s439 = sphi 0, %s423
      %s445 = sphi 0, %s447
      %s448 = sphi 0, %s445
      %s449 = sphi 0, %s448
      %s465 = sphi 0, %s449
      %s469 = sphi 0, %s469
      %s471 = sphi 0, %s469
      %s472 = sphi 0, %s471
      %s486 = sphi 0, %s472
    $region4: #{tpu_custom_call.1} parent=1 // loop_header_branch
      %27 = sbr.rel (%p25) target = $region8
    $region5: #{tpu_custom_call.1} parent=1 // loop_body
      %s29 = ssub.s32 %s24, 1
      %s30 = ssub.s32 %s24, 2
      %s31 = sadd.s32 %s24, 1
      %s33 = sadd.s32 %s32, 1
      %p36 = scmp.eq.s32.totalorder %s24, 3
      %p37 = scmp.ne.s32.totalorder %s32, %s34
      %p38 = scmp.eq.s32.totalorder %s24, 0
      %p39 = por %p37, %p38
      %p40 = scmp.ne.s32.totalorder %s32, %s34
      %p41 = scmp.eq.s32.totalorder %s29, 3
      %p42 = por %p40, %p41
      %p43 = scmp.ne.s32.totalorder %s34, %s35
      %p44 = scmp.eq.s32.totalorder %s29, 0
      %p45 = por %p43, %p44
      %p46 = scmp.ne.s32.totalorder %s34, %s35
      %p47 = scmp.eq.s32.totalorder %s30, 3
      %p48 = por %p46, %p47
      %p50 = scmp.ne.s32.totalorder %s35, %s49
      %p51 = scmp.eq.s32.totalorder %s30, 0
      %p52 = por %p50, %p51
      %s53 = ssub.s32 %s24, %s31
      %p54 = scmp.eq.s32.totalorder %s53, 0
      %s56 = sadd.s32 %s55, 1
      %s57 = scalar_select %p54, %s55, %s56
      %p60 = pneg %p54
      %p61 = scmp.eq.s32.totalorder %s24, 3
      %p62 = por %p60, %p61
      %p63 = scmp.ne.s32.totalorder %s55, %s58
      %p64 = scmp.eq.s32.totalorder %s24, 0
      %p65 = por %p63, %p64
      %p66 = scmp.ne.s32.totalorder %s55, %s58
      %p67 = scmp.eq.s32.totalorder %s29, 3
      %p68 = por %p66, %p67
      %p69 = scmp.ne.s32.totalorder %s58, %s59
      %p70 = scmp.eq.s32.totalorder %s29, 0
      %p71 = por %p69, %p70
      %p72 = scmp.ne.s32.totalorder %s58, %s59
      %p73 = scmp.eq.s32.totalorder %s30, 3
      %p74 = por %p72, %p73
      %p76 = scmp.ne.s32.totalorder %s59, %s75
      %p77 = scmp.eq.s32.totalorder %s30, 0
      %p78 = por %p76, %p77
      %s79 = ssub.s32 %s24, %s31
      %p80 = scmp.eq.s32.totalorder %s79, 0
      %s82 = sadd.s32 %s81, 1
      %s83 = scalar_select %p80, %s81, %s82
      %p86 = pneg %p80
      %p87 = scmp.eq.s32.totalorder %s24, 3
      %p88 = por %p86, %p87
      %p89 = scmp.ne.s32.totalorder %s81, %s84
      %p90 = scmp.eq.s32.totalorder %s24, 0
      %p91 = por %p89, %p90
      %p92 = scmp.ne.s32.totalorder %s81, %s84
      %p93 = scmp.eq.s32.totalorder %s29, 3
      %p94 = por %p92, %p93
      %p95 = scmp.ne.s32.totalorder %s84, %s85
      %p96 = scmp.eq.s32.totalorder %s29, 0
      %p97 = por %p95, %p96
      %p98 = scmp.ne.s32.totalorder %s84, %s85
      %p99 = scmp.eq.s32.totalorder %s30, 3
      %p100 = por %p98, %p99
      %p102 = scmp.ne.s32.totalorder %s85, %s101
      %p103 = scmp.eq.s32.totalorder %s30, 0
      %p104 = por %p102, %p103
      %s105 = ssub.s32 %s24, %s31
      %p106 = scmp.eq.s32.totalorder %s105, 0
      %s108 = sadd.s32 %s107, 1
      %s109 = scalar_select %p106, %s107, %s108
      %p112 = pneg %p106
      %p113 = scmp.eq.s32.totalorder %s24, 3
      %p114 = por %p112, %p113
      %p115 = scmp.ne.s32.totalorder %s107, %s110
      %p116 = scmp.eq.s32.totalorder %s24, 0
      %p117 = por %p115, %p116
      %p118 = scmp.ne.s32.totalorder %s107, %s110
      %p119 = scmp.eq.s32.totalorder %s29, 3
      %p120 = por %p118, %p119
      %p121 = scmp.ne.s32.totalorder %s110, %s111
      %p122 = scmp.eq.s32.totalorder %s29, 0
      %p123 = por %p121, %p122
      %p124 = scmp.ne.s32.totalorder %s110, %s111
      %p125 = scmp.eq.s32.totalorder %s30, 3
      %p126 = por %p124, %p125
      %p128 = scmp.ne.s32.totalorder %s111, %s127
      %p129 = scmp.eq.s32.totalorder %s30, 0
      %p130 = por %p128, %p129
      %s131 = ssub.s32 %s24, %s31
      %p132 = scmp.eq.s32.totalorder %s131, 0
      %s134 = sadd.s32 %s133, 1
      %s135 = scalar_select %p132, %s133, %s134
      %p138 = pneg %p132
      %p139 = scmp.eq.s32.totalorder %s24, 3
      %p140 = por %p138, %p139
      %p141 = scmp.ne.s32.totalorder %s133, %s136
      %p142 = scmp.eq.s32.totalorder %s24, 0
      %p143 = por %p141, %p142
      %p144 = scmp.ne.s32.totalorder %s133, %s136
      %p145 = scmp.eq.s32.totalorder %s29, 3
      %p146 = por %p144, %p145
      %p147 = scmp.ne.s32.totalorder %s136, %s137
      %p148 = scmp.eq.s32.totalorder %s29, 0
      %p149 = por %p147, %p148
      %p150 = scmp.ne.s32.totalorder %s136, %s137
      %p151 = scmp.eq.s32.totalorder %s30, 3
      %p152 = por %p150, %p151
      %p154 = scmp.ne.s32.totalorder %s137, %s153
      %p155 = scmp.eq.s32.totalorder %s30, 0
      %p156 = por %p154, %p155
      %s157 = ssub.s32 %s24, %s31
      %p158 = scmp.eq.s32.totalorder %s157, 0
      %s160 = sadd.s32 %s159, 1
      %s161 = scalar_select %p158, %s159, %s160
      %p164 = pneg %p158
      %p165 = scmp.eq.s32.totalorder %s24, 3
      %p166 = por %p164, %p165
      %p167 = scmp.ne.s32.totalorder %s159, %s162
      %p168 = scmp.eq.s32.totalorder %s24, 0
      %p169 = por %p167, %p168
      %p170 = scmp.ne.s32.totalorder %s159, %s162
      %p171 = scmp.eq.s32.totalorder %s29, 3
      %p172 = por %p170, %p171
      %p173 = scmp.ne.s32.totalorder %s162, %s163
      %p174 = scmp.eq.s32.totalorder %s29, 0
      %p175 = por %p173, %p174
      %p176 = scmp.ne.s32.totalorder %s162, %s163
      %p177 = scmp.eq.s32.totalorder %s30, 3
      %p178 = por %p176, %p177
      %p180 = scmp.ne.s32.totalorder %s163, %s179
      %p181 = scmp.eq.s32.totalorder %s30, 0
      %p182 = por %p180, %p181
      %s183 = ssub.s32 %s24, %s31
      %p184 = scmp.eq.s32.totalorder %s183, 0
      %s186 = sadd.s32 %s185, 1
      %s187 = scalar_select %p184, %s185, %s186
      %p190 = pneg %p184
      %p191 = scmp.eq.s32.totalorder %s24, 3
      %p192 = por %p190, %p191
      %p193 = scmp.ne.s32.totalorder %s185, %s188
      %p194 = scmp.eq.s32.totalorder %s24, 0
      %p195 = por %p193, %p194
      %p196 = scmp.ne.s32.totalorder %s185, %s188
      %p197 = scmp.eq.s32.totalorder %s29, 3
      %p198 = por %p196, %p197
      %p199 = scmp.ne.s32.totalorder %s188, %s189
      %p200 = scmp.eq.s32.totalorder %s29, 0
      %p201 = por %p199, %p200
      %p202 = scmp.ne.s32.totalorder %s188, %s189
      %p203 = scmp.eq.s32.totalorder %s30, 3
      %p204 = por %p202, %p203
      %p206 = scmp.ne.s32.totalorder %s189, %s205
      %p207 = scmp.eq.s32.totalorder %s30, 0
      %p208 = por %p206, %p207
      %s209 = ssub.s32 %s24, %s31
      %p210 = scmp.eq.s32.totalorder %s209, 0
      %s212 = sadd.s32 %s211, 1
      %s213 = scalar_select %p210, %s211, %s212
      %p216 = pneg %p210
      %p217 = scmp.eq.s32.totalorder %s24, 3
      %p218 = por %p216, %p217
      %p219 = scmp.ne.s32.totalorder %s211, %s214
      %p220 = scmp.eq.s32.totalorder %s24, 0
      %p221 = por %p219, %p220
      %p222 = scmp.ne.s32.totalorder %s211, %s214
      %p223 = scmp.eq.s32.totalorder %s29, 3
      %p224 = por %p222, %p223
      %p225 = scmp.ne.s32.totalorder %s214, %s215
      %p226 = scmp.eq.s32.totalorder %s29, 0
      %p227 = por %p225, %p226
      %p228 = scmp.ne.s32.totalorder %s214, %s215
      %p229 = scmp.eq.s32.totalorder %s30, 3
      %p230 = por %p228, %p229
      %p232 = scmp.ne.s32.totalorder %s215, %s231
      %p233 = scmp.eq.s32.totalorder %s30, 0
      %p234 = por %p232, %p233
      %s235 = ssub.s32 %s24, %s31
      %p236 = scmp.eq.s32.totalorder %s235, 0
      %s238 = sadd.s32 %s237, 1
      %s239 = scalar_select %p236, %s237, %s238
      %p242 = pneg %p236
      %p243 = scmp.eq.s32.totalorder %s24, 3
      %p244 = por %p242, %p243
      %p245 = scmp.ne.s32.totalorder %s237, %s240
      %p246 = scmp.eq.s32.totalorder %s24, 0
      %p247 = por %p245, %p246
      %p248 = scmp.ne.s32.totalorder %s237, %s240
      %p249 = scmp.eq.s32.totalorder %s29, 3
      %p250 = por %p248, %p249
      %p251 = scmp.ne.s32.totalorder %s240, %s241
      %p252 = scmp.eq.s32.totalorder %s29, 0
      %p253 = por %p251, %p252
      %p254 = scmp.ne.s32.totalorder %s240, %s241
      %p255 = scmp.eq.s32.totalorder %s30, 3
      %p256 = por %p254, %p255
      %p258 = scmp.ne.s32.totalorder %s241, %s257
      %p259 = scmp.eq.s32.totalorder %s30, 0
      %p260 = por %p258, %p259
      %s261 = ssub.s32 %s24, %s31
      %p262 = scmp.eq.s32.totalorder %s261, 0
      %s264 = sadd.s32 %s263, 1
      %s265 = scalar_select %p262, %s263, %s264
      %p268 = pneg %p262
      %p269 = scmp.eq.s32.totalorder %s24, 3
      %p270 = por %p268, %p269
      %p271 = scmp.ne.s32.totalorder %s263, %s266
      %p272 = scmp.eq.s32.totalorder %s24, 0
      %p273 = por %p271, %p272
      %p274 = scmp.ne.s32.totalorder %s263, %s266
      %p275 = scmp.eq.s32.totalorder %s29, 3
      %p276 = por %p274, %p275
      %p277 = scmp.ne.s32.totalorder %s266, %s267
      %p278 = scmp.eq.s32.totalorder %s29, 0
      %p279 = por %p277, %p278
      %p280 = scmp.ne.s32.totalorder %s266, %s267
      %p281 = scmp.eq.s32.totalorder %s30, 3
      %p282 = por %p280, %p281
      %p284 = scmp.ne.s32.totalorder %s267, %s283
      %p285 = scmp.eq.s32.totalorder %s30, 0
      %p286 = por %p284, %p285
      %s287 = ssub.s32 %s24, %s31
      %p288 = scmp.eq.s32.totalorder %s287, 0
      %s290 = sadd.s32 %s289, 1
      %s291 = scalar_select %p288, %s289, %s290
      %p294 = pneg %p288
      %p295 = scmp.eq.s32.totalorder %s24, 3
      %p296 = por %p294, %p295
      %p297 = scmp.ne.s32.totalorder %s289, %s292
      %p298 = scmp.eq.s32.totalorder %s24, 0
      %p299 = por %p297, %p298
      %p300 = scmp.ne.s32.totalorder %s289, %s292
      %p301 = scmp.eq.s32.totalorder %s29, 3
      %p302 = por %p300, %p301
      %p303 = scmp.ne.s32.totalorder %s292, %s293
      %p304 = scmp.eq.s32.totalorder %s29, 0
      %p305 = por %p303, %p304
      %p306 = scmp.ne.s32.totalorder %s292, %s293
      %p307 = scmp.eq.s32.totalorder %s30, 3
      %p308 = por %p306, %p307
      %p310 = scmp.ne.s32.totalorder %s293, %s309
      %p311 = scmp.eq.s32.totalorder %s30, 0
      %p312 = por %p310, %p311
      %s313 = ssub.s32 %s24, %s31
      %p314 = scmp.eq.s32.totalorder %s313, 0
      %s316 = sadd.s32 %s315, 1
      %s317 = scalar_select %p314, %s315, %s316
      %p320 = pneg %p314
      %p321 = scmp.eq.s32.totalorder %s24, 3
      %p322 = por %p320, %p321
      %p323 = scmp.ne.s32.totalorder %s315, %s318
      %p324 = scmp.eq.s32.totalorder %s24, 0
      %p325 = por %p323, %p324
      %p326 = scmp.ne.s32.totalorder %s315, %s318
      %p327 = scmp.eq.s32.totalorder %s29, 3
      %p328 = por %p326, %p327
      %p329 = scmp.ne.s32.totalorder %s318, %s319
      %p330 = scmp.eq.s32.totalorder %s29, 0
      %p331 = por %p329, %p330
      %p332 = scmp.ne.s32.totalorder %s318, %s319
      %p333 = scmp.eq.s32.totalorder %s30, 3
      %p334 = por %p332, %p333
      %p336 = scmp.ne.s32.totalorder %s319, %s335
      %p337 = scmp.eq.s32.totalorder %s30, 0
      %p338 = por %p336, %p337
      %s339 = ssub.s32 %s24, %s31
      %p340 = scmp.eq.s32.totalorder %s339, 0
      %s342 = sadd.s32 %s341, 1
      %s343 = scalar_select %p340, %s341, %s342
      %p346 = pneg %p340
      %p347 = scmp.eq.s32.totalorder %s24, 3
      %p348 = por %p346, %p347
      %p349 = scmp.ne.s32.totalorder %s341, %s344
      %p350 = scmp.eq.s32.totalorder %s24, 0
      %p351 = por %p349, %p350
      %p352 = scmp.ne.s32.totalorder %s341, %s344
      %p353 = scmp.eq.s32.totalorder %s29, 3
      %p354 = por %p352, %p353
      %p355 = scmp.ne.s32.totalorder %s344, %s345
      %p356 = scmp.eq.s32.totalorder %s29, 0
      %p357 = por %p355, %p356
      %p358 = scmp.ne.s32.totalorder %s344, %s345
      %p359 = scmp.eq.s32.totalorder %s30, 3
      %p360 = por %p358, %p359
      %p362 = scmp.ne.s32.totalorder %s345, %s361
      %p363 = scmp.eq.s32.totalorder %s30, 0
      %p364 = por %p362, %p363
      %s365 = ssub.s32 %s24, %s31
      %p366 = scmp.eq.s32.totalorder %s365, 0
      %s368 = sadd.s32 %s367, 1
      %s369 = scalar_select %p366, %s367, %s368
      %p372 = pneg %p366
      %p373 = scmp.eq.s32.totalorder %s24, 3
      %p374 = por %p372, %p373
      %p375 = scmp.ne.s32.totalorder %s367, %s370
      %p376 = scmp.eq.s32.totalorder %s24, 0
      %p377 = por %p375, %p376
      %p378 = scmp.ne.s32.totalorder %s367, %s370
      %p379 = scmp.eq.s32.totalorder %s29, 3
      %p380 = por %p378, %p379
      %p381 = scmp.ne.s32.totalorder %s370, %s371
      %p382 = scmp.eq.s32.totalorder %s29, 0
      %p383 = por %p381, %p382
      %p384 = scmp.ne.s32.totalorder %s370, %s371
      %p385 = scmp.eq.s32.totalorder %s30, 3
      %p386 = por %p384, %p385
      %p388 = scmp.ne.s32.totalorder %s371, %s387
      %p389 = scmp.eq.s32.totalorder %s30, 0
      %p390 = por %p388, %p389
      %s391 = ssub.s32 %s24, %s31
      %p392 = scmp.eq.s32.totalorder %s391, 0
      %s394 = sadd.s32 %s393, 1
      %s395 = scalar_select %p392, %s393, %s394
      %p398 = pneg %p392
      %p399 = scmp.eq.s32.totalorder %s24, 3
      %p400 = por %p398, %p399
      %p401 = scmp.ne.s32.totalorder %s393, %s396
      %p402 = scmp.eq.s32.totalorder %s24, 0
      %p403 = por %p401, %p402
      %p404 = scmp.ne.s32.totalorder %s393, %s396
      %p405 = scmp.eq.s32.totalorder %s29, 3
      %p406 = por %p404, %p405
      %p407 = scmp.ne.s32.totalorder %s396, %s397
      %p408 = scmp.eq.s32.totalorder %s29, 0
      %p409 = por %p407, %p408
      %p410 = scmp.ne.s32.totalorder %s396, %s397
      %p411 = scmp.eq.s32.totalorder %s30, 3
      %p412 = por %p410, %p411
      %p414 = scmp.ne.s32.totalorder %s397, %s413
      %p415 = scmp.eq.s32.totalorder %s30, 0
      %p416 = por %p414, %p415
      %s417 = ssub.s32 %s24, %s31
      %p418 = scmp.eq.s32.totalorder %s417, 0
      %s420 = sadd.s32 %s419, 1
      %s421 = scalar_select %p418, %s419, %s420
      %p424 = pneg %p418
      %p425 = scmp.eq.s32.totalorder %s24, 3
      %p426 = por %p424, %p425
      %p427 = scmp.ne.s32.totalorder %s419, %s422
      %p428 = scmp.eq.s32.totalorder %s24, 0
      %p429 = por %p427, %p428
      %p430 = scmp.ne.s32.totalorder %s419, %s422
      %p431 = scmp.eq.s32.totalorder %s29, 3
      %p432 = por %p430, %p431
      %p433 = scmp.ne.s32.totalorder %s422, %s423
      %p434 = scmp.eq.s32.totalorder %s29, 0
      %p435 = por %p433, %p434
      %p436 = scmp.ne.s32.totalorder %s422, %s423
      %p437 = scmp.eq.s32.totalorder %s30, 3
      %p438 = por %p436, %p437
      %p440 = scmp.ne.s32.totalorder %s423, %s439
      %p441 = scmp.eq.s32.totalorder %s30, 0
      %p442 = por %p440, %p441
      %s443 = ssub.s32 %s24, %s31
      %p444 = scmp.eq.s32.totalorder %s443, 0
      %s446 = sadd.s32 %s445, 1
      %s447 = scalar_select %p444, %s445, %s446
      %p450 = pneg %p444
      %p451 = scmp.eq.s32.totalorder %s24, 3
      %p452 = por %p450, %p451
      %p453 = scmp.ne.s32.totalorder %s445, %s448
      %p454 = scmp.eq.s32.totalorder %s24, 0
      %p455 = por %p453, %p454
      %p456 = scmp.ne.s32.totalorder %s445, %s448
      %p457 = scmp.eq.s32.totalorder %s29, 3
      %p458 = por %p456, %p457
      %p459 = scmp.ne.s32.totalorder %s448, %s449
      %p460 = scmp.eq.s32.totalorder %s29, 0
      %p461 = por %p459, %p460
      %p462 = scmp.ne.s32.totalorder %s448, %s449
      %p463 = scmp.eq.s32.totalorder %s30, 3
      %p464 = por %p462, %p463
      %p466 = scmp.ne.s32.totalorder %s449, %s465
      %p467 = scmp.eq.s32.totalorder %s30, 0
      %p468 = por %p466, %p467
      %s470 = sadd.s32 %s469, 1
      %p473 = scmp.eq.s32.totalorder %s24, 3
      %p474 = scmp.ne.s32.totalorder %s469, %s471
      %p475 = scmp.eq.s32.totalorder %s24, 0
      %p476 = por %p474, %p475
      %p477 = scmp.ne.s32.totalorder %s469, %s471
      %p478 = scmp.eq.s32.totalorder %s29, 3
      %p479 = por %p477, %p478
      %p480 = scmp.ne.s32.totalorder %s471, %s472
      %p481 = scmp.eq.s32.totalorder %s29, 0
      %p482 = por %p480, %p481
      %p483 = scmp.ne.s32.totalorder %s471, %s472
      %p484 = scmp.eq.s32.totalorder %s30, 3
      %p485 = por %p483, %p484
      %p487 = scmp.ne.s32.totalorder %s472, %s486
      %p488 = scmp.eq.s32.totalorder %s30, 0
      %p489 = por %p487, %p488
      %p490 = scmp.le.s32.totalorder 1, %s24
      %p491 = scmp.lt.s32.totalorder %s24, 5
      %p492 = pnand %p490, %p491
      %p493 = pneg %p492
      // Predicated region
      $region9: #{tpu_custom_call.1} parent=5 // pred_check
        _
      $region10: #{tpu_custom_call.1} parent=5 // pred_check_branch
        %495 = sbr.rel (%p492) target = $region12
      $region11: #{tpu_custom_call.1} parent=5 // pred_region
        %s496 = ssub.s32 %s24, 1
        // Predicated region
        $region13: #{tpu_custom_call.1} parent=11 // pred_check
          %p497 = pneg %p45
        $region14: #{tpu_custom_call.1} parent=11 // pred_check_branch
          %499 = sbr.rel (%p497) target = $region16
        $region15: #{tpu_custom_call.1} parent=11 // pred_region
          _
        $region16: #{tpu_custom_call.1} parent=11 // pred_fallthru
          _
      $region12: #{tpu_custom_call.1} parent=5 // pred_fallthru
        _
      %p500 = scmp.lt.s32.totalorder %s24, 4
      // Predicated region
      $region17: #{tpu_custom_call.1} parent=5 // pred_check
        %p501 = pneg %p500
      $region18: #{tpu_custom_call.1} parent=5 // pred_check_branch
        %503 = sbr.rel (%p501) target = $region20
      $region19: #{tpu_custom_call.1} parent=5 // pred_region
        // Predicated region
        $region21: #{tpu_custom_call.1} parent=19 // pred_check
          %p504 = pneg %p65
        $region22: #{tpu_custom_call.1} parent=19 // pred_check_branch
          %506 = sbr.rel (%p504) target = $region24
        $region23: #{tpu_custom_call.1} parent=19 // pred_region
          %p507 = scmp.lt.s32.totalorder %s24, 3
          %s508 = scalar_select %p507, %s24, 3
          %s509 = scalar_lea.vmem %s1, %s508
        $region24: #{tpu_custom_call.1} parent=19 // pred_fallthru
          _
        // Predicated region
        $region25: #{tpu_custom_call.1} parent=19 // pred_check
          %p510 = pneg %p91
        $region26: #{tpu_custom_call.1} parent=19 // pred_check_branch
          %512 = sbr.rel (%p510) target = $region28
        $region27: #{tpu_custom_call.1} parent=19 // pred_region
          %p513 = scmp.lt.s32.totalorder %s24, 3
          %s514 = scalar_select %p513, %s24, 3
          %s515 = scalar_lea.vmem %s2, %s514
        $region28: #{tpu_custom_call.1} parent=19 // pred_fallthru
          _
        // Predicated region
        $region29: #{tpu_custom_call.1} parent=19 // pred_check
          %p516 = pneg %p117
        $region30: #{tpu_custom_call.1} parent=19 // pred_check_branch
          %518 = sbr.rel (%p516) target = $region32
        $region31: #{tpu_custom_call.1} parent=19 // pred_region
          %p519 = scmp.lt.s32.totalorder %s24, 3
          %s520 = scalar_select %p519, %s24, 3
          %s521 = smul.addr %s520, 16
          %s522 = smul.addr %s521, 8
          %s523 = scalar_lea.vmem %s3, %s522
        $region32: #{tpu_custom_call.1} parent=19 // pred_fallthru
          _
        // Predicated region
        $region33: #{tpu_custom_call.1} parent=19 // pred_check
          %p524 = pneg %p143
        $region34: #{tpu_custom_call.1} parent=19 // pred_check_branch
          %526 = sbr.rel (%p524) target = $region36
        $region35: #{tpu_custom_call.1} parent=19 // pred_region
          %p527 = scmp.lt.s32.totalorder %s24, 3
          %s528 = scalar_select %p527, %s24, 3
          %s529 = smul.addr %s528, 4
          %s530 = scalar_lea.vmem %s4, %s529
        $region36: #{tpu_custom_call.1} parent=19 // pred_fallthru
          _
        // Predicated region
        $region37: #{tpu_custom_call.1} parent=19 // pred_check
          %p531 = pneg %p169
        $region38: #{tpu_custom_call.1} parent=19 // pred_check_branch
          %533 = sbr.rel (%p531) target = $region40
        $region39: #{tpu_custom_call.1} parent=19 // pred_region
          %p534 = scmp.lt.s32.totalorder %s24, 3
          %s535 = scalar_select %p534, %s24, 3
          %s536 = smul.addr %s535, 16
          %s537 = smul.addr %s536, 8
          %s538 = scalar_lea.vmem %s5, %s537
        $region40: #{tpu_custom_call.1} parent=19 // pred_fallthru
          _
        // Predicated region
        $region41: #{tpu_custom_call.1} parent=19 // pred_check
          %p539 = pneg %p195
        $region42: #{tpu_custom_call.1} parent=19 // pred_check_branch
          %541 = sbr.rel (%p539) target = $region44
        $region43: #{tpu_custom_call.1} parent=19 // pred_region
          %p542 = scmp.lt.s32.totalorder %s24, 3
          %s543 = scalar_select %p542, %s24, 3
          %s544 = smul.addr %s543, 4
          %s545 = scalar_lea.vmem %s6, %s544
        $region44: #{tpu_custom_call.1} parent=19 // pred_fallthru
          _
        // Predicated region
        $region45: #{tpu_custom_call.1} parent=19 // pred_check
          %p546 = pneg %p221
        $region46: #{tpu_custom_call.1} parent=19 // pred_check_branch
          %548 = sbr.rel (%p546) target = $region48
        $region47: #{tpu_custom_call.1} parent=19 // pred_region
          %p549 = scmp.lt.s32.totalorder %s24, 3
          %s550 = scalar_select %p549, %s24, 3
          %s551 = smul.addr %s550, 16
          %s552 = smul.addr %s551, 8
          %s553 = scalar_lea.vmem %s7, %s552
        $region48: #{tpu_custom_call.1} parent=19 // pred_fallthru
          _
        // Predicated region
        $region49: #{tpu_custom_call.1} parent=19 // pred_check
          %p554 = pneg %p247
        $region50: #{tpu_custom_call.1} parent=19 // pred_check_branch
          %556 = sbr.rel (%p554) target = $region52
        $region51: #{tpu_custom_call.1} parent=19 // pred_region
          %p557 = scmp.lt.s32.totalorder %s24, 3
          %s558 = scalar_select %p557, %s24, 3
          %s559 = smul.addr %s558, 4
          %s560 = scalar_lea.vmem %s8, %s559
        $region52: #{tpu_custom_call.1} parent=19 // pred_fallthru
          _
        // Predicated region
        $region53: #{tpu_custom_call.1} parent=19 // pred_check
          %p561 = pneg %p273
        $region54: #{tpu_custom_call.1} parent=19 // pred_check_branch
          %563 = sbr.rel (%p561) target = $region56
        $region55: #{tpu_custom_call.1} parent=19 // pred_region
          %p564 = scmp.lt.s32.totalorder %s24, 3
          %s565 = scalar_select %p564, %s24, 3
          %s566 = smul.addr %s565, 4
          %s567 = smul.addr %s566, 8
          %s568 = scalar_lea.vmem %s9, %s567
        $region56: #{tpu_custom_call.1} parent=19 // pred_fallthru
          _
        // Predicated region
        $region57: #{tpu_custom_call.1} parent=19 // pred_check
          %p569 = pneg %p299
        $region58: #{tpu_custom_call.1} parent=19 // pred_check_branch
          %571 = sbr.rel (%p569) target = $region60
        $region59: #{tpu_custom_call.1} parent=19 // pred_region
          %p572 = scmp.lt.s32.totalorder %s24, 3
          %s573 = scalar_select %p572, %s24, 3
          %s574 = scalar_lea.vmem %s10, %s573
        $region60: #{tpu_custom_call.1} parent=19 // pred_fallthru
          _
        // Predicated region
        $region61: #{tpu_custom_call.1} parent=19 // pred_check
          %p575 = pneg %p325
        $region62: #{tpu_custom_call.1} parent=19 // pred_check_branch
          %577 = sbr.rel (%p575) target = $region64
        $region63: #{tpu_custom_call.1} parent=19 // pred_region
          %p578 = scmp.lt.s32.totalorder %s24, 3
          %s579 = scalar_select %p578, %s24, 3
          %s580 = scalar_lea.vmem %s11, %s579
        $region64: #{tpu_custom_call.1} parent=19 // pred_fallthru
          _
        // Predicated region
        $region65: #{tpu_custom_call.1} parent=19 // pred_check
          %p581 = pneg %p351
        $region66: #{tpu_custom_call.1} parent=19 // pred_check_branch
          %583 = sbr.rel (%p581) target = $region68
        $region67: #{tpu_custom_call.1} parent=19 // pred_region
          %p584 = scmp.lt.s32.totalorder %s24, 3
          %s585 = scalar_select %p584, %s24, 3
          %s586 = scalar_lea.vmem %s12, %s585
        $region68: #{tpu_custom_call.1} parent=19 // pred_fallthru
          _
        // Predicated region
        $region69: #{tpu_custom_call.1} parent=19 // pred_check
          %p587 = pneg %p377
        $region70: #{tpu_custom_call.1} parent=19 // pred_check_branch
          %589 = sbr.rel (%p587) target = $region72
        $region71: #{tpu_custom_call.1} parent=19 // pred_region
          %p590 = scmp.lt.s32.totalorder %s24, 3
          %s591 = scalar_select %p590, %s24, 3
          %s592 = smul.addr %s591, 4
          %s593 = smul.addr %s592, 8
          %s594 = scalar_lea.vmem %s13, %s593
        $region72: #{tpu_custom_call.1} parent=19 // pred_fallthru
          _
        // Predicated region
        $region73: #{tpu_custom_call.1} parent=19 // pred_check
          %p595 = pneg %p403
        $region74: #{tpu_custom_call.1} parent=19 // pred_check_branch
          %597 = sbr.rel (%p595) target = $region76
        $region75: #{tpu_custom_call.1} parent=19 // pred_region
          %p598 = scmp.lt.s32.totalorder %s24, 3
          %s599 = scalar_select %p598, %s24, 3
          %s600 = scalar_lea.vmem %s14, %s599
        $region76: #{tpu_custom_call.1} parent=19 // pred_fallthru
          _
        // Predicated region
        $region77: #{tpu_custom_call.1} parent=19 // pred_check
          %p601 = pneg %p429
        $region78: #{tpu_custom_call.1} parent=19 // pred_check_branch
          %603 = sbr.rel (%p601) target = $region80
        $region79: #{tpu_custom_call.1} parent=19 // pred_region
          %p604 = scmp.lt.s32.totalorder %s24, 3
          %s605 = scalar_select %p604, %s24, 3
          %s606 = smul.addr %s605, 16
          %s607 = smul.addr %s606, 8
          %s608 = scalar_lea.vmem %s15, %s607
        $region80: #{tpu_custom_call.1} parent=19 // pred_fallthru
          _
        // Predicated region
        $region81: #{tpu_custom_call.1} parent=19 // pred_check
          %p609 = pneg %p455
        $region82: #{tpu_custom_call.1} parent=19 // pred_check_branch
          %611 = sbr.rel (%p609) target = $region84
        $region83: #{tpu_custom_call.1} parent=19 // pred_region
          %p612 = scmp.lt.s32.totalorder %s24, 3
          %s613 = scalar_select %p612, %s24, 3
          %s614 = scalar_lea.vmem %s16, %s613
        $region84: #{tpu_custom_call.1} parent=19 // pred_fallthru
          _
      $region20: #{tpu_custom_call.1} parent=5 // pred_fallthru
        _
      %p615 = scmp.le.s32.totalorder 1, %s24
      %p616 = scmp.lt.s32.totalorder %s24, 5
      %p617 = pnand %p615, %p616
      %p618 = pneg %p617
      // Predicated region
      $region85: #{tpu_custom_call.1} parent=5 // pred_check
        _
      $region86: #{tpu_custom_call.1} parent=5 // pred_check_branch
        %620 = sbr.rel (%p617) target = $region88
      $region87: #{tpu_custom_call.1} parent=5 // pred_region
        %s621 = ssub.s32 %s24, 1
        %p622 = pneg %p45
        %p623 = pneg %p42
        %p624 = scmp.lt.s32.totalorder %s29, 3
        %s625 = scalar_select %p624, %s29, 3
        %s626 = scalar_lea.vmem %s1, %s625
        %p627 = pneg %p71
        %p628 = pneg %p68
        %p629 = scmp.lt.s32.totalorder %s29, 3
        %s630 = scalar_select %p629, %s29, 3
        %s631 = scalar_lea.vmem %s2, %s630
        %p632 = pneg %p97
        %p633 = pneg %p94
        %p634 = scmp.lt.s32.totalorder %s29, 3
        %s635 = scalar_select %p634, %s29, 3
        %s636 = smul.addr %s635, 16
        %s637 = smul.addr %s636, 8
        %s638 = scalar_lea.vmem %s3, %s637
        %p639 = pneg %p123
        %p640 = pneg %p120
        %p641 = scmp.lt.s32.totalorder %s29, 3
        %s642 = scalar_select %p641, %s29, 3
        %s643 = smul.addr %s642, 4
        %s644 = scalar_lea.vmem %s4, %s643
        %p645 = pneg %p149
        %p646 = pneg %p146
        %p647 = scmp.lt.s32.totalorder %s29, 3
        %s648 = scalar_select %p647, %s29, 3
        %s649 = smul.addr %s648, 16
        %s650 = smul.addr %s649, 8
        %s651 = scalar_lea.vmem %s5, %s650
        %p652 = pneg %p175
        %p653 = pneg %p172
        %p654 = scmp.lt.s32.totalorder %s29, 3
        %s655 = scalar_select %p654, %s29, 3
        %s656 = smul.addr %s655, 4
        %s657 = scalar_lea.vmem %s6, %s656
        %p658 = pneg %p201
        %p659 = pneg %p198
        %p660 = scmp.lt.s32.totalorder %s29, 3
        %s661 = scalar_select %p660, %s29, 3
        %s662 = smul.addr %s661, 16
        %s663 = smul.addr %s662, 8
        %s664 = scalar_lea.vmem %s7, %s663
        %p665 = pneg %p227
        %p666 = pneg %p224
        %p667 = scmp.lt.s32.totalorder %s29, 3
        %s668 = scalar_select %p667, %s29, 3
        %s669 = smul.addr %s668, 4
        %s670 = scalar_lea.vmem %s8, %s669
        %p671 = pneg %p253
        %p672 = pneg %p250
        %p673 = scmp.lt.s32.totalorder %s29, 3
        %s674 = scalar_select %p673, %s29, 3
        %s675 = smul.addr %s674, 4
        %s676 = smul.addr %s675, 8
        %s677 = scalar_lea.vmem %s9, %s676
        %p678 = pneg %p279
        %p679 = pneg %p276
        %p680 = scmp.lt.s32.totalorder %s29, 3
        %s681 = scalar_select %p680, %s29, 3
        %s682 = scalar_lea.vmem %s10, %s681
        %p683 = pneg %p305
        %p684 = pneg %p302
        %p685 = scmp.lt.s32.totalorder %s29, 3
        %s686 = scalar_select %p685, %s29, 3
        %s687 = scalar_lea.vmem %s11, %s686
        %p688 = pneg %p331
        %p689 = pneg %p328
        %p690 = scmp.lt.s32.totalorder %s29, 3
        %s691 = scalar_select %p690, %s29, 3
        %s692 = scalar_lea.vmem %s12, %s691
        %p693 = pneg %p357
        %p694 = pneg %p354
        %p695 = scmp.lt.s32.totalorder %s29, 3
        %s696 = scalar_select %p695, %s29, 3
        %s697 = smul.addr %s696, 4
        %s698 = smul.addr %s697, 8
        %s699 = scalar_lea.vmem %s13, %s698
        %p700 = pneg %p383
        %p701 = pneg %p380
        %p702 = scmp.lt.s32.totalorder %s29, 3
        %s703 = scalar_select %p702, %s29, 3
        %s704 = scalar_lea.vmem %s14, %s703
        %p705 = pneg %p409
        %p706 = pneg %p406
        %p707 = scmp.lt.s32.totalorder %s29, 3
        %s708 = scalar_select %p707, %s29, 3
        %s709 = smul.addr %s708, 16
        %s710 = smul.addr %s709, 8
        %s711 = scalar_lea.vmem %s15, %s710
        %p712 = pneg %p435
        %p713 = pneg %p432
        %p714 = scmp.lt.s32.totalorder %s29, 3
        %s715 = scalar_select %p714, %s29, 3
        %s716 = scalar_lea.vmem %s16, %s715
        %p717 = pneg %p461
        %p718 = pneg %p458
        %p719 = pneg %p482
        %p720 = pneg %p479
        %p721 = scmp.lt.s32.totalorder %s29, 3
        %s722 = scalar_select %p721, %s29, 3
        %s723 = scalar_lea.vmem %s1, %s722
        %p724 = scmp.lt.s32.totalorder %s29, 3
        %s725 = scalar_select %p724, %s29, 3
        %s726 = scalar_lea.vmem %s2, %s725
        %p727 = scmp.lt.s32.totalorder %s29, 3
        %s728 = scalar_select %p727, %s29, 3
        %s729 = smul.addr %s728, 16
        %s730 = smul.addr %s729, 8
        %s731 = scalar_lea.vmem %s3, %s730
        %p732 = scmp.lt.s32.totalorder %s29, 3
        %s733 = scalar_select %p732, %s29, 3
        %s734 = smul.addr %s733, 4
        %s735 = scalar_lea.vmem %s4, %s734
        %p736 = scmp.lt.s32.totalorder %s29, 3
        %s737 = scalar_select %p736, %s29, 3
        %s738 = smul.addr %s737, 16
        %s739 = smul.addr %s738, 8
        %s740 = scalar_lea.vmem %s5, %s739
        %p741 = scmp.lt.s32.totalorder %s29, 3
        %s742 = scalar_select %p741, %s29, 3
        %s743 = smul.addr %s742, 4
        %s744 = scalar_lea.vmem %s6, %s743
        %p745 = scmp.lt.s32.totalorder %s29, 3
        %s746 = scalar_select %p745, %s29, 3
        %s747 = smul.addr %s746, 16
        %s748 = smul.addr %s747, 8
        %s749 = scalar_lea.vmem %s7, %s748
        %p750 = scmp.lt.s32.totalorder %s29, 3
        %s751 = scalar_select %p750, %s29, 3
        %s752 = smul.addr %s751, 4
        %s753 = scalar_lea.vmem %s8, %s752
        %p754 = scmp.lt.s32.totalorder %s29, 3
        %s755 = scalar_select %p754, %s29, 3
        %s756 = smul.addr %s755, 4
        %s757 = smul.addr %s756, 8
        %s758 = scalar_lea.vmem %s9, %s757
        %p759 = scmp.lt.s32.totalorder %s29, 3
        %s760 = scalar_select %p759, %s29, 3
        %s761 = scalar_lea.vmem %s10, %s760
        %p762 = scmp.lt.s32.totalorder %s29, 3
        %s763 = scalar_select %p762, %s29, 3
        %s764 = scalar_lea.vmem %s11, %s763
        %p765 = scmp.lt.s32.totalorder %s29, 3
        %s766 = scalar_select %p765, %s29, 3
        %s767 = scalar_lea.vmem %s12, %s766
        %p768 = scmp.lt.s32.totalorder %s29, 3
        %s769 = scalar_select %p768, %s29, 3
        %s770 = smul.addr %s769, 4
        %s771 = smul.addr %s770, 8
        %s772 = scalar_lea.vmem %s13, %s771
        %p773 = scmp.lt.s32.totalorder %s29, 3
        %s774 = scalar_select %p773, %s29, 3
        %s775 = scalar_lea.vmem %s14, %s774
        %p776 = scmp.lt.s32.totalorder %s29, 3
        %s777 = scalar_select %p776, %s29, 3
        %s778 = smul.addr %s777, 16
        %s779 = smul.addr %s778, 8
        %s780 = scalar_lea.vmem %s15, %s779
        %p781 = scmp.lt.s32.totalorder %s29, 3
        %s782 = scalar_select %p781, %s29, 3
        %s783 = scalar_lea.vmem %s16, %s782
        %p784 = scmp.eq.s32.totalorder %s29, 0
        // Predicated region
        $region89: #{tpu_custom_call.1} parent=87 // pred_check
          %p785 = pneg %p784
        $region90: #{tpu_custom_call.1} parent=87 // pred_check_branch
          %787 = sbr.rel (%p785) target = $region92
        $region91: #{tpu_custom_call.1} parent=87 // pred_region
          %v788 = vld [vmem:[%s0] sm:$0xff]
          %v789 = vld [vmem:[%s0 + $0x8] sm:$0xff]
          %vm790 = vcmask 261120
          %791 = vst.msk [vmem:[#allocation2] sm:$0xff] %vm790, %v788
          %792 = vst.msk [vmem:[#allocation2 + $0x8] sm:$0xff] %vm790, %v789
        $region92: #{tpu_custom_call.1} parent=87 // pred_fallthru
          _
        %v793 = vld [vmem:[#allocation2] sm:$0xff]
        %v794 = vld [vmem:[#allocation2 + $0x8] sm:$0xff]
        %v795 = vld [vmem:[%s723] sm:$0x1]
        %v796 = vld [vmem:[%s726] sm:$0x1]
        %vm797 = vcmask 261120
        %v798 = vsel %vm797, %v793, 0.0
        %799 = vadd.xlane.f32.xlu0 %v798
        %v800 = vpop.xlane.xlu0 %799
        %v801 = vsel %vm797, %v794, 0.0
        %802 = vadd.xlane.f32.xlu0 %v801
        %v803 = vpop.xlane.xlu0 %802
        %v804 = vrcp.pop 32.0
        %v805 = vmul.f32 32.0, %v804
        %v806 = vsub.f32 1.0, %v805
        %v807 = vmul.f32 %v804, %v806
        %v808 = vadd.f32 %v804, %v807
        %vm809 = vweird.f32 %v804
        %v810 = vsel %vm809, %v804, %v808
        %v811 = vmul.f32 %v800, %v810
        %v812 = vmul.f32 %v803, %v810
        %v813 = vsub.f32 %v793, %v811
        %v814 = vsub.f32 %v794, %v812
        %v815 = vmul.f32 %v813, %v813
        %v816 = vmul.f32 %v814, %v814
        %v817 = vsel %vm797, %v815, 0.0
        %818 = vadd.xlane.f32.xlu0 %v817
        %v819 = vpop.xlane.xlu0 %818
        %v820 = vsel %vm797, %v816, 0.0
        %821 = vadd.xlane.f32.xlu0 %v820
        %v822 = vpop.xlane.xlu0 %821
        %v823 = vmul.f32 %v819, %v810
        %v824 = vmul.f32 %v822, %v810
        %v825 = vadd.f32 %v823, 1e-05
        %v826 = vadd.f32 %v824, 1e-05
        %v827 = vrsqrt.pop %v825
        %v828 = vmul.f32 %v827, %v825
        %v829 = vmul.f32 %v828, %v827
        %v830 = vmul.f32 0.5, %v829
        %v831 = vsub.f32 1.5, %v830
        %v832 = vmul.f32 %v827, %v831
        %vm833 = vweird.f32 %v825
        %vm834 = vweird.f32 %v827
        %vm835 = vmor %vm833, %vm834
        %v836 = vsel %vm835, %v827, %v832
        %v837 = vrsqrt.pop %v826
        %v838 = vmul.f32 %v837, %v826
        %v839 = vmul.f32 %v838, %v837
        %v840 = vmul.f32 0.5, %v839
        %v841 = vsub.f32 1.5, %v840
        %v842 = vmul.f32 %v837, %v841
        %vm843 = vweird.f32 %v826
        %vm844 = vweird.f32 %v837
        %vm845 = vmor %vm843, %vm844
        %v846 = vsel %vm845, %v837, %v842
        %v847 = vmul.f32 %v813, %v836
        %v848 = vmul.f32 %v814, %v846
        %v850 = vperm.slane %v795, 0
        %v852 = vmul.f32 %v847, %v850
        %v853 = vmul.f32 %v848, %v850
        %v855 = vperm.slane %v796, 0
        %v857 = vadd.f32 %v852, %v855
        %v858 = vadd.f32 %v853, %v855
        %v859 = vld [vmem:[%s731] sm:$0xff]
        %v860 = vld [vmem:[%s731 + $0x8] sm:$0xff]
        %v861 = vld [vmem:[%s731 + $0x10] sm:$0xff]
        %v862 = vld [vmem:[%s731 + $0x18] sm:$0xff]
        %v863 = vld [vmem:[%s735] sm:$0x1]
        %v865 = vperm.slane %v863, 0
        %v868 = vsel %vm797, %v857, 0
        %870 = vmatpush.msra.mxu0 0.0
        %871 = vmatpush.msra.mxu0 0.0
        %872 = vmatpush.msra.mxu0 0.0
        %873 = vmatpush.msra.mxu0 0.0
        %874 = vmatpush.msra.mxu0 0.0
        %875 = vmatpush.msra.mxu0 0.0
        %876 = vmatpush.msra.mxu0 0.0
        %877 = vmatpush.msra.mxu0 0.0
        %878 = vmatpush.msra.mxu0 0.0
        %879 = vmatpush.msra.mxu0 0.0
        %880 = vmatpush.msra.mxu0 0.0
        %881 = vmatpush.msra.mxu0 0.0
        %882 = vmatpush.msra.mxu0 %v862
        %883 = vmatpush.msra.mxu0 %v861
        %884 = vmatpush.msra.mxu0 %v860
        %885 = vmatpush.msra.mxu0 %v859
        %886 = vmatmul.f32.gmra.mxu0 %v868
        %v887 = vpop.f32.mrf.mxu0
        %v888 = vadd.f32 %v865, %v887
        %889 = vdwg.mxu0
        %v890 = vld [vmem:[%s740] sm:$0xff]
        %v891 = vld [vmem:[%s740 + $0x8] sm:$0xff]
        %v892 = vld [vmem:[%s740 + $0x10] sm:$0xff]
        %v893 = vld [vmem:[%s740 + $0x18] sm:$0xff]
        %v894 = vld [vmem:[%s744] sm:$0x1]
        %v896 = vperm.slane %v894, 0
        %898 = vmatpush.msra.mxu0 0.0
        %899 = vmatpush.msra.mxu0 0.0
        %900 = vmatpush.msra.mxu0 0.0
        %901 = vmatpush.msra.mxu0 0.0
        %902 = vmatpush.msra.mxu0 0.0
        %903 = vmatpush.msra.mxu0 0.0
        %904 = vmatpush.msra.mxu0 0.0
        %905 = vmatpush.msra.mxu0 0.0
        %906 = vmatpush.msra.mxu0 0.0
        %907 = vmatpush.msra.mxu0 0.0
        %908 = vmatpush.msra.mxu0 0.0
        %909 = vmatpush.msra.mxu0 0.0
        %910 = vmatpush.msra.mxu0 %v893
        %911 = vmatpush.msra.mxu0 %v892
        %912 = vmatpush.msra.mxu0 %v891
        %913 = vmatpush.msra.mxu0 %v890
        %914 = vmatmul.f32.gmra.mxu0 %v868
        %v915 = vpop.f32.mrf.mxu0
        %v916 = vadd.f32 %v896, %v915
        %917 = vdwg.mxu0
        %v918 = vld [vmem:[%s749] sm:$0xff]
        %v919 = vld [vmem:[%s749 + $0x8] sm:$0xff]
        %v920 = vld [vmem:[%s749 + $0x10] sm:$0xff]
        %v921 = vld [vmem:[%s749 + $0x18] sm:$0xff]
        %v922 = vld [vmem:[%s753] sm:$0x1]
        %v924 = vperm.slane %v922, 0
        %926 = vmatpush.msra.mxu0 0.0
        %927 = vmatpush.msra.mxu0 0.0
        %928 = vmatpush.msra.mxu0 0.0
        %929 = vmatpush.msra.mxu0 0.0
        %930 = vmatpush.msra.mxu0 0.0
        %931 = vmatpush.msra.mxu0 0.0
        %932 = vmatpush.msra.mxu0 0.0
        %933 = vmatpush.msra.mxu0 0.0
        %934 = vmatpush.msra.mxu0 0.0
        %935 = vmatpush.msra.mxu0 0.0
        %936 = vmatpush.msra.mxu0 0.0
        %937 = vmatpush.msra.mxu0 0.0
        %938 = vmatpush.msra.mxu0 %v921
        %939 = vmatpush.msra.mxu0 %v920
        %940 = vmatpush.msra.mxu0 %v919
        %941 = vmatpush.msra.mxu0 %v918
        %942 = vmatmul.f32.gmra.mxu0 %v868
        %v943 = vpop.f32.mrf.mxu0
        %v944 = vadd.f32 %v924, %v943
        %945 = vdwg.mxu0
        %vm946 = vcmask 64512
        %v948 = vsel %vm946, %v888, 0
        %v951 = vsel %vm946, %v916, 0
        %953 = vmatpush.xpose.msra.mxu0 0.0
        %954 = vmatpush.xpose.msra.mxu0 0.0
        %955 = vmatpush.xpose.msra.mxu0 0.0
        %956 = vmatpush.xpose.msra.mxu0 0.0
        %957 = vmatpush.xpose.msra.mxu0 0.0
        %958 = vmatpush.xpose.msra.mxu0 0.0
        %959 = vmatpush.xpose.msra.mxu0 0.0
        %960 = vmatpush.xpose.msra.mxu0 0.0
        %961 = vmatpush.xpose.msra.mxu0 0.0
        %962 = vmatpush.xpose.msra.mxu0 0.0
        %963 = vmatpush.xpose.msra.mxu0 0.0
        %964 = vmatpush.xpose.msra.mxu0 0.0
        %965 = vmatpush.xpose.msra.mxu0 0.0
        %966 = vmatpush.xpose.msra.mxu0 0.0
        %967 = vmatpush.xpose.msra.mxu0 0.0
        %968 = vmatpush.xpose.msra.mxu0 %v951
        %969 = vmatmul.f32.gmra.mxu0 %v948
        %v970 = vpop.f32.mrf.mxu0
        %v971 = vadd.f32 0.0, %v970
        %972 = vdwg.mxu0
        %v973 = vsel %vm946, %v971, -inf
        %974 = vmax.xlane.f32.xlu0 %v973
        %v975 = vpop.xlane.xlu0 %974
        %v976 = vsub.f32 %v971, %v975
        %v977 = vmul.f32 %v976, 1.442695
        %v978 = vpow.pop %v977
        %v979 = vsel %vm946, %v978, 0.0
        %980 = vadd.xlane.f32.xlu0 %v979
        %v981 = vpop.xlane.xlu0 %980
        %v982 = vrcp.pop %v981
        %v983 = vmul.f32 %v981, %v982
        %v984 = vsub.f32 1.0, %v983
        %v985 = vmul.f32 %v982, %v984
        %v986 = vadd.f32 %v982, %v985
        %vm987 = vweird.f32 %v981
        %vm988 = vweird.f32 %v982
        %vm989 = vmor %vm987, %vm988
        %v990 = vsel %vm989, %v982, %v986
        %v991 = vand.u32 2147483647, %v981
        %vm992 = vcmp.eq.f32.partialorder %v991, 8.507059e+37
        %v993 = vand.u32 %v981, 2147483648
        %v994 = vor.u32 1.1754944e-38, %v993
        %v995 = vsel %vm992, %v994, %v990
        %v996 = vmul.f32 %v995, 0.17677669
        %v997 = vmul.f32 %v978, %v996
        %v999 = vsel %vm946, %v997, 0
        %1001 = vmatpush.msra.mxu0 0.0
        %1002 = vmatpush.msra.mxu0 0.0
        %1003 = vmatpush.msra.mxu0 0.0
        %1004 = vmatpush.msra.mxu0 0.0
        %1005 = vmatpush.msra.mxu0 0.0
        %1006 = vmatpush.msra.mxu0 0.0
        %1007 = vmatpush.msra.mxu0 0.0
        %1008 = vmatpush.msra.mxu0 0.0
        %1009 = vmatpush.msra.mxu0 0.0
        %1010 = vmatpush.msra.mxu0 0.0
        %1011 = vmatpush.msra.mxu0 0.0
        %1012 = vmatpush.msra.mxu0 0.0
        %1013 = vmatpush.msra.mxu0 0.0
        %1014 = vmatpush.msra.mxu0 0.0
        %1015 = vmatpush.msra.mxu0 0.0
        %1016 = vmatpush.msra.mxu0 %v944
        %1017 = vmatmul.f32.gmra.mxu0 %v999
        %v1018 = vpop.f32.mrf.mxu0
        %v1019 = vadd.f32 0.0, %v1018
        %1020 = vdwg.mxu0
        %v1021 = vld [vmem:[%s758] sm:$0xff]
        %s1022 = scalar_lea.vmem %s731, 32
        %v1023 = vld [vmem:[%s1022] sm:$0xff]
        %v1024 = vld [vmem:[%s1022 + $0x8] sm:$0xff]
        %v1025 = vld [vmem:[%s1022 + $0x10] sm:$0xff]
        %v1026 = vld [vmem:[%s1022 + $0x18] sm:$0xff]
        %s1027 = scalar_lea.vmem %s735, 1
        %v1028 = vld [vmem:[%s1027] sm:$0x1]
        %v1030 = vperm.slane %v1028, 0
        %1032 = vmatpush.msra.mxu0 0.0
        %1033 = vmatpush.msra.mxu0 0.0
        %1034 = vmatpush.msra.mxu0 0.0
        %1035 = vmatpush.msra.mxu0 0.0
        %1036 = vmatpush.msra.mxu0 0.0
        %1037 = vmatpush.msra.mxu0 0.0
        %1038 = vmatpush.msra.mxu0 0.0
        %1039 = vmatpush.msra.mxu0 0.0
        %1040 = vmatpush.msra.mxu0 0.0
        %1041 = vmatpush.msra.mxu0 0.0
        %1042 = vmatpush.msra.mxu0 0.0
        %1043 = vmatpush.msra.mxu0 0.0
        %1044 = vmatpush.msra.mxu0 %v1026
        %1045 = vmatpush.msra.mxu0 %v1025
        %1046 = vmatpush.msra.mxu0 %v1024
        %1047 = vmatpush.msra.mxu0 %v1023
        %1048 = vmatmul.f32.gmra.mxu0 %v868
        %v1049 = vpop.f32.mrf.mxu0
        %v1050 = vadd.f32 %v1030, %v1049
        %1051 = vdwg.mxu0
        %s1052 = scalar_lea.vmem %s740, 32
        %v1053 = vld [vmem:[%s1052] sm:$0xff]
        %v1054 = vld [vmem:[%s1052 + $0x8] sm:$0xff]
        %v1055 = vld [vmem:[%s1052 + $0x10] sm:$0xff]
        %v1056 = vld [vmem:[%s1052 + $0x18] sm:$0xff]
        %s1057 = scalar_lea.vmem %s744, 1
        %v1058 = vld [vmem:[%s1057] sm:$0x1]
        %v1060 = vperm.slane %v1058, 0
        %1062 = vmatpush.msra.mxu0 0.0
        %1063 = vmatpush.msra.mxu0 0.0
        %1064 = vmatpush.msra.mxu0 0.0
        %1065 = vmatpush.msra.mxu0 0.0
        %1066 = vmatpush.msra.mxu0 0.0
        %1067 = vmatpush.msra.mxu0 0.0
        %1068 = vmatpush.msra.mxu0 0.0
        %1069 = vmatpush.msra.mxu0 0.0
        %1070 = vmatpush.msra.mxu0 0.0
        %1071 = vmatpush.msra.mxu0 0.0
        %1072 = vmatpush.msra.mxu0 0.0
        %1073 = vmatpush.msra.mxu0 0.0
        %1074 = vmatpush.msra.mxu0 %v1056
        %1075 = vmatpush.msra.mxu0 %v1055
        %1076 = vmatpush.msra.mxu0 %v1054
        %1077 = vmatpush.msra.mxu0 %v1053
        %1078 = vmatmul.f32.gmra.mxu0 %v868
        %v1079 = vpop.f32.mrf.mxu0
        %v1080 = vadd.f32 %v1060, %v1079
        %1081 = vdwg.mxu0
        %s1082 = scalar_lea.vmem %s749, 32
        %v1083 = vld [vmem:[%s1082] sm:$0xff]
        %v1084 = vld [vmem:[%s1082 + $0x8] sm:$0xff]
        %v1085 = vld [vmem:[%s1082 + $0x10] sm:$0xff]
        %v1086 = vld [vmem:[%s1082 + $0x18] sm:$0xff]
        %s1087 = scalar_lea.vmem %s753, 1
        %v1088 = vld [vmem:[%s1087] sm:$0x1]
        %v1090 = vperm.slane %v1088, 0
        %1092 = vmatpush.msra.mxu0 0.0
        %1093 = vmatpush.msra.mxu0 0.0
        %1094 = vmatpush.msra.mxu0 0.0
        %1095 = vmatpush.msra.mxu0 0.0
        %1096 = vmatpush.msra.mxu0 0.0
        %1097 = vmatpush.msra.mxu0 0.0
        %1098 = vmatpush.msra.mxu0 0.0
        %1099 = vmatpush.msra.mxu0 0.0
        %1100 = vmatpush.msra.mxu0 0.0
        %1101 = vmatpush.msra.mxu0 0.0
        %1102 = vmatpush.msra.mxu0 0.0
        %1103 = vmatpush.msra.mxu0 0.0
        %1104 = vmatpush.msra.mxu0 %v1086
        %1105 = vmatpush.msra.mxu0 %v1085
        %1106 = vmatpush.msra.mxu0 %v1084
        %1107 = vmatpush.msra.mxu0 %v1083
        %1108 = vmatmul.f32.gmra.mxu0 %v868
        %v1109 = vpop.f32.mrf.mxu0
        %v1110 = vadd.f32 %v1090, %v1109
        %1111 = vdwg.mxu0
        %v1113 = vsel %vm946, %v1050, 0
        %v1116 = vsel %vm946, %v1080, 0
        %1118 = vmatpush.xpose.msra.mxu0 0.0
        %1119 = vmatpush.xpose.msra.mxu0 0.0
        %1120 = vmatpush.xpose.msra.mxu0 0.0
        %1121 = vmatpush.xpose.msra.mxu0 0.0
        %1122 = vmatpush.xpose.msra.mxu0 0.0
        %1123 = vmatpush.xpose.msra.mxu0 0.0
        %1124 = vmatpush.xpose.msra.mxu0 0.0
        %1125 = vmatpush.xpose.msra.mxu0 0.0
        %1126 = vmatpush.xpose.msra.mxu0 0.0
        %1127 = vmatpush.xpose.msra.mxu0 0.0
        %1128 = vmatpush.xpose.msra.mxu0 0.0
        %1129 = vmatpush.xpose.msra.mxu0 0.0
        %1130 = vmatpush.xpose.msra.mxu0 0.0
        %1131 = vmatpush.xpose.msra.mxu0 0.0
        %1132 = vmatpush.xpose.msra.mxu0 0.0
        %1133 = vmatpush.xpose.msra.mxu0 %v1116
        %1134 = vmatmul.f32.gmra.mxu0 %v1113
        %v1135 = vpop.f32.mrf.mxu0
        %v1136 = vadd.f32 0.0, %v1135
        %1137 = vdwg.mxu0
        %v1138 = vsel %vm946, %v1136, -inf
        %1139 = vmax.xlane.f32.xlu0 %v1138
        %v1140 = vpop.xlane.xlu0 %1139
        %v1141 = vsub.f32 %v1136, %v1140
        %v1142 = vmul.f32 %v1141, 1.442695
        %v1143 = vpow.pop %v1142
        %v1144 = vsel %vm946, %v1143, 0.0
        %1145 = vadd.xlane.f32.xlu0 %v1144
        %v1146 = vpop.xlane.xlu0 %1145
        %v1147 = vrcp.pop %v1146
        %v1148 = vmul.f32 %v1146, %v1147
        %v1149 = vsub.f32 1.0, %v1148
        %v1150 = vmul.f32 %v1147, %v1149
        %v1151 = vadd.f32 %v1147, %v1150
        %vm1152 = vweird.f32 %v1146
        %vm1153 = vweird.f32 %v1147
        %vm1154 = vmor %vm1152, %vm1153
        %v1155 = vsel %vm1154, %v1147, %v1151
        %v1156 = vand.u32 2147483647, %v1146
        %vm1157 = vcmp.eq.f32.partialorder %v1156, 8.507059e+37
        %v1158 = vand.u32 %v1146, 2147483648
        %v1159 = vor.u32 1.1754944e-38, %v1158
        %v1160 = vsel %vm1157, %v1159, %v1155
        %v1161 = vmul.f32 %v1160, 0.17677669
        %v1162 = vmul.f32 %v1143, %v1161
        %v1164 = vsel %vm946, %v1162, 0
        %1166 = vmatpush.msra.mxu0 0.0
        %1167 = vmatpush.msra.mxu0 0.0
        %1168 = vmatpush.msra.mxu0 0.0
        %1169 = vmatpush.msra.mxu0 0.0
        %1170 = vmatpush.msra.mxu0 0.0
        %1171 = vmatpush.msra.mxu0 0.0
        %1172 = vmatpush.msra.mxu0 0.0
        %1173 = vmatpush.msra.mxu0 0.0
        %1174 = vmatpush.msra.mxu0 0.0
        %1175 = vmatpush.msra.mxu0 0.0
        %1176 = vmatpush.msra.mxu0 0.0
        %1177 = vmatpush.msra.mxu0 0.0
        %1178 = vmatpush.msra.mxu0 0.0
        %1179 = vmatpush.msra.mxu0 0.0
        %1180 = vmatpush.msra.mxu0 0.0
        %1181 = vmatpush.msra.mxu0 %v1110
        %1182 = vmatmul.f32.gmra.mxu0 %v1164
        %v1183 = vpop.f32.mrf.mxu0
        %v1184 = vadd.f32 0.0, %v1183
        %1185 = vdwg.mxu0
        %s1186 = scalar_lea.vmem %s758, 8
        %v1187 = vld [vmem:[%s1186] sm:$0xff]
        %v1189 = vsel %vm946, %v1184, 0
        %1191 = vmatpush.msra.mxu0 0.0
        %1192 = vmatpush.msra.mxu0 0.0
        %1193 = vmatpush.msra.mxu0 0.0
        %1194 = vmatpush.msra.mxu0 0.0
        %1195 = vmatpush.msra.mxu0 0.0
        %1196 = vmatpush.msra.mxu0 0.0
        %1197 = vmatpush.msra.mxu0 0.0
        %1198 = vmatpush.msra.mxu0 0.0
        %1199 = vmatpush.msra.mxu0 0.0
        %1200 = vmatpush.msra.mxu0 0.0
        %1201 = vmatpush.msra.mxu0 0.0
        %1202 = vmatpush.msra.mxu0 0.0
        %1203 = vmatpush.msra.mxu0 0.0
        %1204 = vmatpush.msra.mxu0 0.0
        %1205 = vmatpush.msra.mxu0 0.0
        %1206 = vmatpush.msra.mxu0 %v1187
        %1207 = vmatmul.f32.gmra.mxu0 %v1189
        %v1208 = vpop.f32.mrf.mxu0
        %v1209 = vadd.f32 0.0, %v1208
        %1210 = vdwg.mxu0
        %v1212 = vsel %vm946, %v1019, 0
        %1214 = vmatpush.msra.mxu0 0.0
        %1215 = vmatpush.msra.mxu0 0.0
        %1216 = vmatpush.msra.mxu0 0.0
        %1217 = vmatpush.msra.mxu0 0.0
        %1218 = vmatpush.msra.mxu0 0.0
        %1219 = vmatpush.msra.mxu0 0.0
        %1220 = vmatpush.msra.mxu0 0.0
        %1221 = vmatpush.msra.mxu0 0.0
        %1222 = vmatpush.msra.mxu0 0.0
        %1223 = vmatpush.msra.mxu0 0.0
        %1224 = vmatpush.msra.mxu0 0.0
        %1225 = vmatpush.msra.mxu0 0.0
        %1226 = vmatpush.msra.mxu0 0.0
        %1227 = vmatpush.msra.mxu0 0.0
        %1228 = vmatpush.msra.mxu0 0.0
        %1229 = vmatpush.msra.mxu0 %v1021
        %1230 = vmatmul.f32.gmra.mxu0 %v1212
        %v1231 = vpop.f32.mrf.mxu0
        %v1232 = vadd.f32 %v1209, %v1231
        %1233 = vdwg.mxu0
        %s1234 = scalar_lea.vmem %s731, 64
        %v1235 = vld [vmem:[%s1234] sm:$0xff]
        %v1236 = vld [vmem:[%s1234 + $0x8] sm:$0xff]
        %v1237 = vld [vmem:[%s1234 + $0x10] sm:$0xff]
        %v1238 = vld [vmem:[%s1234 + $0x18] sm:$0xff]
        %s1239 = scalar_lea.vmem %s735, 2
        %v1240 = vld [vmem:[%s1239] sm:$0x1]
        %v1242 = vperm.slane %v1240, 0
        %1244 = vmatpush.msra.mxu0 0.0
        %1245 = vmatpush.msra.mxu0 0.0
        %1246 = vmatpush.msra.mxu0 0.0
        %1247 = vmatpush.msra.mxu0 0.0
        %1248 = vmatpush.msra.mxu0 0.0
        %1249 = vmatpush.msra.mxu0 0.0
        %1250 = vmatpush.msra.mxu0 0.0
        %1251 = vmatpush.msra.mxu0 0.0
        %1252 = vmatpush.msra.mxu0 0.0
        %1253 = vmatpush.msra.mxu0 0.0
        %1254 = vmatpush.msra.mxu0 0.0
        %1255 = vmatpush.msra.mxu0 0.0
        %1256 = vmatpush.msra.mxu0 %v1238
        %1257 = vmatpush.msra.mxu0 %v1237
        %1258 = vmatpush.msra.mxu0 %v1236
        %1259 = vmatpush.msra.mxu0 %v1235
        %1260 = vmatmul.f32.gmra.mxu0 %v868
        %v1261 = vpop.f32.mrf.mxu0
        %v1262 = vadd.f32 %v1242, %v1261
        %1263 = vdwg.mxu0
        %s1264 = scalar_lea.vmem %s740, 64
        %v1265 = vld [vmem:[%s1264] sm:$0xff]
        %v1266 = vld [vmem:[%s1264 + $0x8] sm:$0xff]
        %v1267 = vld [vmem:[%s1264 + $0x10] sm:$0xff]
        %v1268 = vld [vmem:[%s1264 + $0x18] sm:$0xff]
        %s1269 = scalar_lea.vmem %s744, 2
        %v1270 = vld [vmem:[%s1269] sm:$0x1]
        %v1272 = vperm.slane %v1270, 0
        %1274 = vmatpush.msra.mxu0 0.0
        %1275 = vmatpush.msra.mxu0 0.0
        %1276 = vmatpush.msra.mxu0 0.0
        %1277 = vmatpush.msra.mxu0 0.0
        %1278 = vmatpush.msra.mxu0 0.0
        %1279 = vmatpush.msra.mxu0 0.0
        %1280 = vmatpush.msra.mxu0 0.0
        %1281 = vmatpush.msra.mxu0 0.0
        %1282 = vmatpush.msra.mxu0 0.0
        %1283 = vmatpush.msra.mxu0 0.0
        %1284 = vmatpush.msra.mxu0 0.0
        %1285 = vmatpush.msra.mxu0 0.0
        %1286 = vmatpush.msra.mxu0 %v1268
        %1287 = vmatpush.msra.mxu0 %v1267
        %1288 = vmatpush.msra.mxu0 %v1266
        %1289 = vmatpush.msra.mxu0 %v1265
        %1290 = vmatmul.f32.gmra.mxu0 %v868
        %v1291 = vpop.f32.mrf.mxu0
        %v1292 = vadd.f32 %v1272, %v1291
        %1293 = vdwg.mxu0
        %s1294 = scalar_lea.vmem %s749, 64
        %v1295 = vld [vmem:[%s1294] sm:$0xff]
        %v1296 = vld [vmem:[%s1294 + $0x8] sm:$0xff]
        %v1297 = vld [vmem:[%s1294 + $0x10] sm:$0xff]
        %v1298 = vld [vmem:[%s1294 + $0x18] sm:$0xff]
        %s1299 = scalar_lea.vmem %s753, 2
        %v1300 = vld [vmem:[%s1299] sm:$0x1]
        %v1302 = vperm.slane %v1300, 0
        %1304 = vmatpush.msra.mxu0 0.0
        %1305 = vmatpush.msra.mxu0 0.0
        %1306 = vmatpush.msra.mxu0 0.0
        %1307 = vmatpush.msra.mxu0 0.0
        %1308 = vmatpush.msra.mxu0 0.0
        %1309 = vmatpush.msra.mxu0 0.0
        %1310 = vmatpush.msra.mxu0 0.0
        %1311 = vmatpush.msra.mxu0 0.0
        %1312 = vmatpush.msra.mxu0 0.0
        %1313 = vmatpush.msra.mxu0 0.0
        %1314 = vmatpush.msra.mxu0 0.0
        %1315 = vmatpush.msra.mxu0 0.0
        %1316 = vmatpush.msra.mxu0 %v1298
        %1317 = vmatpush.msra.mxu0 %v1297
        %1318 = vmatpush.msra.mxu0 %v1296
        %1319 = vmatpush.msra.mxu0 %v1295
        %1320 = vmatmul.f32.gmra.mxu0 %v868
        %v1321 = vpop.f32.mrf.mxu0
        %v1322 = vadd.f32 %v1302, %v1321
        %1323 = vdwg.mxu0
        %v1325 = vsel %vm946, %v1262, 0
        %v1328 = vsel %vm946, %v1292, 0
        %1330 = vmatpush.xpose.msra.mxu0 0.0
        %1331 = vmatpush.xpose.msra.mxu0 0.0
        %1332 = vmatpush.xpose.msra.mxu0 0.0
        %1333 = vmatpush.xpose.msra.mxu0 0.0
        %1334 = vmatpush.xpose.msra.mxu0 0.0
        %1335 = vmatpush.xpose.msra.mxu0 0.0
        %1336 = vmatpush.xpose.msra.mxu0 0.0
        %1337 = vmatpush.xpose.msra.mxu0 0.0
        %1338 = vmatpush.xpose.msra.mxu0 0.0
        %1339 = vmatpush.xpose.msra.mxu0 0.0
        %1340 = vmatpush.xpose.msra.mxu0 0.0
        %1341 = vmatpush.xpose.msra.mxu0 0.0
        %1342 = vmatpush.xpose.msra.mxu0 0.0
        %1343 = vmatpush.xpose.msra.mxu0 0.0
        %1344 = vmatpush.xpose.msra.mxu0 0.0
        %1345 = vmatpush.xpose.msra.mxu0 %v1328
        %1346 = vmatmul.f32.gmra.mxu0 %v1325
        %v1347 = vpop.f32.mrf.mxu0
        %v1348 = vadd.f32 0.0, %v1347
        %1349 = vdwg.mxu0
        %v1350 = vsel %vm946, %v1348, -inf
        %1351 = vmax.xlane.f32.xlu0 %v1350
        %v1352 = vpop.xlane.xlu0 %1351
        %v1353 = vsub.f32 %v1348, %v1352
        %v1354 = vmul.f32 %v1353, 1.442695
        %v1355 = vpow.pop %v1354
        %v1356 = vsel %vm946, %v1355, 0.0
        %1357 = vadd.xlane.f32.xlu0 %v1356
        %v1358 = vpop.xlane.xlu0 %1357
        %v1359 = vrcp.pop %v1358
        %v1360 = vmul.f32 %v1358, %v1359
        %v1361 = vsub.f32 1.0, %v1360
        %v1362 = vmul.f32 %v1359, %v1361
        %v1363 = vadd.f32 %v1359, %v1362
        %vm1364 = vweird.f32 %v1358
        %vm1365 = vweird.f32 %v1359
        %vm1366 = vmor %vm1364, %vm1365
        %v1367 = vsel %vm1366, %v1359, %v1363
        %v1368 = vand.u32 2147483647, %v1358
        %vm1369 = vcmp.eq.f32.partialorder %v1368, 8.507059e+37
        %v1370 = vand.u32 %v1358, 2147483648
        %v1371 = vor.u32 1.1754944e-38, %v1370
        %v1372 = vsel %vm1369, %v1371, %v1367
        %v1373 = vmul.f32 %v1372, 0.17677669
        %v1374 = vmul.f32 %v1355, %v1373
        %v1376 = vsel %vm946, %v1374, 0
        %1378 = vmatpush.msra.mxu0 0.0
        %1379 = vmatpush.msra.mxu0 0.0
        %1380 = vmatpush.msra.mxu0 0.0
        %1381 = vmatpush.msra.mxu0 0.0
        %1382 = vmatpush.msra.mxu0 0.0
        %1383 = vmatpush.msra.mxu0 0.0
        %1384 = vmatpush.msra.mxu0 0.0
        %1385 = vmatpush.msra.mxu0 0.0
        %1386 = vmatpush.msra.mxu0 0.0
        %1387 = vmatpush.msra.mxu0 0.0
        %1388 = vmatpush.msra.mxu0 0.0
        %1389 = vmatpush.msra.mxu0 0.0
        %1390 = vmatpush.msra.mxu0 0.0
        %1391 = vmatpush.msra.mxu0 0.0
        %1392 = vmatpush.msra.mxu0 0.0
        %1393 = vmatpush.msra.mxu0 %v1322
        %1394 = vmatmul.f32.gmra.mxu0 %v1376
        %v1395 = vpop.f32.mrf.mxu0
        %v1396 = vadd.f32 0.0, %v1395
        %1397 = vdwg.mxu0
        %s1398 = scalar_lea.vmem %s758, 16
        %v1399 = vld [vmem:[%s1398] sm:$0xff]
        %v1401 = vsel %vm946, %v1396, 0
        %1403 = vmatpush.msra.mxu0 0.0
        %1404 = vmatpush.msra.mxu0 0.0
        %1405 = vmatpush.msra.mxu0 0.0
        %1406 = vmatpush.msra.mxu0 0.0
        %1407 = vmatpush.msra.mxu0 0.0
        %1408 = vmatpush.msra.mxu0 0.0
        %1409 = vmatpush.msra.mxu0 0.0
        %1410 = vmatpush.msra.mxu0 0.0
        %1411 = vmatpush.msra.mxu0 0.0
        %1412 = vmatpush.msra.mxu0 0.0
        %1413 = vmatpush.msra.mxu0 0.0
        %1414 = vmatpush.msra.mxu0 0.0
        %1415 = vmatpush.msra.mxu0 0.0
        %1416 = vmatpush.msra.mxu0 0.0
        %1417 = vmatpush.msra.mxu0 0.0
        %1418 = vmatpush.msra.mxu0 %v1399
        %1419 = vmatmul.f32.gmra.mxu0 %v1401
        %v1420 = vpop.f32.mrf.mxu0
        %v1421 = vadd.f32 0.0, %v1420
        %1422 = vdwg.mxu0
        %v1423 = vadd.f32 %v1232, %v1421
        %s1424 = scalar_lea.vmem %s731, 96
        %v1425 = vld [vmem:[%s1424] sm:$0xff]
        %v1426 = vld [vmem:[%s1424 + $0x8] sm:$0xff]
        %v1427 = vld [vmem:[%s1424 + $0x10] sm:$0xff]
        %v1428 = vld [vmem:[%s1424 + $0x18] sm:$0xff]
        %s1429 = scalar_lea.vmem %s735, 3
        %v1430 = vld [vmem:[%s1429] sm:$0x1]
        %v1432 = vperm.slane %v1430, 0
        %1434 = vmatpush.msra.mxu0 0.0
        %1435 = vmatpush.msra.mxu0 0.0
        %1436 = vmatpush.msra.mxu0 0.0
        %1437 = vmatpush.msra.mxu0 0.0
        %1438 = vmatpush.msra.mxu0 0.0
        %1439 = vmatpush.msra.mxu0 0.0
        %1440 = vmatpush.msra.mxu0 0.0
        %1441 = vmatpush.msra.mxu0 0.0
        %1442 = vmatpush.msra.mxu0 0.0
        %1443 = vmatpush.msra.mxu0 0.0
        %1444 = vmatpush.msra.mxu0 0.0
        %1445 = vmatpush.msra.mxu0 0.0
        %1446 = vmatpush.msra.mxu0 %v1428
        %1447 = vmatpush.msra.mxu0 %v1427
        %1448 = vmatpush.msra.mxu0 %v1426
        %1449 = vmatpush.msra.mxu0 %v1425
        %1450 = vmatmul.f32.gmra.mxu0 %v868
        %v1451 = vpop.f32.mrf.mxu0
        %v1452 = vadd.f32 %v1432, %v1451
        %1453 = vdwg.mxu0
        %s1454 = scalar_lea.vmem %s740, 96
        %v1455 = vld [vmem:[%s1454] sm:$0xff]
        %v1456 = vld [vmem:[%s1454 + $0x8] sm:$0xff]
        %v1457 = vld [vmem:[%s1454 + $0x10] sm:$0xff]
        %v1458 = vld [vmem:[%s1454 + $0x18] sm:$0xff]
        %s1459 = scalar_lea.vmem %s744, 3
        %v1460 = vld [vmem:[%s1459] sm:$0x1]
        %v1462 = vperm.slane %v1460, 0
        %1464 = vmatpush.msra.mxu0 0.0
        %1465 = vmatpush.msra.mxu0 0.0
        %1466 = vmatpush.msra.mxu0 0.0
        %1467 = vmatpush.msra.mxu0 0.0
        %1468 = vmatpush.msra.mxu0 0.0
        %1469 = vmatpush.msra.mxu0 0.0
        %1470 = vmatpush.msra.mxu0 0.0
        %1471 = vmatpush.msra.mxu0 0.0
        %1472 = vmatpush.msra.mxu0 0.0
        %1473 = vmatpush.msra.mxu0 0.0
        %1474 = vmatpush.msra.mxu0 0.0
        %1475 = vmatpush.msra.mxu0 0.0
        %1476 = vmatpush.msra.mxu0 %v1458
        %1477 = vmatpush.msra.mxu0 %v1457
        %1478 = vmatpush.msra.mxu0 %v1456
        %1479 = vmatpush.msra.mxu0 %v1455
        %1480 = vmatmul.f32.gmra.mxu0 %v868
        %v1481 = vpop.f32.mrf.mxu0
        %v1482 = vadd.f32 %v1462, %v1481
        %1483 = vdwg.mxu0
        %s1484 = scalar_lea.vmem %s749, 96
        %v1485 = vld [vmem:[%s1484] sm:$0xff]
        %v1486 = vld [vmem:[%s1484 + $0x8] sm:$0xff]
        %v1487 = vld [vmem:[%s1484 + $0x10] sm:$0xff]
        %v1488 = vld [vmem:[%s1484 + $0x18] sm:$0xff]
        %s1489 = scalar_lea.vmem %s753, 3
        %v1490 = vld [vmem:[%s1489] sm:$0x1]
        %v1492 = vperm.slane %v1490, 0
        %1494 = vmatpush.msra.mxu0 0.0
        %1495 = vmatpush.msra.mxu0 0.0
        %1496 = vmatpush.msra.mxu0 0.0
        %1497 = vmatpush.msra.mxu0 0.0
        %1498 = vmatpush.msra.mxu0 0.0
        %1499 = vmatpush.msra.mxu0 0.0
        %1500 = vmatpush.msra.mxu0 0.0
        %1501 = vmatpush.msra.mxu0 0.0
        %1502 = vmatpush.msra.mxu0 0.0
        %1503 = vmatpush.msra.mxu0 0.0
        %1504 = vmatpush.msra.mxu0 0.0
        %1505 = vmatpush.msra.mxu0 0.0
        %1506 = vmatpush.msra.mxu0 %v1488
        %1507 = vmatpush.msra.mxu0 %v1487
        %1508 = vmatpush.msra.mxu0 %v1486
        %1509 = vmatpush.msra.mxu0 %v1485
        %1510 = vmatmul.f32.gmra.mxu0 %v868
        %v1511 = vpop.f32.mrf.mxu0
        %v1512 = vadd.f32 %v1492, %v1511
        %1513 = vdwg.mxu0
        %v1515 = vsel %vm946, %v1452, 0
        %v1518 = vsel %vm946, %v1482, 0
        %1520 = vmatpush.xpose.msra.mxu0 0.0
        %1521 = vmatpush.xpose.msra.mxu0 0.0
        %1522 = vmatpush.xpose.msra.mxu0 0.0
        %1523 = vmatpush.xpose.msra.mxu0 0.0
        %1524 = vmatpush.xpose.msra.mxu0 0.0
        %1525 = vmatpush.xpose.msra.mxu0 0.0
        %1526 = vmatpush.xpose.msra.mxu0 0.0
        %1527 = vmatpush.xpose.msra.mxu0 0.0
        %1528 = vmatpush.xpose.msra.mxu0 0.0
        %1529 = vmatpush.xpose.msra.mxu0 0.0
        %1530 = vmatpush.xpose.msra.mxu0 0.0
        %1531 = vmatpush.xpose.msra.mxu0 0.0
        %1532 = vmatpush.xpose.msra.mxu0 0.0
        %1533 = vmatpush.xpose.msra.mxu0 0.0
        %1534 = vmatpush.xpose.msra.mxu0 0.0
        %1535 = vmatpush.xpose.msra.mxu0 %v1518
        %1536 = vmatmul.f32.gmra.mxu0 %v1515
        %v1537 = vpop.f32.mrf.mxu0
        %v1538 = vadd.f32 0.0, %v1537
        %1539 = vdwg.mxu0
        %v1540 = vsel %vm946, %v1538, -inf
        %1541 = vmax.xlane.f32.xlu0 %v1540
        %v1542 = vpop.xlane.xlu0 %1541
        %v1543 = vsub.f32 %v1538, %v1542
        %v1544 = vmul.f32 %v1543, 1.442695
        %v1545 = vpow.pop %v1544
        %v1546 = vsel %vm946, %v1545, 0.0
        %1547 = vadd.xlane.f32.xlu0 %v1546
        %v1548 = vpop.xlane.xlu0 %1547
        %v1549 = vrcp.pop %v1548
        %v1550 = vmul.f32 %v1548, %v1549
        %v1551 = vsub.f32 1.0, %v1550
        %v1552 = vmul.f32 %v1549, %v1551
        %v1553 = vadd.f32 %v1549, %v1552
        %vm1554 = vweird.f32 %v1548
        %vm1555 = vweird.f32 %v1549
        %vm1556 = vmor %vm1554, %vm1555
        %v1557 = vsel %vm1556, %v1549, %v1553
        %v1558 = vand.u32 2147483647, %v1548
        %vm1559 = vcmp.eq.f32.partialorder %v1558, 8.507059e+37
        %v1560 = vand.u32 %v1548, 2147483648
        %v1561 = vor.u32 1.1754944e-38, %v1560
        %v1562 = vsel %vm1559, %v1561, %v1557
        %v1563 = vmul.f32 %v1562, 0.17677669
        %v1564 = vmul.f32 %v1545, %v1563
        %v1566 = vsel %vm946, %v1564, 0
        %1568 = vmatpush.msra.mxu0 0.0
        %1569 = vmatpush.msra.mxu0 0.0
        %1570 = vmatpush.msra.mxu0 0.0
        %1571 = vmatpush.msra.mxu0 0.0
        %1572 = vmatpush.msra.mxu0 0.0
        %1573 = vmatpush.msra.mxu0 0.0
        %1574 = vmatpush.msra.mxu0 0.0
        %1575 = vmatpush.msra.mxu0 0.0
        %1576 = vmatpush.msra.mxu0 0.0
        %1577 = vmatpush.msra.mxu0 0.0
        %1578 = vmatpush.msra.mxu0 0.0
        %1579 = vmatpush.msra.mxu0 0.0
        %1580 = vmatpush.msra.mxu0 0.0
        %1581 = vmatpush.msra.mxu0 0.0
        %1582 = vmatpush.msra.mxu0 0.0
        %1583 = vmatpush.msra.mxu0 %v1512
        %1584 = vmatmul.f32.gmra.mxu0 %v1566
        %v1585 = vpop.f32.mrf.mxu0
        %v1586 = vadd.f32 0.0, %v1585
        %1587 = vdwg.mxu0
        %s1588 = scalar_lea.vmem %s758, 24
        %v1589 = vld [vmem:[%s1588] sm:$0xff]
        %v1591 = vsel %vm946, %v1586, 0
        %1593 = vmatpush.msra.mxu0 0.0
        %1594 = vmatpush.msra.mxu0 0.0
        %1595 = vmatpush.msra.mxu0 0.0
        %1596 = vmatpush.msra.mxu0 0.0
        %1597 = vmatpush.msra.mxu0 0.0
        %1598 = vmatpush.msra.mxu0 0.0
        %1599 = vmatpush.msra.mxu0 0.0
        %1600 = vmatpush.msra.mxu0 0.0
        %1601 = vmatpush.msra.mxu0 0.0
        %1602 = vmatpush.msra.mxu0 0.0
        %1603 = vmatpush.msra.mxu0 0.0
        %1604 = vmatpush.msra.mxu0 0.0
        %1605 = vmatpush.msra.mxu0 0.0
        %1606 = vmatpush.msra.mxu0 0.0
        %1607 = vmatpush.msra.mxu0 0.0
        %1608 = vmatpush.msra.mxu0 %v1589
        %1609 = vmatmul.f32.gmra.mxu0 %v1591
        %v1610 = vpop.f32.mrf.mxu0
        %v1611 = vadd.f32 0.0, %v1610
        %1612 = vdwg.mxu0
        %v1613 = vadd.f32 %v1423, %v1611
        %v1615 = vsel %vm797, %v858, 0
        %1617 = vmatpush.msra.mxu0 0.0
        %1618 = vmatpush.msra.mxu0 0.0
        %1619 = vmatpush.msra.mxu0 0.0
        %1620 = vmatpush.msra.mxu0 0.0
        %1621 = vmatpush.msra.mxu0 0.0
        %1622 = vmatpush.msra.mxu0 0.0
        %1623 = vmatpush.msra.mxu0 0.0
        %1624 = vmatpush.msra.mxu0 0.0
        %1625 = vmatpush.msra.mxu0 0.0
        %1626 = vmatpush.msra.mxu0 0.0
        %1627 = vmatpush.msra.mxu0 0.0
        %1628 = vmatpush.msra.mxu0 0.0
        %1629 = vmatpush.msra.mxu0 %v862
        %1630 = vmatpush.msra.mxu0 %v861
        %1631 = vmatpush.msra.mxu0 %v860
        %1632 = vmatpush.msra.mxu0 %v859
        %1633 = vmatmul.f32.gmra.mxu0 %v1615
        %v1634 = vpop.f32.mrf.mxu0
        %v1635 = vadd.f32 %v865, %v1634
        %1636 = vdwg.mxu0
        %1637 = vmatpush.msra.mxu0 0.0
        %1638 = vmatpush.msra.mxu0 0.0
        %1639 = vmatpush.msra.mxu0 0.0
        %1640 = vmatpush.msra.mxu0 0.0
        %1641 = vmatpush.msra.mxu0 0.0
        %1642 = vmatpush.msra.mxu0 0.0
        %1643 = vmatpush.msra.mxu0 0.0
        %1644 = vmatpush.msra.mxu0 0.0
        %1645 = vmatpush.msra.mxu0 0.0
        %1646 = vmatpush.msra.mxu0 0.0
        %1647 = vmatpush.msra.mxu0 0.0
        %1648 = vmatpush.msra.mxu0 0.0
        %1649 = vmatpush.msra.mxu0 %v893
        %1650 = vmatpush.msra.mxu0 %v892
        %1651 = vmatpush.msra.mxu0 %v891
        %1652 = vmatpush.msra.mxu0 %v890
        %1653 = vmatmul.f32.gmra.mxu0 %v1615
        %v1654 = vpop.f32.mrf.mxu0
        %v1655 = vadd.f32 %v896, %v1654
        %1656 = vdwg.mxu0
        %1657 = vmatpush.msra.mxu0 0.0
        %1658 = vmatpush.msra.mxu0 0.0
        %1659 = vmatpush.msra.mxu0 0.0
        %1660 = vmatpush.msra.mxu0 0.0
        %1661 = vmatpush.msra.mxu0 0.0
        %1662 = vmatpush.msra.mxu0 0.0
        %1663 = vmatpush.msra.mxu0 0.0
        %1664 = vmatpush.msra.mxu0 0.0
        %1665 = vmatpush.msra.mxu0 0.0
        %1666 = vmatpush.msra.mxu0 0.0
        %1667 = vmatpush.msra.mxu0 0.0
        %1668 = vmatpush.msra.mxu0 0.0
        %1669 = vmatpush.msra.mxu0 %v921
        %1670 = vmatpush.msra.mxu0 %v920
        %1671 = vmatpush.msra.mxu0 %v919
        %1672 = vmatpush.msra.mxu0 %v918
        %1673 = vmatmul.f32.gmra.mxu0 %v1615
        %v1674 = vpop.f32.mrf.mxu0
        %v1675 = vadd.f32 %v924, %v1674
        %1676 = vdwg.mxu0
        %v1678 = vsel %vm946, %v1635, 0
        %v1681 = vsel %vm946, %v1655, 0
        %1683 = vmatpush.xpose.msra.mxu0 0.0
        %1684 = vmatpush.xpose.msra.mxu0 0.0
        %1685 = vmatpush.xpose.msra.mxu0 0.0
        %1686 = vmatpush.xpose.msra.mxu0 0.0
        %1687 = vmatpush.xpose.msra.mxu0 0.0
        %1688 = vmatpush.xpose.msra.mxu0 0.0
        %1689 = vmatpush.xpose.msra.mxu0 0.0
        %1690 = vmatpush.xpose.msra.mxu0 0.0
        %1691 = vmatpush.xpose.msra.mxu0 0.0
        %1692 = vmatpush.xpose.msra.mxu0 0.0
        %1693 = vmatpush.xpose.msra.mxu0 0.0
        %1694 = vmatpush.xpose.msra.mxu0 0.0
        %1695 = vmatpush.xpose.msra.mxu0 0.0
        %1696 = vmatpush.xpose.msra.mxu0 0.0
        %1697 = vmatpush.xpose.msra.mxu0 0.0
        %1698 = vmatpush.xpose.msra.mxu0 %v1681
        %1699 = vmatmul.f32.gmra.mxu0 %v1678
        %v1700 = vpop.f32.mrf.mxu0
        %v1701 = vadd.f32 0.0, %v1700
        %1702 = vdwg.mxu0
        %v1703 = vsel %vm946, %v1701, -inf
        %1704 = vmax.xlane.f32.xlu0 %v1703
        %v1705 = vpop.xlane.xlu0 %1704
        %v1706 = vsub.f32 %v1701, %v1705
        %v1707 = vmul.f32 %v1706, 1.442695
        %v1708 = vpow.pop %v1707
        %v1709 = vsel %vm946, %v1708, 0.0
        %1710 = vadd.xlane.f32.xlu0 %v1709
        %v1711 = vpop.xlane.xlu0 %1710
        %v1712 = vrcp.pop %v1711
        %v1713 = vmul.f32 %v1711, %v1712
        %v1714 = vsub.f32 1.0, %v1713
        %v1715 = vmul.f32 %v1712, %v1714
        %v1716 = vadd.f32 %v1712, %v1715
        %vm1717 = vweird.f32 %v1711
        %vm1718 = vweird.f32 %v1712
        %vm1719 = vmor %vm1717, %vm1718
        %v1720 = vsel %vm1719, %v1712, %v1716
        %v1721 = vand.u32 2147483647, %v1711
        %vm1722 = vcmp.eq.f32.partialorder %v1721, 8.507059e+37
        %v1723 = vand.u32 %v1711, 2147483648
        %v1724 = vor.u32 1.1754944e-38, %v1723
        %v1725 = vsel %vm1722, %v1724, %v1720
        %v1726 = vmul.f32 %v1725, 0.17677669
        %v1727 = vmul.f32 %v1708, %v1726
        %v1729 = vsel %vm946, %v1727, 0
        %1731 = vmatpush.msra.mxu0 0.0
        %1732 = vmatpush.msra.mxu0 0.0
        %1733 = vmatpush.msra.mxu0 0.0
        %1734 = vmatpush.msra.mxu0 0.0
        %1735 = vmatpush.msra.mxu0 0.0
        %1736 = vmatpush.msra.mxu0 0.0
        %1737 = vmatpush.msra.mxu0 0.0
        %1738 = vmatpush.msra.mxu0 0.0
        %1739 = vmatpush.msra.mxu0 0.0
        %1740 = vmatpush.msra.mxu0 0.0
        %1741 = vmatpush.msra.mxu0 0.0
        %1742 = vmatpush.msra.mxu0 0.0
        %1743 = vmatpush.msra.mxu0 0.0
        %1744 = vmatpush.msra.mxu0 0.0
        %1745 = vmatpush.msra.mxu0 0.0
        %1746 = vmatpush.msra.mxu0 %v1675
        %1747 = vmatmul.f32.gmra.mxu0 %v1729
        %v1748 = vpop.f32.mrf.mxu0
        %v1749 = vadd.f32 0.0, %v1748
        %1750 = vdwg.mxu0
        %1751 = vmatpush.msra.mxu0 0.0
        %1752 = vmatpush.msra.mxu0 0.0
        %1753 = vmatpush.msra.mxu0 0.0
        %1754 = vmatpush.msra.mxu0 0.0
        %1755 = vmatpush.msra.mxu0 0.0
        %1756 = vmatpush.msra.mxu0 0.0
        %1757 = vmatpush.msra.mxu0 0.0
        %1758 = vmatpush.msra.mxu0 0.0
        %1759 = vmatpush.msra.mxu0 0.0
        %1760 = vmatpush.msra.mxu0 0.0
        %1761 = vmatpush.msra.mxu0 0.0
        %1762 = vmatpush.msra.mxu0 0.0
        %1763 = vmatpush.msra.mxu0 %v1026
        %1764 = vmatpush.msra.mxu0 %v1025
        %1765 = vmatpush.msra.mxu0 %v1024
        %1766 = vmatpush.msra.mxu0 %v1023
        %1767 = vmatmul.f32.gmra.mxu0 %v1615
        %v1768 = vpop.f32.mrf.mxu0
        %v1769 = vadd.f32 %v1030, %v1768
        %1770 = vdwg.mxu0
        %1771 = vmatpush.msra.mxu0 0.0
        %1772 = vmatpush.msra.mxu0 0.0
        %1773 = vmatpush.msra.mxu0 0.0
        %1774 = vmatpush.msra.mxu0 0.0
        %1775 = vmatpush.msra.mxu0 0.0
        %1776 = vmatpush.msra.mxu0 0.0
        %1777 = vmatpush.msra.mxu0 0.0
        %1778 = vmatpush.msra.mxu0 0.0
        %1779 = vmatpush.msra.mxu0 0.0
        %1780 = vmatpush.msra.mxu0 0.0
        %1781 = vmatpush.msra.mxu0 0.0
        %1782 = vmatpush.msra.mxu0 0.0
        %1783 = vmatpush.msra.mxu0 %v1056
        %1784 = vmatpush.msra.mxu0 %v1055
        %1785 = vmatpush.msra.mxu0 %v1054
        %1786 = vmatpush.msra.mxu0 %v1053
        %1787 = vmatmul.f32.gmra.mxu0 %v1615
        %v1788 = vpop.f32.mrf.mxu0
        %v1789 = vadd.f32 %v1060, %v1788
        %1790 = vdwg.mxu0
        %1791 = vmatpush.msra.mxu0 0.0
        %1792 = vmatpush.msra.mxu0 0.0
        %1793 = vmatpush.msra.mxu0 0.0
        %1794 = vmatpush.msra.mxu0 0.0
        %1795 = vmatpush.msra.mxu0 0.0
        %1796 = vmatpush.msra.mxu0 0.0
        %1797 = vmatpush.msra.mxu0 0.0
        %1798 = vmatpush.msra.mxu0 0.0
        %1799 = vmatpush.msra.mxu0 0.0
        %1800 = vmatpush.msra.mxu0 0.0
        %1801 = vmatpush.msra.mxu0 0.0
        %1802 = vmatpush.msra.mxu0 0.0
        %1803 = vmatpush.msra.mxu0 %v1086
        %1804 = vmatpush.msra.mxu0 %v1085
        %1805 = vmatpush.msra.mxu0 %v1084
        %1806 = vmatpush.msra.mxu0 %v1083
        %1807 = vmatmul.f32.gmra.mxu0 %v1615
        %v1808 = vpop.f32.mrf.mxu0
        %v1809 = vadd.f32 %v1090, %v1808
        %1810 = vdwg.mxu0
        %v1812 = vsel %vm946, %v1769, 0
        %v1815 = vsel %vm946, %v1789, 0
        %1817 = vmatpush.xpose.msra.mxu0 0.0
        %1818 = vmatpush.xpose.msra.mxu0 0.0
        %1819 = vmatpush.xpose.msra.mxu0 0.0
        %1820 = vmatpush.xpose.msra.mxu0 0.0
        %1821 = vmatpush.xpose.msra.mxu0 0.0
        %1822 = vmatpush.xpose.msra.mxu0 0.0
        %1823 = vmatpush.xpose.msra.mxu0 0.0
        %1824 = vmatpush.xpose.msra.mxu0 0.0
        %1825 = vmatpush.xpose.msra.mxu0 0.0
        %1826 = vmatpush.xpose.msra.mxu0 0.0
        %1827 = vmatpush.xpose.msra.mxu0 0.0
        %1828 = vmatpush.xpose.msra.mxu0 0.0
        %1829 = vmatpush.xpose.msra.mxu0 0.0
        %1830 = vmatpush.xpose.msra.mxu0 0.0
        %1831 = vmatpush.xpose.msra.mxu0 0.0
        %1832 = vmatpush.xpose.msra.mxu0 %v1815
        %1833 = vmatmul.f32.gmra.mxu0 %v1812
        %v1834 = vpop.f32.mrf.mxu0
        %v1835 = vadd.f32 0.0, %v1834
        %1836 = vdwg.mxu0
        %v1837 = vsel %vm946, %v1835, -inf
        %1838 = vmax.xlane.f32.xlu0 %v1837
        %v1839 = vpop.xlane.xlu0 %1838
        %v1840 = vsub.f32 %v1835, %v1839
        %v1841 = vmul.f32 %v1840, 1.442695
        %v1842 = vpow.pop %v1841
        %v1843 = vsel %vm946, %v1842, 0.0
        %1844 = vadd.xlane.f32.xlu0 %v1843
        %v1845 = vpop.xlane.xlu0 %1844
        %v1846 = vrcp.pop %v1845
        %v1847 = vmul.f32 %v1845, %v1846
        %v1848 = vsub.f32 1.0, %v1847
        %v1849 = vmul.f32 %v1846, %v1848
        %v1850 = vadd.f32 %v1846, %v1849
        %vm1851 = vweird.f32 %v1845
        %vm1852 = vweird.f32 %v1846
        %vm1853 = vmor %vm1851, %vm1852
        %v1854 = vsel %vm1853, %v1846, %v1850
        %v1855 = vand.u32 2147483647, %v1845
        %vm1856 = vcmp.eq.f32.partialorder %v1855, 8.507059e+37
        %v1857 = vand.u32 %v1845, 2147483648
        %v1858 = vor.u32 1.1754944e-38, %v1857
        %v1859 = vsel %vm1856, %v1858, %v1854
        %v1860 = vmul.f32 %v1859, 0.17677669
        %v1861 = vmul.f32 %v1842, %v1860
        %v1863 = vsel %vm946, %v1861, 0
        %1865 = vmatpush.msra.mxu0 0.0
        %1866 = vmatpush.msra.mxu0 0.0
        %1867 = vmatpush.msra.mxu0 0.0
        %1868 = vmatpush.msra.mxu0 0.0
        %1869 = vmatpush.msra.mxu0 0.0
        %1870 = vmatpush.msra.mxu0 0.0
        %1871 = vmatpush.msra.mxu0 0.0
        %1872 = vmatpush.msra.mxu0 0.0
        %1873 = vmatpush.msra.mxu0 0.0
        %1874 = vmatpush.msra.mxu0 0.0
        %1875 = vmatpush.msra.mxu0 0.0
        %1876 = vmatpush.msra.mxu0 0.0
        %1877 = vmatpush.msra.mxu0 0.0
        %1878 = vmatpush.msra.mxu0 0.0
        %1879 = vmatpush.msra.mxu0 0.0
        %1880 = vmatpush.msra.mxu0 %v1809
        %1881 = vmatmul.f32.gmra.mxu0 %v1863
        %v1882 = vpop.f32.mrf.mxu0
        %v1883 = vadd.f32 0.0, %v1882
        %1884 = vdwg.mxu0
        %v1886 = vsel %vm946, %v1883, 0
        %1888 = vmatpush.msra.mxu0 0.0
        %1889 = vmatpush.msra.mxu0 0.0
        %1890 = vmatpush.msra.mxu0 0.0
        %1891 = vmatpush.msra.mxu0 0.0
        %1892 = vmatpush.msra.mxu0 0.0
        %1893 = vmatpush.msra.mxu0 0.0
        %1894 = vmatpush.msra.mxu0 0.0
        %1895 = vmatpush.msra.mxu0 0.0
        %1896 = vmatpush.msra.mxu0 0.0
        %1897 = vmatpush.msra.mxu0 0.0
        %1898 = vmatpush.msra.mxu0 0.0
        %1899 = vmatpush.msra.mxu0 0.0
        %1900 = vmatpush.msra.mxu0 0.0
        %1901 = vmatpush.msra.mxu0 0.0
        %1902 = vmatpush.msra.mxu0 0.0
        %1903 = vmatpush.msra.mxu0 %v1187
        %1904 = vmatmul.f32.gmra.mxu0 %v1886
        %v1905 = vpop.f32.mrf.mxu0
        %v1906 = vadd.f32 0.0, %v1905
        %1907 = vdwg.mxu0
        %v1909 = vsel %vm946, %v1749, 0
        %1911 = vmatpush.msra.mxu0 0.0
        %1912 = vmatpush.msra.mxu0 0.0
        %1913 = vmatpush.msra.mxu0 0.0
        %1914 = vmatpush.msra.mxu0 0.0
        %1915 = vmatpush.msra.mxu0 0.0
        %1916 = vmatpush.msra.mxu0 0.0
        %1917 = vmatpush.msra.mxu0 0.0
        %1918 = vmatpush.msra.mxu0 0.0
        %1919 = vmatpush.msra.mxu0 0.0
        %1920 = vmatpush.msra.mxu0 0.0
        %1921 = vmatpush.msra.mxu0 0.0
        %1922 = vmatpush.msra.mxu0 0.0
        %1923 = vmatpush.msra.mxu0 0.0
        %1924 = vmatpush.msra.mxu0 0.0
        %1925 = vmatpush.msra.mxu0 0.0
        %1926 = vmatpush.msra.mxu0 %v1021
        %1927 = vmatmul.f32.gmra.mxu0 %v1909
        %v1928 = vpop.f32.mrf.mxu0
        %v1929 = vadd.f32 %v1906, %v1928
        %1930 = vdwg.mxu0
        %1931 = vmatpush.msra.mxu0 0.0
        %1932 = vmatpush.msra.mxu0 0.0
        %1933 = vmatpush.msra.mxu0 0.0
        %1934 = vmatpush.msra.mxu0 0.0
        %1935 = vmatpush.msra.mxu0 0.0
        %1936 = vmatpush.msra.mxu0 0.0
        %1937 = vmatpush.msra.mxu0 0.0
        %1938 = vmatpush.msra.mxu0 0.0
        %1939 = vmatpush.msra.mxu0 0.0
        %1940 = vmatpush.msra.mxu0 0.0
        %1941 = vmatpush.msra.mxu0 0.0
        %1942 = vmatpush.msra.mxu0 0.0
        %1943 = vmatpush.msra.mxu0 %v1238
        %1944 = vmatpush.msra.mxu0 %v1237
        %1945 = vmatpush.msra.mxu0 %v1236
        %1946 = vmatpush.msra.mxu0 %v1235
        %1947 = vmatmul.f32.gmra.mxu0 %v1615
        %v1948 = vpop.f32.mrf.mxu0
        %v1949 = vadd.f32 %v1242, %v1948
        %1950 = vdwg.mxu0
        %1951 = vmatpush.msra.mxu0 0.0
        %1952 = vmatpush.msra.mxu0 0.0
        %1953 = vmatpush.msra.mxu0 0.0
        %1954 = vmatpush.msra.mxu0 0.0
        %1955 = vmatpush.msra.mxu0 0.0
        %1956 = vmatpush.msra.mxu0 0.0
        %1957 = vmatpush.msra.mxu0 0.0
        %1958 = vmatpush.msra.mxu0 0.0
        %1959 = vmatpush.msra.mxu0 0.0
        %1960 = vmatpush.msra.mxu0 0.0
        %1961 = vmatpush.msra.mxu0 0.0
        %1962 = vmatpush.msra.mxu0 0.0
        %1963 = vmatpush.msra.mxu0 %v1268
        %1964 = vmatpush.msra.mxu0 %v1267
        %1965 = vmatpush.msra.mxu0 %v1266
        %1966 = vmatpush.msra.mxu0 %v1265
        %1967 = vmatmul.f32.gmra.mxu0 %v1615
        %v1968 = vpop.f32.mrf.mxu0
        %v1969 = vadd.f32 %v1272, %v1968
        %1970 = vdwg.mxu0
        %1971 = vmatpush.msra.mxu0 0.0
        %1972 = vmatpush.msra.mxu0 0.0
        %1973 = vmatpush.msra.mxu0 0.0
        %1974 = vmatpush.msra.mxu0 0.0
        %1975 = vmatpush.msra.mxu0 0.0
        %1976 = vmatpush.msra.mxu0 0.0
        %1977 = vmatpush.msra.mxu0 0.0
        %1978 = vmatpush.msra.mxu0 0.0
        %1979 = vmatpush.msra.mxu0 0.0
        %1980 = vmatpush.msra.mxu0 0.0
        %1981 = vmatpush.msra.mxu0 0.0
        %1982 = vmatpush.msra.mxu0 0.0
        %1983 = vmatpush.msra.mxu0 %v1298
        %1984 = vmatpush.msra.mxu0 %v1297
        %1985 = vmatpush.msra.mxu0 %v1296
        %1986 = vmatpush.msra.mxu0 %v1295
        %1987 = vmatmul.f32.gmra.mxu0 %v1615
        %v1988 = vpop.f32.mrf.mxu0
        %v1989 = vadd.f32 %v1302, %v1988
        %1990 = vdwg.mxu0
        %v1992 = vsel %vm946, %v1949, 0
        %v1995 = vsel %vm946, %v1969, 0
        %1997 = vmatpush.xpose.msra.mxu0 0.0
        %1998 = vmatpush.xpose.msra.mxu0 0.0
        %1999 = vmatpush.xpose.msra.mxu0 0.0
        %2000 = vmatpush.xpose.msra.mxu0 0.0
        %2001 = vmatpush.xpose.msra.mxu0 0.0
        %2002 = vmatpush.xpose.msra.mxu0 0.0
        %2003 = vmatpush.xpose.msra.mxu0 0.0
        %2004 = vmatpush.xpose.msra.mxu0 0.0
        %2005 = vmatpush.xpose.msra.mxu0 0.0
        %2006 = vmatpush.xpose.msra.mxu0 0.0
        %2007 = vmatpush.xpose.msra.mxu0 0.0
        %2008 = vmatpush.xpose.msra.mxu0 0.0
        %2009 = vmatpush.xpose.msra.mxu0 0.0
        %2010 = vmatpush.xpose.msra.mxu0 0.0
        %2011 = vmatpush.xpose.msra.mxu0 0.0
        %2012 = vmatpush.xpose.msra.mxu0 %v1995
        %2013 = vmatmul.f32.gmra.mxu0 %v1992
        %v2014 = vpop.f32.mrf.mxu0
        %v2015 = vadd.f32 0.0, %v2014
        %2016 = vdwg.mxu0
        %v2017 = vsel %vm946, %v2015, -inf
        %2018 = vmax.xlane.f32.xlu0 %v2017
        %v2019 = vpop.xlane.xlu0 %2018
        %v2020 = vsub.f32 %v2015, %v2019
        %v2021 = vmul.f32 %v2020, 1.442695
        %v2022 = vpow.pop %v2021
        %v2023 = vsel %vm946, %v2022, 0.0
        %2024 = vadd.xlane.f32.xlu0 %v2023
        %v2025 = vpop.xlane.xlu0 %2024
        %v2026 = vrcp.pop %v2025
        %v2027 = vmul.f32 %v2025, %v2026
        %v2028 = vsub.f32 1.0, %v2027
        %v2029 = vmul.f32 %v2026, %v2028
        %v2030 = vadd.f32 %v2026, %v2029
        %vm2031 = vweird.f32 %v2025
        %vm2032 = vweird.f32 %v2026
        %vm2033 = vmor %vm2031, %vm2032
        %v2034 = vsel %vm2033, %v2026, %v2030
        %v2035 = vand.u32 2147483647, %v2025
        %vm2036 = vcmp.eq.f32.partialorder %v2035, 8.507059e+37
        %v2037 = vand.u32 %v2025, 2147483648
        %v2038 = vor.u32 1.1754944e-38, %v2037
        %v2039 = vsel %vm2036, %v2038, %v2034
        %v2040 = vmul.f32 %v2039, 0.17677669
        %v2041 = vmul.f32 %v2022, %v2040
        %v2043 = vsel %vm946, %v2041, 0
        %2045 = vmatpush.msra.mxu0 0.0
        %2046 = vmatpush.msra.mxu0 0.0
        %2047 = vmatpush.msra.mxu0 0.0
        %2048 = vmatpush.msra.mxu0 0.0
        %2049 = vmatpush.msra.mxu0 0.0
        %2050 = vmatpush.msra.mxu0 0.0
        %2051 = vmatpush.msra.mxu0 0.0
        %2052 = vmatpush.msra.mxu0 0.0
        %2053 = vmatpush.msra.mxu0 0.0
        %2054 = vmatpush.msra.mxu0 0.0
        %2055 = vmatpush.msra.mxu0 0.0
        %2056 = vmatpush.msra.mxu0 0.0
        %2057 = vmatpush.msra.mxu0 0.0
        %2058 = vmatpush.msra.mxu0 0.0
        %2059 = vmatpush.msra.mxu0 0.0
        %2060 = vmatpush.msra.mxu0 %v1989
        %2061 = vmatmul.f32.gmra.mxu0 %v2043
        %v2062 = vpop.f32.mrf.mxu0
        %v2063 = vadd.f32 0.0, %v2062
        %2064 = vdwg.mxu0
        %v2066 = vsel %vm946, %v2063, 0
        %2068 = vmatpush.msra.mxu0 0.0
        %2069 = vmatpush.msra.mxu0 0.0
        %2070 = vmatpush.msra.mxu0 0.0
        %2071 = vmatpush.msra.mxu0 0.0
        %2072 = vmatpush.msra.mxu0 0.0
        %2073 = vmatpush.msra.mxu0 0.0
        %2074 = vmatpush.msra.mxu0 0.0
        %2075 = vmatpush.msra.mxu0 0.0
        %2076 = vmatpush.msra.mxu0 0.0
        %2077 = vmatpush.msra.mxu0 0.0
        %2078 = vmatpush.msra.mxu0 0.0
        %2079 = vmatpush.msra.mxu0 0.0
        %2080 = vmatpush.msra.mxu0 0.0
        %2081 = vmatpush.msra.mxu0 0.0
        %2082 = vmatpush.msra.mxu0 0.0
        %2083 = vmatpush.msra.mxu0 %v1399
        %2084 = vmatmul.f32.gmra.mxu0 %v2066
        %v2085 = vpop.f32.mrf.mxu0
        %v2086 = vadd.f32 0.0, %v2085
        %2087 = vdwg.mxu0
        %v2088 = vadd.f32 %v1929, %v2086
        %2089 = vmatpush.msra.mxu0 0.0
        %2090 = vmatpush.msra.mxu0 0.0
        %2091 = vmatpush.msra.mxu0 0.0
        %2092 = vmatpush.msra.mxu0 0.0
        %2093 = vmatpush.msra.mxu0 0.0
        %2094 = vmatpush.msra.mxu0 0.0
        %2095 = vmatpush.msra.mxu0 0.0
        %2096 = vmatpush.msra.mxu0 0.0
        %2097 = vmatpush.msra.mxu0 0.0
        %2098 = vmatpush.msra.mxu0 0.0
        %2099 = vmatpush.msra.mxu0 0.0
        %2100 = vmatpush.msra.mxu0 0.0
        %2101 = vmatpush.msra.mxu0 %v1428
        %2102 = vmatpush.msra.mxu0 %v1427
        %2103 = vmatpush.msra.mxu0 %v1426
        %2104 = vmatpush.msra.mxu0 %v1425
        %2105 = vmatmul.f32.gmra.mxu0 %v1615
        %v2106 = vpop.f32.mrf.mxu0
        %v2107 = vadd.f32 %v1432, %v2106
        %2108 = vdwg.mxu0
        %2109 = vmatpush.msra.mxu0 0.0
        %2110 = vmatpush.msra.mxu0 0.0
        %2111 = vmatpush.msra.mxu0 0.0
        %2112 = vmatpush.msra.mxu0 0.0
        %2113 = vmatpush.msra.mxu0 0.0
        %2114 = vmatpush.msra.mxu0 0.0
        %2115 = vmatpush.msra.mxu0 0.0
        %2116 = vmatpush.msra.mxu0 0.0
        %2117 = vmatpush.msra.mxu0 0.0
        %2118 = vmatpush.msra.mxu0 0.0
        %2119 = vmatpush.msra.mxu0 0.0
        %2120 = vmatpush.msra.mxu0 0.0
        %2121 = vmatpush.msra.mxu0 %v1458
        %2122 = vmatpush.msra.mxu0 %v1457
        %2123 = vmatpush.msra.mxu0 %v1456
        %2124 = vmatpush.msra.mxu0 %v1455
        %2125 = vmatmul.f32.gmra.mxu0 %v1615
        %v2126 = vpop.f32.mrf.mxu0
        %v2127 = vadd.f32 %v1462, %v2126
        %2128 = vdwg.mxu0
        %2129 = vmatpush.msra.mxu0 0.0
        %2130 = vmatpush.msra.mxu0 0.0
        %2131 = vmatpush.msra.mxu0 0.0
        %2132 = vmatpush.msra.mxu0 0.0
        %2133 = vmatpush.msra.mxu0 0.0
        %2134 = vmatpush.msra.mxu0 0.0
        %2135 = vmatpush.msra.mxu0 0.0
        %2136 = vmatpush.msra.mxu0 0.0
        %2137 = vmatpush.msra.mxu0 0.0
        %2138 = vmatpush.msra.mxu0 0.0
        %2139 = vmatpush.msra.mxu0 0.0
        %2140 = vmatpush.msra.mxu0 0.0
        %2141 = vmatpush.msra.mxu0 %v1488
        %2142 = vmatpush.msra.mxu0 %v1487
        %2143 = vmatpush.msra.mxu0 %v1486
        %2144 = vmatpush.msra.mxu0 %v1485
        %2145 = vmatmul.f32.gmra.mxu0 %v1615
        %v2146 = vpop.f32.mrf.mxu0
        %v2147 = vadd.f32 %v1492, %v2146
        %2148 = vdwg.mxu0
        %v2150 = vsel %vm946, %v2107, 0
        %v2153 = vsel %vm946, %v2127, 0
        %2155 = vmatpush.xpose.msra.mxu0 0.0
        %2156 = vmatpush.xpose.msra.mxu0 0.0
        %2157 = vmatpush.xpose.msra.mxu0 0.0
        %2158 = vmatpush.xpose.msra.mxu0 0.0
        %2159 = vmatpush.xpose.msra.mxu0 0.0
        %2160 = vmatpush.xpose.msra.mxu0 0.0
        %2161 = vmatpush.xpose.msra.mxu0 0.0
        %2162 = vmatpush.xpose.msra.mxu0 0.0
        %2163 = vmatpush.xpose.msra.mxu0 0.0
        %2164 = vmatpush.xpose.msra.mxu0 0.0
        %2165 = vmatpush.xpose.msra.mxu0 0.0
        %2166 = vmatpush.xpose.msra.mxu0 0.0
        %2167 = vmatpush.xpose.msra.mxu0 0.0
        %2168 = vmatpush.xpose.msra.mxu0 0.0
        %2169 = vmatpush.xpose.msra.mxu0 0.0
        %2170 = vmatpush.xpose.msra.mxu0 %v2153
        %2171 = vmatmul.f32.gmra.mxu0 %v2150
        %v2172 = vpop.f32.mrf.mxu0
        %v2173 = vadd.f32 0.0, %v2172
        %2174 = vdwg.mxu0
        %v2175 = vsel %vm946, %v2173, -inf
        %2176 = vmax.xlane.f32.xlu0 %v2175
        %v2177 = vpop.xlane.xlu0 %2176
        %v2178 = vsub.f32 %v2173, %v2177
        %v2179 = vmul.f32 %v2178, 1.442695
        %v2180 = vpow.pop %v2179
        %v2181 = vsel %vm946, %v2180, 0.0
        %2182 = vadd.xlane.f32.xlu0 %v2181
        %v2183 = vpop.xlane.xlu0 %2182
        %v2184 = vrcp.pop %v2183
        %v2185 = vmul.f32 %v2183, %v2184
        %v2186 = vsub.f32 1.0, %v2185
        %v2187 = vmul.f32 %v2184, %v2186
        %v2188 = vadd.f32 %v2184, %v2187
        %vm2189 = vweird.f32 %v2183
        %vm2190 = vweird.f32 %v2184
        %vm2191 = vmor %vm2189, %vm2190
        %v2192 = vsel %vm2191, %v2184, %v2188
        %v2193 = vand.u32 2147483647, %v2183
        %vm2194 = vcmp.eq.f32.partialorder %v2193, 8.507059e+37
        %v2195 = vand.u32 %v2183, 2147483648
        %v2196 = vor.u32 1.1754944e-38, %v2195
        %v2197 = vsel %vm2194, %v2196, %v2192
        %v2198 = vmul.f32 %v2197, 0.17677669
        %v2199 = vmul.f32 %v2180, %v2198
        %v2201 = vsel %vm946, %v2199, 0
        %2203 = vmatpush.msra.mxu0 0.0
        %2204 = vmatpush.msra.mxu0 0.0
        %2205 = vmatpush.msra.mxu0 0.0
        %2206 = vmatpush.msra.mxu0 0.0
        %2207 = vmatpush.msra.mxu0 0.0
        %2208 = vmatpush.msra.mxu0 0.0
        %2209 = vmatpush.msra.mxu0 0.0
        %2210 = vmatpush.msra.mxu0 0.0
        %2211 = vmatpush.msra.mxu0 0.0
        %2212 = vmatpush.msra.mxu0 0.0
        %2213 = vmatpush.msra.mxu0 0.0
        %2214 = vmatpush.msra.mxu0 0.0
        %2215 = vmatpush.msra.mxu0 0.0
        %2216 = vmatpush.msra.mxu0 0.0
        %2217 = vmatpush.msra.mxu0 0.0
        %2218 = vmatpush.msra.mxu0 %v2147
        %2219 = vmatmul.f32.gmra.mxu0 %v2201
        %v2220 = vpop.f32.mrf.mxu0
        %v2221 = vadd.f32 0.0, %v2220
        %2222 = vdwg.mxu0
        %v2224 = vsel %vm946, %v2221, 0
        %2226 = vmatpush.msra.mxu0 0.0
        %2227 = vmatpush.msra.mxu0 0.0
        %2228 = vmatpush.msra.mxu0 0.0
        %2229 = vmatpush.msra.mxu0 0.0
        %2230 = vmatpush.msra.mxu0 0.0
        %2231 = vmatpush.msra.mxu0 0.0
        %2232 = vmatpush.msra.mxu0 0.0
        %2233 = vmatpush.msra.mxu0 0.0
        %2234 = vmatpush.msra.mxu0 0.0
        %2235 = vmatpush.msra.mxu0 0.0
        %2236 = vmatpush.msra.mxu0 0.0
        %2237 = vmatpush.msra.mxu0 0.0
        %2238 = vmatpush.msra.mxu0 0.0
        %2239 = vmatpush.msra.mxu0 0.0
        %2240 = vmatpush.msra.mxu0 0.0
        %2241 = vmatpush.msra.mxu0 %v1589
        %2242 = vmatmul.f32.gmra.mxu0 %v2224
        %v2243 = vpop.f32.mrf.mxu0
        %v2244 = vadd.f32 0.0, %v2243
        %2245 = vdwg.mxu0
        %v2246 = vadd.f32 %v2088, %v2244
        %v2247 = vld [vmem:[%s761] sm:$0x1]
        %v2249 = vperm.slane %v2247, 0
        %v2251 = vadd.f32 %v1613, %v2249
        %v2252 = vadd.f32 %v2246, %v2249
        %v2253 = vadd.f32 %v2251, %v793
        %v2254 = vadd.f32 %v2252, %v794
        %v2255 = vld [vmem:[%s764] sm:$0x1]
        %v2256 = vld [vmem:[%s767] sm:$0x1]
        %v2257 = vsel %vm797, %v2253, 0.0
        %2258 = vadd.xlane.f32.xlu0 %v2257
        %v2259 = vpop.xlane.xlu0 %2258
        %v2260 = vsel %vm797, %v2254, 0.0
        %2261 = vadd.xlane.f32.xlu0 %v2260
        %v2262 = vpop.xlane.xlu0 %2261
        %v2263 = vmul.f32 %v2259, %v810
        %v2264 = vmul.f32 %v2262, %v810
        %v2265 = vsub.f32 %v2253, %v2263
        %v2266 = vsub.f32 %v2254, %v2264
        %v2267 = vmul.f32 %v2265, %v2265
        %v2268 = vmul.f32 %v2266, %v2266
        %v2269 = vsel %vm797, %v2267, 0.0
        %2270 = vadd.xlane.f32.xlu0 %v2269
        %v2271 = vpop.xlane.xlu0 %2270
        %v2272 = vsel %vm797, %v2268, 0.0
        %2273 = vadd.xlane.f32.xlu0 %v2272
        %v2274 = vpop.xlane.xlu0 %2273
        %v2275 = vmul.f32 %v2271, %v810
        %v2276 = vmul.f32 %v2274, %v810
        %v2277 = vadd.f32 %v2275, 1e-05
        %v2278 = vadd.f32 %v2276, 1e-05
        %v2279 = vrsqrt.pop %v2277
        %v2280 = vmul.f32 %v2279, %v2277
        %v2281 = vmul.f32 %v2280, %v2279
        %v2282 = vmul.f32 0.5, %v2281
        %v2283 = vsub.f32 1.5, %v2282
        %v2284 = vmul.f32 %v2279, %v2283
        %vm2285 = vweird.f32 %v2277
        %vm2286 = vweird.f32 %v2279
        %vm2287 = vmor %vm2285, %vm2286
        %v2288 = vsel %vm2287, %v2279, %v2284
        %v2289 = vrsqrt.pop %v2278
        %v2290 = vmul.f32 %v2289, %v2278
        %v2291 = vmul.f32 %v2290, %v2289
        %v2292 = vmul.f32 0.5, %v2291
        %v2293 = vsub.f32 1.5, %v2292
        %v2294 = vmul.f32 %v2289, %v2293
        %vm2295 = vweird.f32 %v2278
        %vm2296 = vweird.f32 %v2289
        %vm2297 = vmor %vm2295, %vm2296
        %v2298 = vsel %vm2297, %v2289, %v2294
        %v2299 = vmul.f32 %v2265, %v2288
        %v2300 = vmul.f32 %v2266, %v2298
        %v2302 = vperm.slane %v2255, 0
        %v2304 = vmul.f32 %v2299, %v2302
        %v2305 = vmul.f32 %v2300, %v2302
        %v2307 = vperm.slane %v2256, 0
        %v2309 = vadd.f32 %v2304, %v2307
        %v2310 = vadd.f32 %v2305, %v2307
        %v2311 = vld [vmem:[%s772] sm:$0xff]
        %v2312 = vld [vmem:[%s772 + $0x8] sm:$0xff]
        %v2313 = vld [vmem:[%s772 + $0x10] sm:$0xff]
        %v2314 = vld [vmem:[%s772 + $0x18] sm:$0xff]
        %v2315 = vld [vmem:[%s775] sm:$0x1]
        %v2317 = vperm.slane %v2315, 0
        %v2320 = vsel %vm797, %v2309, 0
        %v2323 = vsel %vm797, %v2310, 0
        %2325 = vmatpush.msra.mxu0 0.0
        %2326 = vmatpush.msra.mxu0 0.0
        %2327 = vmatpush.msra.mxu0 0.0
        %2328 = vmatpush.msra.mxu0 0.0
        %2329 = vmatpush.msra.mxu0 0.0
        %2330 = vmatpush.msra.mxu0 0.0
        %2331 = vmatpush.msra.mxu0 0.0
        %2332 = vmatpush.msra.mxu0 0.0
        %2333 = vmatpush.msra.mxu0 0.0
        %2334 = vmatpush.msra.mxu0 0.0
        %2335 = vmatpush.msra.mxu0 0.0
        %2336 = vmatpush.msra.mxu0 0.0
        %2337 = vmatpush.msra.mxu0 %v2314
        %2338 = vmatpush.msra.mxu0 %v2313
        %2339 = vmatpush.msra.mxu0 %v2312
        %2340 = vmatpush.msra.mxu0 %v2311
        %2341 = vmatmul.f32.gmra.mxu0 %v2320
        %v2342 = vpop.f32.mrf.mxu0
        %v2343 = vadd.f32 %v2317, %v2342
        %2344 = vmatmul.f32.gmra.mxu0 %v2323
        %v2345 = vpop.f32.mrf.mxu0
        %v2346 = vadd.f32 %v2317, %v2345
        %2347 = vdwg.mxu0
        %v2348 = vmul.f32 %v2343, 0.5
        %v2349 = vmul.f32 %v2346, 0.5
        %v2350 = vmul.f32 %v2343, 0.70710677
        %v2351 = vmul.f32 %v2346, 0.70710677
        %v2352 = vmul.f32 %v2350, %v2350
        %v2353 = vmin.f32 16.0, %v2352
        %v2354 = vmul.f32 %v2353, 2.1237322e-06
        %v2355 = vadd.f32 %v2354, 0.00028619796
        %v2356 = vmul.f32 %v2353, %v2355
        %v2357 = vadd.f32 %v2356, 0.0036580483
        %v2358 = vmul.f32 %v2353, %v2357
        %v2359 = vadd.f32 %v2358, 0.05243302
        %v2360 = vmul.f32 %v2353, %v2359
        %v2361 = vadd.f32 %v2360, 0.18741608
        %v2362 = vmul.f32 %v2353, %v2361
        %v2363 = vadd.f32 %v2362, 1.1283791
        %v2364 = vmul.f32 %v2350, %v2363
        %v2365 = vmul.f32 %v2353, 3.8918573e-05
        %v2366 = vadd.f32 %v2365, 0.001143296
        %v2367 = vmul.f32 %v2353, %v2366
        %v2368 = vadd.f32 %v2367, 0.014752088
        %v2369 = vmul.f32 %v2353, %v2368
        %v2370 = vadd.f32 %v2369, 0.112945676
        %v2371 = vmul.f32 %v2353, %v2370
        %v2372 = vadd.f32 %v2371, 0.4994258
        %v2373 = vmul.f32 %v2353, %v2372
        %v2374 = vadd.f32 %v2373, 1.0
        %v2375 = vrcp.pop %v2374
        %v2376 = vmul.f32 %v2374, %v2375
        %v2377 = vsub.f32 1.0, %v2376
        %v2378 = vmul.f32 %v2375, %v2377
        %v2379 = vadd.f32 %v2375, %v2378
        %vm2380 = vweird.f32 %v2374
        %vm2381 = vweird.f32 %v2375
        %vm2382 = vmor %vm2380, %vm2381
        %v2383 = vsel %vm2382, %v2375, %v2379
        %v2384 = vand.u32 2147483647, %v2374
        %vm2385 = vcmp.eq.f32.partialorder %v2384, 8.507059e+37
        %v2386 = vand.u32 %v2374, 2147483648
        %v2387 = vor.u32 1.1754944e-38, %v2386
        %v2388 = vsel %vm2385, %v2387, %v2383
        %v2389 = vmul.f32 %v2364, %v2388
        %v2390 = vmin.f32 %v2389, 1.0
        %v2391 = vmax.f32 %v2390, -1.0
        %v2392 = vmul.f32 %v2351, %v2351
        %v2393 = vmin.f32 16.0, %v2392
        %v2394 = vmul.f32 %v2393, 2.1237322e-06
        %v2395 = vadd.f32 %v2394, 0.00028619796
        %v2396 = vmul.f32 %v2393, %v2395
        %v2397 = vadd.f32 %v2396, 0.0036580483
        %v2398 = vmul.f32 %v2393, %v2397
        %v2399 = vadd.f32 %v2398, 0.05243302
        %v2400 = vmul.f32 %v2393, %v2399
        %v2401 = vadd.f32 %v2400, 0.18741608
        %v2402 = vmul.f32 %v2393, %v2401
        %v2403 = vadd.f32 %v2402, 1.1283791
        %v2404 = vmul.f32 %v2351, %v2403
        %v2405 = vmul.f32 %v2393, 3.8918573e-05
        %v2406 = vadd.f32 %v2405, 0.001143296
        %v2407 = vmul.f32 %v2393, %v2406
        %v2408 = vadd.f32 %v2407, 0.014752088
        %v2409 = vmul.f32 %v2393, %v2408
        %v2410 = vadd.f32 %v2409, 0.112945676
        %v2411 = vmul.f32 %v2393, %v2410
        %v2412 = vadd.f32 %v2411, 0.4994258
        %v2413 = vmul.f32 %v2393, %v2412
        %v2414 = vadd.f32 %v2413, 1.0
        %v2415 = vrcp.pop %v2414
        %v2416 = vmul.f32 %v2414, %v2415
        %v2417 = vsub.f32 1.0, %v2416
        %v2418 = vmul.f32 %v2415, %v2417
        %v2419 = vadd.f32 %v2415, %v2418
        %vm2420 = vweird.f32 %v2414
        %vm2421 = vweird.f32 %v2415
        %vm2422 = vmor %vm2420, %vm2421
        %v2423 = vsel %vm2422, %v2415, %v2419
        %v2424 = vand.u32 2147483647, %v2414
        %vm2425 = vcmp.eq.f32.partialorder %v2424, 8.507059e+37
        %v2426 = vand.u32 %v2414, 2147483648
        %v2427 = vor.u32 1.1754944e-38, %v2426
        %v2428 = vsel %vm2425, %v2427, %v2423
        %v2429 = vmul.f32 %v2404, %v2428
        %v2430 = vmin.f32 %v2429, 1.0
        %v2431 = vmax.f32 %v2430, -1.0
        %v2432 = vadd.f32 %v2391, 1.0
        %v2433 = vadd.f32 %v2431, 1.0
        %v2434 = vmul.f32 %v2348, %v2432
        %v2435 = vmul.f32 %v2349, %v2433
        %v2436 = vld [vmem:[%s780] sm:$0xff]
        %v2437 = vld [vmem:[%s780 + $0x8] sm:$0xff]
        %v2438 = vld [vmem:[%s780 + $0x10] sm:$0xff]
        %v2439 = vld [vmem:[%s780 + $0x18] sm:$0xff]
        %v2440 = vld [vmem:[%s780 + $0x20] sm:$0xff]
        %v2441 = vld [vmem:[%s780 + $0x28] sm:$0xff]
        %v2442 = vld [vmem:[%s780 + $0x30] sm:$0xff]
        %v2443 = vld [vmem:[%s780 + $0x38] sm:$0xff]
        %v2444 = vld [vmem:[%s780 + $0x40] sm:$0xff]
        %v2445 = vld [vmem:[%s780 + $0x48] sm:$0xff]
        %v2446 = vld [vmem:[%s780 + $0x50] sm:$0xff]
        %v2447 = vld [vmem:[%s780 + $0x58] sm:$0xff]
        %v2448 = vld [vmem:[%s780 + $0x60] sm:$0xff]
        %v2449 = vld [vmem:[%s780 + $0x68] sm:$0xff]
        %v2450 = vld [vmem:[%s780 + $0x70] sm:$0xff]
        %v2451 = vld [vmem:[%s780 + $0x78] sm:$0xff]
        %v2452 = vld [vmem:[%s783] sm:$0x1]
        %v2454 = vperm.slane %v2452, 0
        %2456 = vmatpush.msra.mxu0 %v2451
        %2457 = vmatpush.msra.mxu0 %v2450
        %2458 = vmatpush.msra.mxu0 %v2449
        %2459 = vmatpush.msra.mxu0 %v2448
        %2460 = vmatpush.msra.mxu0 %v2447
        %2461 = vmatpush.msra.mxu0 %v2446
        %2462 = vmatpush.msra.mxu0 %v2445
        %2463 = vmatpush.msra.mxu0 %v2444
        %2464 = vmatpush.msra.mxu0 %v2443
        %2465 = vmatpush.msra.mxu0 %v2442
        %2466 = vmatpush.msra.mxu0 %v2441
        %2467 = vmatpush.msra.mxu0 %v2440
        %2468 = vmatpush.msra.mxu0 %v2439
        %2469 = vmatpush.msra.mxu0 %v2438
        %2470 = vmatpush.msra.mxu0 %v2437
        %2471 = vmatpush.msra.mxu0 %v2436
        %2472 = vmatmul.f32.gmra.mxu0 %v2434
        %v2473 = vpop.f32.mrf.mxu0
        %v2474 = vadd.f32 %v2454, %v2473
        %2475 = vmatmul.f32.gmra.mxu0 %v2435
        %v2476 = vpop.f32.mrf.mxu0
        %v2477 = vadd.f32 %v2454, %v2476
        %2478 = vdwg.mxu0
        %v2479 = vadd.f32 %v2474, %v2253
        %v2480 = vadd.f32 %v2477, %v2254
        %2481 = vst.msk [vmem:[#allocation2] sm:$0xff] %vm797, %v2479
        %2482 = vst.msk [vmem:[#allocation2 + $0x8] sm:$0xff] %vm797, %v2480
        // Predicated region
        $region93: #{tpu_custom_call.1} parent=87 // pred_check
          %p2483 = pneg %p479
        $region94: #{tpu_custom_call.1} parent=87 // pred_check_branch
          %2485 = sbr.rel (%p2483) target = $region96
        $region95: #{tpu_custom_call.1} parent=87 // pred_region
          %2487 = vsyncadd [#allocation3], 0
          %s2488 = sshll.u32 [#allocation2], 4
          %s2489 = int_to_ptr.vmem [resolvable:$true] %s2488
          %s2490 = sshll.u32 %s17, 4
          %s2491 = int_to_ptr.hbm [resolvable:$true] %s2490
          %2496 = dma.vmem_to_hbm [thread:$0]  %s2489, 256, %s2491, [#allocation3], 128, 128, 8
        $region96: #{tpu_custom_call.1} parent=87 // pred_fallthru
          _
        // Predicated region
        $region97: #{tpu_custom_call.1} parent=87 // pred_check
          %p2497 = pneg %p479
        $region98: #{tpu_custom_call.1} parent=87 // pred_check_branch
          %2499 = sbr.rel (%p2497) target = $region100
        $region99: #{tpu_custom_call.1} parent=87 // pred_region
          %2501 = dma.done [#allocation3], 256
        $region100: #{tpu_custom_call.1} parent=87 // pred_fallthru
          _
      $region88: #{tpu_custom_call.1} parent=5 // pred_fallthru
        _
      %p2502 = scmp.le.s32.totalorder 2, %s24
      // Predicated region
      $region101: #{tpu_custom_call.1} parent=5 // pred_check
        %p2503 = pneg %p2502
      $region102: #{tpu_custom_call.1} parent=5 // pred_check_branch
        %2505 = sbr.rel (%p2503) target = $region104
      $region103: #{tpu_custom_call.1} parent=5 // pred_region
        %s2506 = ssub.s32 %s24, 2
      $region104: #{tpu_custom_call.1} parent=5 // pred_fallthru
        _
    $region6: #{tpu_custom_call.1} parent=1 // loop_footer
      %s28 = sadd.s32 1, %s24
    $region7: #{tpu_custom_call.1} parent=1 // loop_footer_branch
      %23 = sbr.rel target = $region3
    $region8: #{tpu_custom_call.1} parent=1 // loop_exit
      _
    %2507 = vsyncpa [#allocation3], 1
    %s2508 = scalar_lea.sflag [#allocation3], 1
    %2509 = vsyncpa %s2508, 1

</llo_original>
